<compile_context>
chip_gen: v5e
topology: v5e:2x2
jax: 0.10.0
libtpu: 0.0.40
codegen_flags: <defaults>
</compile_context>

<pallas_src>
import math
from functools import partial

import jax
import jax.numpy as jnp
from jax.experimental import pallas as pl
from jax.experimental.pallas import tpu as pltpu

_HALO = 8  # sublane-aligned halo rows on each side of every batch's sequence


# ------------------------------ fused kernel -------------------------------

def _fused_feature_extractor_kernel(
        x_ref, f0_ref,
        in_w_ref, in_b_ref,
        f0w1_ref, f0b1_ref, f0w2_ref, f0b2_ref,
        dww_ref, dwb_ref, wss_ref, bss_ref,
        w1_ref, b1_ref, w2_ref, b2_ref, ls_ref,
        o_ref,
        x_sc, c_sc,
        *, B, L, C, K, eps):
    layer = pl.program_id(0)
    pad = K // 2
    M = B * L

    # ---- prologue (layer 0 only): zero halo, input 1x1 conv, F0 encoder ----
    @pl.when(layer == 0)
    def _init():
        x_sc[...] = jnp.zeros_like(x_sc)                       # zero halos once
        xin = x_ref[...]                                       # (B, L, Cin) bf16
        xin = xin.reshape(M, xin.shape[-1])                    # fold B into M
        x0 = (jnp.dot(xin, in_w_ref[...],
                      preferred_element_type=jnp.float32) + in_b_ref[...])
        x_sc[:, _HALO:_HALO + L, :] = x0.reshape(B, L, C)
        # F0Encoder: c2(sin(c1(f0)))   (both 1x1 convs)
        f0 = f0_ref[...].reshape(M, 1)                         # (M, 1) f32
        h = jnp.sin(f0 * f0w1_ref[...] + f0b1_ref[...])        # (M, C) f32
        c = (jnp.dot(h.astype(f0w2_ref.dtype), f0w2_ref[...],
                     preferred_element_type=jnp.float32) + f0b2_ref[...])
        c_sc[...] = c.astype(c_sc.dtype)                       # bf16 conditioning

    # ---- AdaptiveConvNeXt1d block for `layer` (x, c resident in VMEM) ----
    x3 = x_sc[:, _HALO:_HALO + L, :]                           # (B, L, C) f32 residual
    dww = dww_ref[...]                                         # (K, C) f32

    # depthwise conv, kernel K, zero padding K//2, groups=C:
    # static shifted-window reads over the zero-halo scratch (no rolls, no masks).
    y3 = x3 * dww[pad:pad + 1, :]                              # centre tap
    for k in range(K):
        if k == pad:
            continue
        win = x_sc[:, _HALO - pad + k: _HALO - pad + k + L, :]
        y3 = y3 + win * dww[k:k + 1, :]
    y = y3.reshape(M, C) + dwb_ref[...]                        # fold B into M
    x2 = x3.reshape(M, C)

    # adaptive channel norm over channels (torch dim=1); torch .std() is unbiased.
    mu = jnp.mean(y, axis=-1, keepdims=True)
    d = y - mu
    var = jnp.sum(d * d, axis=-1, keepdims=True) * (1.0 / (C - 1))
    yn = d / (jnp.sqrt(var) + eps)                             # exact divide

    # fused shift/scale 1x1 convs: one (C, 2C) matmul from the bf16 conditioning.
    ss = (jnp.dot(c_sc[...], wss_ref[...],
                  preferred_element_type=jnp.float32) + bss_ref[...])   # (M, 2C)
    shift = ss[:, :C]
    scale = ss[:, C:]
    y = yn * scale + shift

    # pointwise MLP: 1x1 conv -> GELU (tanh approx, EUP) -> 1x1 conv
    h = (jnp.dot(y.astype(w1_ref.dtype), w1_ref[...],
                 preferred_element_type=jnp.float32) + b1_ref[...])
    h = jax.nn.gelu(h, approximate=True)
    y = (jnp.dot(h.astype(w2_ref.dtype), w2_ref[...],
                 preferred_element_type=jnp.float32) + b2_ref[...])

    # layer scale + residual; keep resident for the next layer step
    xout = y * ls_ref[...] + x2                                # (M, C) f32
    xo3 = xout.reshape(B, L, C)
    x_sc[:, _HALO:_HALO + L, :] = xo3

    # ---- epilogue: write final activations once ----
    @pl.when(layer == pl.num_programs(0) - 1)
    def _finish():
        o_ref[...] = xo3.astype(o_ref.dtype)


def fused_feature_extractor(params, x, f0, eps=1e-6):
    """x: (B, L, Cin) bf16, f0: (B, L, 1) f32 -> (B, L, C) f32."""
    B, L, Cin = x.shape
    NL, C, H = params['w1'].shape
    K = params['dw_w'].shape[1]
    assert L % 8 == 0, "L must be a multiple of 8 (sublane) for the folded-B layout"
    assert K // 2 <= _HALO

    kern = partial(_fused_feature_extractor_kernel, B=B, L=L, C=C, K=K, eps=eps)

    return pl.pallas_call(
        kern,
        out_shape=jax.ShapeDtypeStruct((B, L, C), jnp.float32),
        grid_spec=pltpu.PrefetchScalarGridSpec(
            num_scalar_prefetch=0,
            grid=(NL,),
            in_specs=[
                # activations / conditioning inputs (constant index across layers)
                pl.BlockSpec((B, L, Cin), lambda l: (0, 0, 0)),
                pl.BlockSpec((B, L, 1), lambda l: (0, 0, 0)),
                # input layer + f0 encoder weights (constant index)
                pl.BlockSpec((Cin, C), lambda l: (0, 0)),
                pl.BlockSpec((1, C), lambda l: (0, 0)),
                pl.BlockSpec((1, C), lambda l: (0, 0)),
                pl.BlockSpec((1, C), lambda l: (0, 0)),
                pl.BlockSpec((C, C), lambda l: (0, 0)),
                pl.BlockSpec((1, C), lambda l: (0, 0)),
                # per-layer weights, stacked along leading layer dim, streamed ONCE each
                pl.BlockSpec((None, K, C), lambda l: (l, 0, 0)),
                pl.BlockSpec((None, 1, C), lambda l: (l, 0, 0)),
                pl.BlockSpec((None, C, 2 * C), lambda l: (l, 0, 0)),
                pl.BlockSpec((None, 1, 2 * C), lambda l: (l, 0, 0)),
                pl.BlockSpec((None, C, H), lambda l: (l, 0, 0)),
                pl.BlockSpec((None, 1, H), lambda l: (l, 0, 0)),
                pl.BlockSpec((None, H, C), lambda l: (l, 0, 0)),
                pl.BlockSpec((None, 1, C), lambda l: (l, 0, 0)),
                pl.BlockSpec((None, 1, C), lambda l: (l, 0, 0)),
            ],
            # same output block across the layer axis -> resident, written once at end
            out_specs=pl.BlockSpec((B, L, C), lambda l: (0, 0, 0)),
            scratch_shapes=[
                # activations with an 8-row zero halo per batch element (f32 residual)
                pltpu.VMEM((B, L + 2 * _HALO, C), jnp.float32),
                # f0 conditioning, computed once, consumed only as a bf16 matmul LHS
                pltpu.VMEM((B * L, C), jnp.bfloat16),
            ],
        ),
        compiler_params=pltpu.CompilerParams(
            dimension_semantics=("arbitrary",),
            vmem_limit_bytes=48 * 1024 * 1024,
        ),
    )(x, f0,
      params['in_w'], params['in_b'],
      params['f0_w1'], params['f0_b1'], params['f0_w2'], params['f0_b2'],
      params['dw_w'], params['dw_b'], params['wss'], params['bss'],
      params['w1'], params['b1'], params['w2'], params['b2'], params['ls'])


# --------------------------- model wrapper (glue) ---------------------------

def init_params(key, input_channels, channels, hidden_channels, num_layers, kernel_size):
    keys = iter(jax.random.split(key, 32))
    C, H, K, NL = channels, hidden_channels, kernel_size, num_layers

    def nrm(shape, std, dtype=jnp.float32):
        return (jax.random.normal(next(keys), shape, jnp.float32) * std).astype(dtype)

    # matmul weights stored in bf16 (f32 accumulation in-kernel); biases / elementwise
    # params stay f32.
    params = {
        # input_layer: Conv1d(input_channels, channels, 1); stored (Cin, Cout)
        'in_w': nrm((input_channels, C), 1.0 / math.sqrt(input_channels), jnp.bfloat16),
        'in_b': nrm((1, C), 0.02),
        # F0Encoder.c1: Conv1d(1, channels, 1) with weight ~ N(0, 0.3)
        'f0_w1': nrm((1, C), 0.3),
        'f0_b1': nrm((1, C), 0.02),
        # F0Encoder.c2: Conv1d(channels, channels, 1)
        'f0_w2': nrm((C, C), 1.0 / math.sqrt(C), jnp.bfloat16),
        'f0_b2': nrm((1, C), 0.02),
        # AdaptiveConvNeXt1d stack, stacked along a leading layer dim
        'dw_w': nrm((NL, K, C), 1.0 / math.sqrt(K)),
        'dw_b': nrm((NL, 1, C), 0.02),
        # fused shift|scale 1x1 convs: (C, 2C) per layer (first C cols = shift)
        'wss': nrm((NL, C, 2 * C), 1.0 / math.sqrt(C), jnp.bfloat16),
        'bss': nrm((NL, 1, 2 * C), 0.02),
        'w1': nrm((NL, C, H), 1.0 / math.sqrt(C), jnp.bfloat16),
        'b1': nrm((NL, 1, H), 0.02),
        'w2': nrm((NL, H, C), 1.0 / math.sqrt(H), jnp.bfloat16),
        'b2': nrm((NL, 1, C), 0.02),
        'ls': jnp.full((NL, 1, C), 1.0 / NL, jnp.float32),
    }
    return params


def feature_extractor_forward(params, x_ncl, f0_ncl):
    """FeatureExtractorOnnxWrapper.forward(x, f0): x (B, Cin, L), f0 (B, 1, L) -> (B, C, L)."""
    # TODO(synk): if the surrounding model can keep NLC activations end-to-end, drop
    #             these transposes (each is a full HBM pass in XLA).
    x = jnp.transpose(x_ncl, (0, 2, 1)).astype(jnp.bfloat16)   # NCL -> NLC, bf16 DMA
    f0 = jnp.transpose(f0_ncl, (0, 2, 1)).astype(jnp.float32)
    y = fused_feature_extractor(params, x, f0)
    return jnp.transpose(y, (0, 2, 1))                         # back to PyTorch NCL


if __name__ == "__main__":
    # small shapes consistent with the module (defaults 768/512/1536/4 scaled down)
    B, L = 2, 64
    input_channels, channels, hidden_channels = 192, 128, 256
    num_layers, kernel_size = 2, 7

    key = jax.random.PRNGKey(0)
    kp, kx, kf = jax.random.split(key, 3)
    params = init_params(kp, input_channels, channels, hidden_channels,
                         num_layers, kernel_size)

    x = jax.random.normal(kx, (B, input_channels, L), jnp.float32)   # NCL
    f0 = jax.random.uniform(kf, (B, 1, L), jnp.float32) * 300.0      # NCL

    out = feature_extractor_forward(params, x, f0)
    out = jax.block_until_ready(out)
    assert out.shape == (B, channels, L)
    assert jnp.all(jnp.isfinite(out))
    print("KERNEL_OK")
</pallas_src>

<mosaic_0001>
module attributes {stable_mosaic.version = 11 : i64} {
  func.func @_fused_feature_extractor_kernel(%arg0: i32, %arg1: memref<2x64x192xbf16, #tpu.memory_space<vmem>>, %arg2: memref<2x64x1xf32, #tpu.memory_space<vmem>>, %arg3: memref<192x128xbf16, #tpu.memory_space<vmem>>, %arg4: memref<1x128xf32, #tpu.memory_space<vmem>>, %arg5: memref<1x128xf32, #tpu.memory_space<vmem>>, %arg6: memref<1x128xf32, #tpu.memory_space<vmem>>, %arg7: memref<128x128xbf16, #tpu.memory_space<vmem>>, %arg8: memref<1x128xf32, #tpu.memory_space<vmem>>, %arg9: memref<1x7x128xf32, #tpu.memory_space<vmem>>, %arg10: memref<1x1x128xf32, #tpu.memory_space<vmem>>, %arg11: memref<1x128x256xbf16, #tpu.memory_space<vmem>>, %arg12: memref<1x1x256xf32, #tpu.memory_space<vmem>>, %arg13: memref<1x128x256xbf16, #tpu.memory_space<vmem>>, %arg14: memref<1x1x256xf32, #tpu.memory_space<vmem>>, %arg15: memref<1x256x128xbf16, #tpu.memory_space<vmem>>, %arg16: memref<1x1x128xf32, #tpu.memory_space<vmem>>, %arg17: memref<1x1x128xf32, #tpu.memory_space<vmem>>, %arg18: memref<2x64x128xf32, #tpu.memory_space<vmem>>, %arg19: memref<2x80x128xf32, #tpu.memory_space<vmem>>, %arg20: memref<128x128xbf16, #tpu.memory_space<vmem>>) attributes {dimension_semantics = [#tpu.dimension_semantics<arbitrary>], iteration_bounds = array<i64: 2>, scalar_prefetch = 0 : i64, scratch_operands = 2 : i64, tpu.core_type = #tpu.core_type<tc>, window_params = [{pipeline_mode = #tpu.pipeline_mode<synchronous>, transform_indices = @transform_0, window_bounds = array<i64: 2, 64, 192>}, {pipeline_mode = #tpu.pipeline_mode<synchronous>, transform_indices = @transform_1, window_bounds = array<i64: 2, 64, 1>}, {pipeline_mode = #tpu.pipeline_mode<synchronous>, transform_indices = @transform_2, window_bounds = array<i64: 192, 128>}, {pipeline_mode = #tpu.pipeline_mode<synchronous>, transform_indices = @transform_3, window_bounds = array<i64: 1, 128>}, {pipeline_mode = #tpu.pipeline_mode<synchronous>, transform_indices = @transform_4, window_bounds = array<i64: 1, 128>}, {pipeline_mode = #tpu.pipeline_mode<synchronous>, transform_indices = @transform_5, window_bounds = array<i64: 1, 128>}, {pipeline_mode = #tpu.pipeline_mode<synchronous>, transform_indices = @transform_6, window_bounds = array<i64: 128, 128>}, {pipeline_mode = #tpu.pipeline_mode<synchronous>, transform_indices = @transform_7, window_bounds = array<i64: 1, 128>}, {transform_indices = @transform_8, window_bounds = array<i64: 1, 7, 128>}, {transform_indices = @transform_9, window_bounds = array<i64: 1, 1, 128>}, {transform_indices = @transform_10, window_bounds = array<i64: 1, 128, 256>}, {transform_indices = @transform_11, window_bounds = array<i64: 1, 1, 256>}, {transform_indices = @transform_12, window_bounds = array<i64: 1, 128, 256>}, {transform_indices = @transform_13, window_bounds = array<i64: 1, 1, 256>}, {transform_indices = @transform_14, window_bounds = array<i64: 1, 256, 128>}, {transform_indices = @transform_15, window_bounds = array<i64: 1, 1, 128>}, {transform_indices = @transform_16, window_bounds = array<i64: 1, 1, 128>}, {pipeline_mode = #tpu.pipeline_mode<synchronous>, transform_indices = @transform_17, window_bounds = array<i64: 2, 64, 128>}]} {
    %c0_i32 = arith.constant 0 : i32
    %0 = arith.cmpi eq, %arg0, %c0_i32 : i32
    %1 = arith.extui %0 : i1 to i32
    %c0_i32_0 = arith.constant 0 : i32
    %2 = arith.cmpi ne, %1, %c0_i32_0 : i32
    scf.if %2 {
      %cst_58 = arith.constant 0.000000e+00 : f32
      %119 = vector.broadcast %cst_58 : f32 to vector<2x80x128xf32>
      %c0_59 = arith.constant 0 : index
      %c0_60 = arith.constant 0 : index
      %c0_61 = arith.constant 0 : index
      %120 = vector.load %arg19[%c0_59, %c0_60, %c0_61] : memref<2x80x128xf32, #tpu.memory_space<vmem>>, vector<2x80x128xf32>
      tpu.vector_store %arg19[%c0_59, %c0_60, %c0_61], %119 {strides = array<i32>} : memref<2x80x128xf32, #tpu.memory_space<vmem>>, vector<2x80x128xf32>,
      %c0_62 = arith.constant 0 : index
      %c0_63 = arith.constant 0 : index
      %c0_64 = arith.constant 0 : index
      %121 = vector.load %arg1[%c0_62, %c0_63, %c0_64] : memref<2x64x192xbf16, #tpu.memory_space<vmem>>, vector<2x64x192xbf16>
      %122 = vector.shape_cast %121 : vector<2x64x192xbf16> to vector<128x192xbf16>
      %c0_65 = arith.constant 0 : index
      %c0_66 = arith.constant 0 : index
      %123 = vector.load %arg3[%c0_65, %c0_66] : memref<192x128xbf16, #tpu.memory_space<vmem>>, vector<192x128xbf16>
      %cst_67 = arith.constant dense<0.000000e+00> : vector<128x128xf32>
      %124 = tpu.matmul %122, %123, %cst_67 {dimension_numbers = #tpu.dot_dimension_numbers<[1], [0], [0], [1], [0, 0, 1, 1], [], []>} : vector<128x192xbf16>, vector<192x128xbf16>, vector<128x128xf32> -> vector<128x128xf32>
      %c0_68 = arith.constant 0 : index
      %c0_69 = arith.constant 0 : index
      %125 = vector.load %arg4[%c0_68, %c0_69] : memref<1x128xf32, #tpu.memory_space<vmem>>, vector<1x128xf32>
      %126 = vector.broadcast %125 : vector<1x128xf32> to vector<128x128xf32>
      %127 = arith.addf %124, %126 : vector<128x128xf32>
      %128 = vector.shape_cast %127 : vector<128x128xf32> to vector<2x64x128xf32>
      %c0_70 = arith.constant 0 : index
      %c8_71 = arith.constant 8 : index
      %c0_72 = arith.constant 0 : index
      %129 = vector.load %arg19[%c0_70, %c8_71, %c0_72] : memref<2x80x128xf32, #tpu.memory_space<vmem>>, vector<2x64x128xf32>
      tpu.vector_store %arg19[%c0_70, %c8_71, %c0_72], %128 {strides = array<i32>} : memref<2x80x128xf32, #tpu.memory_space<vmem>>, vector<2x64x128xf32>,
      %c0_73 = arith.constant 0 : index
      %c0_74 = arith.constant 0 : index
      %c0_75 = arith.constant 0 : index
      %130 = vector.load %arg2[%c0_73, %c0_74, %c0_75] : memref<2x64x1xf32, #tpu.memory_space<vmem>>, vector<2x64x1xf32>
      %131 = vector.shape_cast %130 : vector<2x64x1xf32> to vector<128x1xf32>
      %c0_76 = arith.constant 0 : index
      %c0_77 = arith.constant 0 : index
      %132 = vector.load %arg5[%c0_76, %c0_77] : memref<1x128xf32, #tpu.memory_space<vmem>>, vector<1x128xf32>
      %133 = vector.broadcast %131 : vector<128x1xf32> to vector<128x128xf32>
      %134 = vector.broadcast %132 : vector<1x128xf32> to vector<128x128xf32>
      %135 = arith.mulf %133, %134 : vector<128x128xf32>
      %c0_78 = arith.constant 0 : index
      %c0_79 = arith.constant 0 : index
      %136 = vector.load %arg6[%c0_78, %c0_79] : memref<1x128xf32, #tpu.memory_space<vmem>>, vector<1x128xf32>
      %137 = vector.broadcast %136 : vector<1x128xf32> to vector<128x128xf32>
      %138 = arith.addf %135, %137 : vector<128x128xf32>
      %139 = math.sin %138 : vector<128x128xf32>
      %140 = arith.truncf %139 : vector<128x128xf32> to vector<128x128xbf16>
      %c0_80 = arith.constant 0 : index
      %c0_81 = arith.constant 0 : index
      %141 = vector.load %arg7[%c0_80, %c0_81] : memref<128x128xbf16, #tpu.memory_space<vmem>>, vector<128x128xbf16>
      %cst_82 = arith.constant dense<0.000000e+00> : vector<128x128xf32>
      %142 = tpu.matmul %140, %141, %cst_82 {dimension_numbers = #tpu.dot_dimension_numbers<[1], [0], [0], [1], [0, 0, 1, 1], [], []>} : vector<128x128xbf16>, vector<128x128xbf16>, vector<128x128xf32> -> vector<128x128xf32>
      %c0_83 = arith.constant 0 : index
      %c0_84 = arith.constant 0 : index
      %143 = vector.load %arg8[%c0_83, %c0_84] : memref<1x128xf32, #tpu.memory_space<vmem>>, vector<1x128xf32>
      %144 = vector.broadcast %143 : vector<1x128xf32> to vector<128x128xf32>
      %145 = arith.addf %142, %144 : vector<128x128xf32>
      %146 = arith.truncf %145 : vector<128x128xf32> to vector<128x128xbf16>
      %c0_85 = arith.constant 0 : index
      %c0_86 = arith.constant 0 : index
      %147 = vector.load %arg20[%c0_85, %c0_86] : memref<128x128xbf16, #tpu.memory_space<vmem>>, vector<128x128xbf16>
      tpu.vector_store %arg20[%c0_85, %c0_86], %146 {strides = array<i32>} : memref<128x128xbf16, #tpu.memory_space<vmem>>, vector<128x128xbf16>,
    } else {
    }
    %c0 = arith.constant 0 : index
    %c8 = arith.constant 8 : index
    %c0_1 = arith.constant 0 : index
    %3 = vector.load %arg19[%c0, %c8, %c0_1] : memref<2x80x128xf32, #tpu.memory_space<vmem>>, vector<2x64x128xf32>
    %c0_2 = arith.constant 0 : index
    %c0_3 = arith.constant 0 : index
    %c0_4 = arith.constant 0 : index
    %4 = vector.load %arg9[%c0_2, %c0_3, %c0_4] : memref<1x7x128xf32, #tpu.memory_space<vmem>>, vector<1x7x128xf32>
    %5 = vector.shape_cast %4 : vector<1x7x128xf32> to vector<7x128xf32>
    %6 = vector.extract_strided_slice %5 {offsets = [3, 0], sizes = [1, 128], strides = [1, 1]} : vector<7x128xf32> to vector<1x128xf32>
    %7 = vector.shape_cast %6 : vector<1x128xf32> to vector<1x1x128xf32>
    %8 = vector.broadcast %7 : vector<1x1x128xf32> to vector<2x64x128xf32>
    %9 = arith.mulf %3, %8 : vector<2x64x128xf32>
    %c0_5 = arith.constant 0 : index
    %c5 = arith.constant 5 : index
    %c0_6 = arith.constant 0 : index
    %10 = vector.load %arg19[%c0_5, %c5, %c0_6] : memref<2x80x128xf32, #tpu.memory_space<vmem>>, vector<2x64x128xf32>
    %11 = vector.extract_strided_slice %5 {offsets = [0, 0], sizes = [1, 128], strides = [1, 1]} : vector<7x128xf32> to vector<1x128xf32>
    %12 = vector.shape_cast %11 : vector<1x128xf32> to vector<1x1x128xf32>
    %13 = vector.broadcast %12 : vector<1x1x128xf32> to vector<2x64x128xf32>
    %14 = arith.mulf %10, %13 : vector<2x64x128xf32>
    %15 = arith.addf %9, %14 : vector<2x64x128xf32>
    %c0_7 = arith.constant 0 : index
    %c6 = arith.constant 6 : index
    %c0_8 = arith.constant 0 : index
    %16 = vector.load %arg19[%c0_7, %c6, %c0_8] : memref<2x80x128xf32, #tpu.memory_space<vmem>>, vector<2x64x128xf32>
    %17 = vector.extract_strided_slice %5 {offsets = [1, 0], sizes = [1, 128], strides = [1, 1]} : vector<7x128xf32> to vector<1x128xf32>
    %18 = vector.shape_cast %17 : vector<1x128xf32> to vector<1x1x128xf32>
    %19 = vector.broadcast %18 : vector<1x1x128xf32> to vector<2x64x128xf32>
    %20 = arith.mulf %16, %19 : vector<2x64x128xf32>
    %21 = arith.addf %15, %20 : vector<2x64x128xf32>
    %c0_9 = arith.constant 0 : index
    %c7 = arith.constant 7 : index
    %c0_10 = arith.constant 0 : index
    %22 = vector.load %arg19[%c0_9, %c7, %c0_10] : memref<2x80x128xf32, #tpu.memory_space<vmem>>, vector<2x64x128xf32>
    %23 = vector.extract_strided_slice %5 {offsets = [2, 0], sizes = [1, 128], strides = [1, 1]} : vector<7x128xf32> to vector<1x128xf32>
    %24 = vector.shape_cast %23 : vector<1x128xf32> to vector<1x1x128xf32>
    %25 = vector.broadcast %24 : vector<1x1x128xf32> to vector<2x64x128xf32>
    %26 = arith.mulf %22, %25 : vector<2x64x128xf32>
    %27 = arith.addf %21, %26 : vector<2x64x128xf32>
    %c0_11 = arith.constant 0 : index
    %c9 = arith.constant 9 : index
    %c0_12 = arith.constant 0 : index
    %28 = vector.load %arg19[%c0_11, %c9, %c0_12] : memref<2x80x128xf32, #tpu.memory_space<vmem>>, vector<2x64x128xf32>
    %29 = vector.extract_strided_slice %5 {offsets = [4, 0], sizes = [1, 128], strides = [1, 1]} : vector<7x128xf32> to vector<1x128xf32>
    %30 = vector.shape_cast %29 : vector<1x128xf32> to vector<1x1x128xf32>
    %31 = vector.broadcast %30 : vector<1x1x128xf32> to vector<2x64x128xf32>
    %32 = arith.mulf %28, %31 : vector<2x64x128xf32>
    %33 = arith.addf %27, %32 : vector<2x64x128xf32>
    %c0_13 = arith.constant 0 : index
    %c10 = arith.constant 10 : index
    %c0_14 = arith.constant 0 : index
    %34 = vector.load %arg19[%c0_13, %c10, %c0_14] : memref<2x80x128xf32, #tpu.memory_space<vmem>>, vector<2x64x128xf32>
    %35 = vector.extract_strided_slice %5 {offsets = [5, 0], sizes = [1, 128], strides = [1, 1]} : vector<7x128xf32> to vector<1x128xf32>
    %36 = vector.shape_cast %35 : vector<1x128xf32> to vector<1x1x128xf32>
    %37 = vector.broadcast %36 : vector<1x1x128xf32> to vector<2x64x128xf32>
    %38 = arith.mulf %34, %37 : vector<2x64x128xf32>
    %39 = arith.addf %33, %38 : vector<2x64x128xf32>
    %c0_15 = arith.constant 0 : index
    %c11 = arith.constant 11 : index
    %c0_16 = arith.constant 0 : index
    %40 = vector.load %arg19[%c0_15, %c11, %c0_16] : memref<2x80x128xf32, #tpu.memory_space<vmem>>, vector<2x64x128xf32>
    %41 = vector.extract_strided_slice %5 {offsets = [6, 0], sizes = [1, 128], strides = [1, 1]} : vector<7x128xf32> to vector<1x128xf32>
    %42 = vector.shape_cast %41 : vector<1x128xf32> to vector<1x1x128xf32>
    %43 = vector.broadcast %42 : vector<1x1x128xf32> to vector<2x64x128xf32>
    %44 = arith.mulf %40, %43 : vector<2x64x128xf32>
    %45 = arith.addf %39, %44 : vector<2x64x128xf32>
    %46 = vector.shape_cast %45 : vector<2x64x128xf32> to vector<128x128xf32>
    %c0_17 = arith.constant 0 : index
    %c0_18 = arith.constant 0 : index
    %c0_19 = arith.constant 0 : index
    %47 = vector.load %arg10[%c0_17, %c0_18, %c0_19] : memref<1x1x128xf32, #tpu.memory_space<vmem>>, vector<1x1x128xf32>
    %48 = vector.shape_cast %47 : vector<1x1x128xf32> to vector<1x128xf32>
    %49 = vector.broadcast %48 : vector<1x128xf32> to vector<128x128xf32>
    %50 = arith.addf %46, %49 : vector<128x128xf32>
    %51 = vector.shape_cast %3 : vector<2x64x128xf32> to vector<128x128xf32>
    %cst = arith.constant dense<0.000000e+00> : vector<128xf32>
    %52 = vector.multi_reduction <add>, %50, %cst [1] : vector<128x128xf32> to vector<128xf32>
    %53 = vector.shape_cast %52 : vector<128xf32> to vector<128x1xf32>
    %cst_20 = arith.constant 1.280000e+02 : f32
    %54 = vector.broadcast %cst_20 : f32 to vector<128x1xf32>
    %55 = arith.divf %53, %54 : vector<128x1xf32>
    %56 = vector.broadcast %55 : vector<128x1xf32> to vector<128x128xf32>
    %57 = arith.subf %50, %56 : vector<128x128xf32>
    %58 = arith.mulf %57, %57 : vector<128x128xf32>
    %cst_21 = arith.constant dense<0.000000e+00> : vector<128xf32>
    %59 = vector.multi_reduction <add>, %58, %cst_21 [1] : vector<128x128xf32> to vector<128xf32>
    %60 = vector.shape_cast %59 : vector<128xf32> to vector<128x1xf32>
    %cst_22 = arith.constant 0.00787401571 : f32
    %61 = vector.broadcast %cst_22 : f32 to vector<128x1xf32>
    %62 = arith.mulf %60, %61 : vector<128x1xf32>
    %63 = math.sqrt %62 : vector<128x1xf32>
    %cst_23 = arith.constant 9.99999997E-7 : f32
    %64 = vector.broadcast %cst_23 : f32 to vector<128x1xf32>
    %65 = arith.addf %63, %64 : vector<128x1xf32>
    %66 = vector.broadcast %65 : vector<128x1xf32> to vector<128x128xf32>
    %67 = arith.divf %57, %66 : vector<128x128xf32>
    %c0_24 = arith.constant 0 : index
    %c0_25 = arith.constant 0 : index
    %68 = vector.load %arg20[%c0_24, %c0_25] : memref<128x128xbf16, #tpu.memory_space<vmem>>, vector<128x128xbf16>
    %c0_26 = arith.constant 0 : index
    %c0_27 = arith.constant 0 : index
    %c0_28 = arith.constant 0 : index
    %69 = vector.load %arg11[%c0_26, %c0_27, %c0_28] : memref<1x128x256xbf16, #tpu.memory_space<vmem>>, vector<1x128x256xbf16>
    %70 = vector.shape_cast %69 : vector<1x128x256xbf16> to vector<128x256xbf16>
    %cst_29 = arith.constant dense<0.000000e+00> : vector<128x256xf32>
    %71 = tpu.matmul %68, %70, %cst_29 {dimension_numbers = #tpu.dot_dimension_numbers<[1], [0], [0], [1], [0, 0, 1, 1], [], []>} : vector<128x128xbf16>, vector<128x256xbf16>, vector<128x256xf32> -> vector<128x256xf32>
    %c0_30 = arith.constant 0 : index
    %c0_31 = arith.constant 0 : index
    %c0_32 = arith.constant 0 : index
    %72 = vector.load %arg12[%c0_30, %c0_31, %c0_32] : memref<1x1x256xf32, #tpu.memory_space<vmem>>, vector<1x1x256xf32>
    %73 = vector.shape_cast %72 : vector<1x1x256xf32> to vector<1x256xf32>
    %74 = vector.broadcast %73 : vector<1x256xf32> to vector<128x256xf32>
    %75 = arith.addf %71, %74 : vector<128x256xf32>
    %76 = vector.extract_strided_slice %75 {offsets = [0, 0], sizes = [128, 128], strides = [1, 1]} : vector<128x256xf32> to vector<128x128xf32>
    %77 = vector.extract_strided_slice %75 {offsets = [0, 128], sizes = [128, 128], strides = [1, 1]} : vector<128x256xf32> to vector<128x128xf32>
    %78 = arith.mulf %67, %77 : vector<128x128xf32>
    %79 = arith.addf %78, %76 : vector<128x128xf32>
    %80 = arith.truncf %79 : vector<128x128xf32> to vector<128x128xbf16>
    %c0_33 = arith.constant 0 : index
    %c0_34 = arith.constant 0 : index
    %c0_35 = arith.constant 0 : index
    %81 = vector.load %arg13[%c0_33, %c0_34, %c0_35] : memref<1x128x256xbf16, #tpu.memory_space<vmem>>, vector<1x128x256xbf16>
    %82 = vector.shape_cast %81 : vector<1x128x256xbf16> to vector<128x256xbf16>
    %cst_36 = arith.constant dense<0.000000e+00> : vector<128x256xf32>
    %83 = tpu.matmul %80, %82, %cst_36 {dimension_numbers = #tpu.dot_dimension_numbers<[1], [0], [0], [1], [0, 0, 1, 1], [], []>} : vector<128x128xbf16>, vector<128x256xbf16>, vector<128x256xf32> -> vector<128x256xf32>
    %c0_37 = arith.constant 0 : index
    %c0_38 = arith.constant 0 : index
    %c0_39 = arith.constant 0 : index
    %84 = vector.load %arg14[%c0_37, %c0_38, %c0_39] : memref<1x1x256xf32, #tpu.memory_space<vmem>>, vector<1x1x256xf32>
    %85 = vector.shape_cast %84 : vector<1x1x256xf32> to vector<1x256xf32>
    %86 = vector.broadcast %85 : vector<1x256xf32> to vector<128x256xf32>
    %87 = arith.addf %83, %86 : vector<128x256xf32>
    %88 = arith.mulf %87, %87 : vector<128x256xf32>
    %89 = arith.mulf %87, %88 : vector<128x256xf32>
    %cst_40 = arith.constant 4.471500e-02 : f32
    %90 = vector.broadcast %cst_40 : f32 to vector<128x256xf32>
    %91 = arith.mulf %90, %89 : vector<128x256xf32>
    %92 = arith.addf %87, %91 : vector<128x256xf32>
    %cst_41 = arith.constant 0.797884583 : f32
    %93 = vector.broadcast %cst_41 : f32 to vector<128x256xf32>
    %94 = arith.mulf %93, %92 : vector<128x256xf32>
    %95 = math.tanh %94 : vector<128x256xf32>
    %cst_42 = arith.constant 1.000000e+00 : f32
    %96 = vector.broadcast %cst_42 : f32 to vector<128x256xf32>
    %97 = arith.addf %96, %95 : vector<128x256xf32>
    %cst_43 = arith.constant 5.000000e-01 : f32
    %98 = vector.broadcast %cst_43 : f32 to vector<128x256xf32>
    %99 = arith.mulf %98, %97 : vector<128x256xf32>
    %100 = arith.mulf %87, %99 : vector<128x256xf32>
    %101 = arith.truncf %100 : vector<128x256xf32> to vector<128x256xbf16>
    %c0_44 = arith.constant 0 : index
    %c0_45 = arith.constant 0 : index
    %c0_46 = arith.constant 0 : index
    %102 = vector.load %arg15[%c0_44, %c0_45, %c0_46] : memref<1x256x128xbf16, #tpu.memory_space<vmem>>, vector<1x256x128xbf16>
    %103 = vector.shape_cast %102 : vector<1x256x128xbf16> to vector<256x128xbf16>
    %cst_47 = arith.constant dense<0.000000e+00> : vector<128x128xf32>
    %104 = tpu.matmul %101, %103, %cst_47 {dimension_numbers = #tpu.dot_dimension_numbers<[1], [0], [0], [1], [0, 0, 1, 1], [], []>} : vector<128x256xbf16>, vector<256x128xbf16>, vector<128x128xf32> -> vector<128x128xf32>
    %c0_48 = arith.constant 0 : index
    %c0_49 = arith.constant 0 : index
    %c0_50 = arith.constant 0 : index
    %105 = vector.load %arg16[%c0_48, %c0_49, %c0_50] : memref<1x1x128xf32, #tpu.memory_space<vmem>>, vector<1x1x128xf32>
    %106 = vector.shape_cast %105 : vector<1x1x128xf32> to vector<1x128xf32>
    %107 = vector.broadcast %106 : vector<1x128xf32> to vector<128x128xf32>
    %108 = arith.addf %104, %107 : vector<128x128xf32>
    %c0_51 = arith.constant 0 : index
    %c0_52 = arith.constant 0 : index
    %c0_53 = arith.constant 0 : index
    %109 = vector.load %arg17[%c0_51, %c0_52, %c0_53] : memref<1x1x128xf32, #tpu.memory_space<vmem>>, vector<1x1x128xf32>
    %110 = vector.shape_cast %109 : vector<1x1x128xf32> to vector<1x128xf32>
    %111 = vector.broadcast %110 : vector<1x128xf32> to vector<128x128xf32>
    %112 = arith.mulf %108, %111 : vector<128x128xf32>
    %113 = arith.addf %112, %51 : vector<128x128xf32>
    %114 = vector.shape_cast %113 : vector<128x128xf32> to vector<2x64x128xf32>
    %c0_54 = arith.constant 0 : index
    %c8_55 = arith.constant 8 : index
    %c0_56 = arith.constant 0 : index
    %115 = vector.load %arg19[%c0_54, %c8_55, %c0_56] : memref<2x80x128xf32, #tpu.memory_space<vmem>>, vector<2x64x128xf32>
    tpu.vector_store %arg19[%c0_54, %c8_55, %c0_56], %114 {strides = array<i32>} : memref<2x80x128xf32, #tpu.memory_space<vmem>>, vector<2x64x128xf32>,
    %c1_i32 = arith.constant 1 : i32
    %116 = arith.cmpi eq, %arg0, %c1_i32 : i32
    %117 = arith.extui %116 : i1 to i32
    %c0_i32_57 = arith.constant 0 : i32
    %118 = arith.cmpi ne, %117, %c0_i32_57 : i32
    scf.if %118 {
      %c0_58 = arith.constant 0 : index
      %c0_59 = arith.constant 0 : index
      %c0_60 = arith.constant 0 : index
      %119 = vector.load %arg18[%c0_58, %c0_59, %c0_60] : memref<2x64x128xf32, #tpu.memory_space<vmem>>, vector<2x64x128xf32>
      tpu.vector_store %arg18[%c0_58, %c0_59, %c0_60], %114 {strides = array<i32>} : memref<2x64x128xf32, #tpu.memory_space<vmem>>, vector<2x64x128xf32>,
    } else {
    }
    return
  }
  func.func @transform_0(%arg0: i32) -> (i32, i32, i32) {
    %c0_i32 = arith.constant 0 : i32
    %c0_i32_0 = arith.constant 0 : i32
    %c0_i32_1 = arith.constant 0 : i32
    %c0_i32_2 = arith.constant 0 : i32
    return %c0_i32, %c0_i32_0, %c0_i32_1 : i32, i32, i32
  }
  func.func @transform_1(%arg0: i32) -> (i32, i32, i32) {
    %c0_i32 = arith.constant 0 : i32
    %c0_i32_0 = arith.constant 0 : i32
    %c0_i32_1 = arith.constant 0 : i32
    %c0_i32_2 = arith.constant 0 : i32
    return %c0_i32, %c0_i32_0, %c0_i32_1 : i32, i32, i32
  }
  func.func @transform_2(%arg0: i32) -> (i32, i32) {
    %c0_i32 = arith.constant 0 : i32
    %c0_i32_0 = arith.constant 0 : i32
    %c0_i32_1 = arith.constant 0 : i32
    return %c0_i32, %c0_i32_0 : i32, i32
  }
  func.func @transform_3(%arg0: i32) -> (i32, i32) {
    %c0_i32 = arith.constant 0 : i32
    %c0_i32_0 = arith.constant 0 : i32
    %c0_i32_1 = arith.constant 0 : i32
    return %c0_i32, %c0_i32_0 : i32, i32
  }
  func.func @transform_4(%arg0: i32) -> (i32, i32) {
    %c0_i32 = arith.constant 0 : i32
    %c0_i32_0 = arith.constant 0 : i32
    %c0_i32_1 = arith.constant 0 : i32
    return %c0_i32, %c0_i32_0 : i32, i32
  }
  func.func @transform_5(%arg0: i32) -> (i32, i32) {
    %c0_i32 = arith.constant 0 : i32
    %c0_i32_0 = arith.constant 0 : i32
    %c0_i32_1 = arith.constant 0 : i32
    return %c0_i32, %c0_i32_0 : i32, i32
  }
  func.func @transform_6(%arg0: i32) -> (i32, i32) {
    %c0_i32 = arith.constant 0 : i32
    %c0_i32_0 = arith.constant 0 : i32
    %c0_i32_1 = arith.constant 0 : i32
    return %c0_i32, %c0_i32_0 : i32, i32
  }
  func.func @transform_7(%arg0: i32) -> (i32, i32) {
    %c0_i32 = arith.constant 0 : i32
    %c0_i32_0 = arith.constant 0 : i32
    %c0_i32_1 = arith.constant 0 : i32
    return %c0_i32, %c0_i32_0 : i32, i32
  }
  func.func @transform_8(%arg0: i32) -> (i32, i32, i32) {
    %c0_i32 = arith.constant 0 : i32
    %c0_i32_0 = arith.constant 0 : i32
    %c0_i32_1 = arith.constant 0 : i32
    return %arg0, %c0_i32, %c0_i32_0 : i32, i32, i32
  }
  func.func @transform_9(%arg0: i32) -> (i32, i32, i32) {
    %c0_i32 = arith.constant 0 : i32
    %c0_i32_0 = arith.constant 0 : i32
    %c0_i32_1 = arith.constant 0 : i32
    return %arg0, %c0_i32, %c0_i32_0 : i32, i32, i32
  }
  func.func @transform_10(%arg0: i32) -> (i32, i32, i32) {
    %c0_i32 = arith.constant 0 : i32
    %c0_i32_0 = arith.constant 0 : i32
    %c0_i32_1 = arith.constant 0 : i32
    return %arg0, %c0_i32, %c0_i32_0 : i32, i32, i32
  }
  func.func @transform_11(%arg0: i32) -> (i32, i32, i32) {
    %c0_i32 = arith.constant 0 : i32
    %c0_i32_0 = arith.constant 0 : i32
    %c0_i32_1 = arith.constant 0 : i32
    return %arg0, %c0_i32, %c0_i32_0 : i32, i32, i32
  }
  func.func @transform_12(%arg0: i32) -> (i32, i32, i32) {
    %c0_i32 = arith.constant 0 : i32
    %c0_i32_0 = arith.constant 0 : i32
    %c0_i32_1 = arith.constant 0 : i32
    return %arg0, %c0_i32, %c0_i32_0 : i32, i32, i32
  }
  func.func @transform_13(%arg0: i32) -> (i32, i32, i32) {
    %c0_i32 = arith.constant 0 : i32
    %c0_i32_0 = arith.constant 0 : i32
    %c0_i32_1 = arith.constant 0 : i32
    return %arg0, %c0_i32, %c0_i32_0 : i32, i32, i32
  }
  func.func @transform_14(%arg0: i32) -> (i32, i32, i32) {
    %c0_i32 = arith.constant 0 : i32
    %c0_i32_0 = arith.constant 0 : i32
    %c0_i32_1 = arith.constant 0 : i32
    return %arg0, %c0_i32, %c0_i32_0 : i32, i32, i32
  }
  func.func @transform_15(%arg0: i32) -> (i32, i32, i32) {
    %c0_i32 = arith.constant 0 : i32
    %c0_i32_0 = arith.constant 0 : i32
    %c0_i32_1 = arith.constant 0 : i32
    return %arg0, %c0_i32, %c0_i32_0 : i32, i32, i32
  }
  func.func @transform_16(%arg0: i32) -> (i32, i32, i32) {
    %c0_i32 = arith.constant 0 : i32
    %c0_i32_0 = arith.constant 0 : i32
    %c0_i32_1 = arith.constant 0 : i32
    return %arg0, %c0_i32, %c0_i32_0 : i32, i32, i32
  }
  func.func @transform_17(%arg0: i32) -> (i32, i32, i32) {
    %c0_i32 = arith.constant 0 : i32
    %c0_i32_0 = arith.constant 0 : i32
    %c0_i32_1 = arith.constant 0 : i32
    %c0_i32_2 = arith.constant 0 : i32
    return %c0_i32, %c0_i32_0, %c0_i32_1 : i32, i32, i32
  }
}

</mosaic_0001>

<llo_original>
// kernel: tpu_custom_call.1
$region0: #{tpu_custom_call.1}
  #allocation0 [shape = 'u32[]', space=smem, size = 0x4, offset = 0x4, fixed_abs, tag = 'smem constant byte address 0x4 - core index']
  #allocation1 [shape = 'u32[72,128]{1,0:T(1,128)}', space=vmem, size = 0x9000, scoped, tag = 'internal scratch']
  #allocation2 [shape = 'f32[2,80,128]{2,1,0:T(8,128)}', space=vmem, size = 0x14000, scoped, tag = 'scratch operand']
  #allocation3 [shape = 'bf16[128,128]{1,0:T(8,128)(2,1)}', space=vmem, size = 0x8000, scoped, tag = 'scratch operand']
  %s0 = inlined_call_operand.vmem [shape: bf16[2,64,192], index: 0, kind: input, shape index: {}]
  %s1 = inlined_call_operand.vmem [shape: f32[2,64,1], index: 1, kind: input, shape index: {}]
  %s2 = inlined_call_operand.hbm [shape: bf16[192,128], index: 2, kind: input, shape index: {}]
  %s3 = inlined_call_operand.vmem [shape: f32[1,128], index: 3, kind: input, shape index: {}]
  %s4 = inlined_call_operand.vmem [shape: f32[1,128], index: 4, kind: input, shape index: {}]
  %s5 = inlined_call_operand.vmem [shape: f32[1,128], index: 5, kind: input, shape index: {}]
  %s6 = inlined_call_operand.hbm [shape: bf16[128,128], index: 6, kind: input, shape index: {}]
  %s7 = inlined_call_operand.vmem [shape: f32[1,128], index: 7, kind: input, shape index: {}]
  %s8 = inlined_call_operand.vmem [shape: f32[2,7,128], index: 8, kind: input, shape index: {}]
  %s9 = inlined_call_operand.vmem [shape: f32[2,1,128], index: 9, kind: input, shape index: {}]
  %s10 = inlined_call_operand.hbm [shape: bf16[2,128,256], index: 10, kind: input, shape index: {}]
  %s11 = inlined_call_operand.vmem [shape: f32[2,1,256], index: 11, kind: input, shape index: {}]
  %s12 = inlined_call_operand.hbm [shape: bf16[2,128,256], index: 12, kind: input, shape index: {}]
  %s13 = inlined_call_operand.vmem [shape: f32[2,1,256], index: 13, kind: input, shape index: {}]
  %s14 = inlined_call_operand.hbm [shape: bf16[2,256,128], index: 14, kind: input, shape index: {}]
  %s15 = inlined_call_operand.vmem [shape: f32[2,1,128], index: 15, kind: input, shape index: {}]
  %s16 = inlined_call_operand.vmem [shape: f32[2,1,128], index: 16, kind: input, shape index: {}]
  %s17 = inlined_call_operand.hbm [shape: f32[2,64,128], index: 17, kind: output, shape index: {}]
  %s18 = sld [smem:[#allocation0]]
  $region129: #{tpu_custom_call.1} parent=0
    _
  %s20 = ssub.s32 1, %s18
  %s21 = scalar_select 0, %s20, %s18
  $region1: #{tpu_custom_call.1} parent=0
    #allocation4 [shape = 'u8[49152]{0}', space=vmem, size = 0xc000, scoped, tag = 'input window, operand 2, single buffered']
    #allocation5 [shape = 's32[2]{0}', space=sflag, size = 0x8, scoped, tag = 'scoped memory for tpu_custom_call.1']
    #allocation6 [shape = 's32[2]{0}', space=sflag, size = 0x8, scoped, tag = 'scoped memory for tpu_custom_call.1']
    #allocation7 [shape = 'u8[32768]{0}', space=vmem, size = 0x8000, scoped, tag = 'input window, operand 6, single buffered']
    #allocation8 [shape = 's32[1]{0}', space=sflag, size = 0x4, scoped, tag = 'scoped memory for tpu_custom_call.1']
    #allocation9 [shape = 'u8[131072]{0}', space=vmem, size = 0x20000, scoped, tag = 'input window, operand 10']
    #allocation10 [shape = 'u8[131072]{0}', space=vmem, size = 0x20000, scoped, tag = 'input window, operand 12']
    #allocation11 [shape = 'u8[131072]{0}', space=vmem, size = 0x20000, scoped, tag = 'input window, operand 14']
    #allocation12 [shape = 'u8[65536]{0}', space=vmem, size = 0x10000, scoped, tag = 'output window, operand 0, single buffered']
    %22 = vsyncpa [#allocation5], 0
    %23 = vsyncpa [#allocation8], 0
    %24 = vsyncpa [#allocation6], 0
    loop: start=0, step=1, limit=4
    $region2: #{tpu_custom_call.1} parent=1 // loop_pre_header
      _
    $region3: #{tpu_custom_call.1} parent=1 // loop_header
      %s26 = sphi 0, %s30
      %p27 = scmp.ge.s32.totalorder %s26, 4
      %s34 = sphi 0, %s34
      %s36 = sphi 0, %s34
      %s37 = sphi 0, %s36
      %s51 = sphi 0, %s37
      %s55 = sphi 0, %s55
      %s57 = sphi 0, %s55
      %s58 = sphi 0, %s57
      %s72 = sphi 0, %s58
      %s76 = sphi 0, %s76
      %s78 = sphi 0, %s76
      %s79 = sphi 0, %s78
      %s93 = sphi 0, %s79
      %s97 = sphi 0, %s97
      %s99 = sphi 0, %s97
      %s100 = sphi 0, %s99
      %s114 = sphi 0, %s100
      %s118 = sphi 0, %s118
      %s120 = sphi 0, %s118
      %s121 = sphi 0, %s120
      %s135 = sphi 0, %s121
      %s139 = sphi 0, %s139
      %s141 = sphi 0, %s139
      %s142 = sphi 0, %s141
      %s156 = sphi 0, %s142
      %s160 = sphi 0, %s160
      %s162 = sphi 0, %s160
      %s163 = sphi 0, %s162
      %s177 = sphi 0, %s163
      %s181 = sphi 0, %s181
      %s183 = sphi 0, %s181
      %s184 = sphi 0, %s183
      %s198 = sphi 0, %s184
      %s204 = sphi 0, %s206
      %s207 = sphi 0, %s204
      %s208 = sphi 0, %s207
      %s224 = sphi 0, %s208
      %s230 = sphi 0, %s232
      %s233 = sphi 0, %s230
      %s234 = sphi 0, %s233
      %s250 = sphi 0, %s234
      %s256 = sphi 0, %s258
      %s259 = sphi 0, %s256
      %s260 = sphi 0, %s259
      %s276 = sphi 0, %s260
      %s282 = sphi 0, %s284
      %s285 = sphi 0, %s282
      %s286 = sphi 0, %s285
      %s302 = sphi 0, %s286
      %s308 = sphi 0, %s310
      %s311 = sphi 0, %s308
      %s312 = sphi 0, %s311
      %s328 = sphi 0, %s312
      %s334 = sphi 0, %s336
      %s337 = sphi 0, %s334
      %s338 = sphi 0, %s337
      %s354 = sphi 0, %s338
      %s360 = sphi 0, %s362
      %s363 = sphi 0, %s360
      %s364 = sphi 0, %s363
      %s380 = sphi 0, %s364
      %s386 = sphi 0, %s388
      %s389 = sphi 0, %s386
      %s390 = sphi 0, %s389
      %s406 = sphi 0, %s390
      %s412 = sphi 0, %s414
      %s415 = sphi 0, %s412
      %s416 = sphi 0, %s415
      %s432 = sphi 0, %s416
      %s436 = sphi 0, %s436
      %s438 = sphi 0, %s436
      %s439 = sphi 0, %s438
      %s453 = sphi 0, %s439
    $region4: #{tpu_custom_call.1} parent=1 // loop_header_branch
      %29 = sbr.rel (%p27) target = $region8
    $region5: #{tpu_custom_call.1} parent=1 // loop_body
      %s31 = ssub.s32 %s26, 1
      %s32 = ssub.s32 %s26, 2
      %s33 = sadd.s32 %s26, 1
      %s35 = sadd.s32 %s34, 1
      %p38 = scmp.eq.s32.totalorder %s26, 1
      %p39 = scmp.ne.s32.totalorder %s34, %s36
      %p40 = scmp.eq.s32.totalorder %s26, 0
      %p41 = por %p39, %p40
      %p42 = scmp.ne.s32.totalorder %s34, %s36
      %p43 = scmp.eq.s32.totalorder %s31, 1
      %p44 = por %p42, %p43
      %p45 = scmp.ne.s32.totalorder %s36, %s37
      %p46 = scmp.eq.s32.totalorder %s31, 0
      %p47 = por %p45, %p46
      %p48 = scmp.ne.s32.totalorder %s36, %s37
      %p49 = scmp.eq.s32.totalorder %s32, 1
      %p50 = por %p48, %p49
      %p52 = scmp.ne.s32.totalorder %s37, %s51
      %p53 = scmp.eq.s32.totalorder %s32, 0
      %p54 = por %p52, %p53
      %s56 = sadd.s32 %s55, 1
      %p59 = scmp.eq.s32.totalorder %s26, 1
      %p60 = scmp.ne.s32.totalorder %s55, %s57
      %p61 = scmp.eq.s32.totalorder %s26, 0
      %p62 = por %p60, %p61
      %p63 = scmp.ne.s32.totalorder %s55, %s57
      %p64 = scmp.eq.s32.totalorder %s31, 1
      %p65 = por %p63, %p64
      %p66 = scmp.ne.s32.totalorder %s57, %s58
      %p67 = scmp.eq.s32.totalorder %s31, 0
      %p68 = por %p66, %p67
      %p69 = scmp.ne.s32.totalorder %s57, %s58
      %p70 = scmp.eq.s32.totalorder %s32, 1
      %p71 = por %p69, %p70
      %p73 = scmp.ne.s32.totalorder %s58, %s72
      %p74 = scmp.eq.s32.totalorder %s32, 0
      %p75 = por %p73, %p74
      %s77 = sadd.s32 %s76, 1
      %p80 = scmp.eq.s32.totalorder %s26, 1
      %p81 = scmp.ne.s32.totalorder %s76, %s78
      %p82 = scmp.eq.s32.totalorder %s26, 0
      %p83 = por %p81, %p82
      %p84 = scmp.ne.s32.totalorder %s76, %s78
      %p85 = scmp.eq.s32.totalorder %s31, 1
      %p86 = por %p84, %p85
      %p87 = scmp.ne.s32.totalorder %s78, %s79
      %p88 = scmp.eq.s32.totalorder %s31, 0
      %p89 = por %p87, %p88
      %p90 = scmp.ne.s32.totalorder %s78, %s79
      %p91 = scmp.eq.s32.totalorder %s32, 1
      %p92 = por %p90, %p91
      %p94 = scmp.ne.s32.totalorder %s79, %s93
      %p95 = scmp.eq.s32.totalorder %s32, 0
      %p96 = por %p94, %p95
      %s98 = sadd.s32 %s97, 1
      %p101 = scmp.eq.s32.totalorder %s26, 1
      %p102 = scmp.ne.s32.totalorder %s97, %s99
      %p103 = scmp.eq.s32.totalorder %s26, 0
      %p104 = por %p102, %p103
      %p105 = scmp.ne.s32.totalorder %s97, %s99
      %p106 = scmp.eq.s32.totalorder %s31, 1
      %p107 = por %p105, %p106
      %p108 = scmp.ne.s32.totalorder %s99, %s100
      %p109 = scmp.eq.s32.totalorder %s31, 0
      %p110 = por %p108, %p109
      %p111 = scmp.ne.s32.totalorder %s99, %s100
      %p112 = scmp.eq.s32.totalorder %s32, 1
      %p113 = por %p111, %p112
      %p115 = scmp.ne.s32.totalorder %s100, %s114
      %p116 = scmp.eq.s32.totalorder %s32, 0
      %p117 = por %p115, %p116
      %s119 = sadd.s32 %s118, 1
      %p122 = scmp.eq.s32.totalorder %s26, 1
      %p123 = scmp.ne.s32.totalorder %s118, %s120
      %p124 = scmp.eq.s32.totalorder %s26, 0
      %p125 = por %p123, %p124
      %p126 = scmp.ne.s32.totalorder %s118, %s120
      %p127 = scmp.eq.s32.totalorder %s31, 1
      %p128 = por %p126, %p127
      %p129 = scmp.ne.s32.totalorder %s120, %s121
      %p130 = scmp.eq.s32.totalorder %s31, 0
      %p131 = por %p129, %p130
      %p132 = scmp.ne.s32.totalorder %s120, %s121
      %p133 = scmp.eq.s32.totalorder %s32, 1
      %p134 = por %p132, %p133
      %p136 = scmp.ne.s32.totalorder %s121, %s135
      %p137 = scmp.eq.s32.totalorder %s32, 0
      %p138 = por %p136, %p137
      %s140 = sadd.s32 %s139, 1
      %p143 = scmp.eq.s32.totalorder %s26, 1
      %p144 = scmp.ne.s32.totalorder %s139, %s141
      %p145 = scmp.eq.s32.totalorder %s26, 0
      %p146 = por %p144, %p145
      %p147 = scmp.ne.s32.totalorder %s139, %s141
      %p148 = scmp.eq.s32.totalorder %s31, 1
      %p149 = por %p147, %p148
      %p150 = scmp.ne.s32.totalorder %s141, %s142
      %p151 = scmp.eq.s32.totalorder %s31, 0
      %p152 = por %p150, %p151
      %p153 = scmp.ne.s32.totalorder %s141, %s142
      %p154 = scmp.eq.s32.totalorder %s32, 1
      %p155 = por %p153, %p154
      %p157 = scmp.ne.s32.totalorder %s142, %s156
      %p158 = scmp.eq.s32.totalorder %s32, 0
      %p159 = por %p157, %p158
      %s161 = sadd.s32 %s160, 1
      %p164 = scmp.eq.s32.totalorder %s26, 1
      %p165 = scmp.ne.s32.totalorder %s160, %s162
      %p166 = scmp.eq.s32.totalorder %s26, 0
      %p167 = por %p165, %p166
      %p168 = scmp.ne.s32.totalorder %s160, %s162
      %p169 = scmp.eq.s32.totalorder %s31, 1
      %p170 = por %p168, %p169
      %p171 = scmp.ne.s32.totalorder %s162, %s163
      %p172 = scmp.eq.s32.totalorder %s31, 0
      %p173 = por %p171, %p172
      %p174 = scmp.ne.s32.totalorder %s162, %s163
      %p175 = scmp.eq.s32.totalorder %s32, 1
      %p176 = por %p174, %p175
      %p178 = scmp.ne.s32.totalorder %s163, %s177
      %p179 = scmp.eq.s32.totalorder %s32, 0
      %p180 = por %p178, %p179
      %s182 = sadd.s32 %s181, 1
      %p185 = scmp.eq.s32.totalorder %s26, 1
      %p186 = scmp.ne.s32.totalorder %s181, %s183
      %p187 = scmp.eq.s32.totalorder %s26, 0
      %p188 = por %p186, %p187
      %p189 = scmp.ne.s32.totalorder %s181, %s183
      %p190 = scmp.eq.s32.totalorder %s31, 1
      %p191 = por %p189, %p190
      %p192 = scmp.ne.s32.totalorder %s183, %s184
      %p193 = scmp.eq.s32.totalorder %s31, 0
      %p194 = por %p192, %p193
      %p195 = scmp.ne.s32.totalorder %s183, %s184
      %p196 = scmp.eq.s32.totalorder %s32, 1
      %p197 = por %p195, %p196
      %p199 = scmp.ne.s32.totalorder %s184, %s198
      %p200 = scmp.eq.s32.totalorder %s32, 0
      %p201 = por %p199, %p200
      %s202 = ssub.s32 %s26, %s33
      %p203 = scmp.eq.s32.totalorder %s202, 0
      %s205 = sadd.s32 %s204, 1
      %s206 = scalar_select %p203, %s204, %s205
      %p209 = pneg %p203
      %p210 = scmp.eq.s32.totalorder %s26, 1
      %p211 = por %p209, %p210
      %p212 = scmp.ne.s32.totalorder %s204, %s207
      %p213 = scmp.eq.s32.totalorder %s26, 0
      %p214 = por %p212, %p213
      %p215 = scmp.ne.s32.totalorder %s204, %s207
      %p216 = scmp.eq.s32.totalorder %s31, 1
      %p217 = por %p215, %p216
      %p218 = scmp.ne.s32.totalorder %s207, %s208
      %p219 = scmp.eq.s32.totalorder %s31, 0
      %p220 = por %p218, %p219
      %p221 = scmp.ne.s32.totalorder %s207, %s208
      %p222 = scmp.eq.s32.totalorder %s32, 1
      %p223 = por %p221, %p222
      %p225 = scmp.ne.s32.totalorder %s208, %s224
      %p226 = scmp.eq.s32.totalorder %s32, 0
      %p227 = por %p225, %p226
      %s228 = ssub.s32 %s26, %s33
      %p229 = scmp.eq.s32.totalorder %s228, 0
      %s231 = sadd.s32 %s230, 1
      %s232 = scalar_select %p229, %s230, %s231
      %p235 = pneg %p229
      %p236 = scmp.eq.s32.totalorder %s26, 1
      %p237 = por %p235, %p236
      %p238 = scmp.ne.s32.totalorder %s230, %s233
      %p239 = scmp.eq.s32.totalorder %s26, 0
      %p240 = por %p238, %p239
      %p241 = scmp.ne.s32.totalorder %s230, %s233
      %p242 = scmp.eq.s32.totalorder %s31, 1
      %p243 = por %p241, %p242
      %p244 = scmp.ne.s32.totalorder %s233, %s234
      %p245 = scmp.eq.s32.totalorder %s31, 0
      %p246 = por %p244, %p245
      %p247 = scmp.ne.s32.totalorder %s233, %s234
      %p248 = scmp.eq.s32.totalorder %s32, 1
      %p249 = por %p247, %p248
      %p251 = scmp.ne.s32.totalorder %s234, %s250
      %p252 = scmp.eq.s32.totalorder %s32, 0
      %p253 = por %p251, %p252
      %s254 = ssub.s32 %s26, %s33
      %p255 = scmp.eq.s32.totalorder %s254, 0
      %s257 = sadd.s32 %s256, 1
      %s258 = scalar_select %p255, %s256, %s257
      %p261 = pneg %p255
      %p262 = scmp.eq.s32.totalorder %s26, 1
      %p263 = por %p261, %p262
      %p264 = scmp.ne.s32.totalorder %s256, %s259
      %p265 = scmp.eq.s32.totalorder %s26, 0
      %p266 = por %p264, %p265
      %p267 = scmp.ne.s32.totalorder %s256, %s259
      %p268 = scmp.eq.s32.totalorder %s31, 1
      %p269 = por %p267, %p268
      %p270 = scmp.ne.s32.totalorder %s259, %s260
      %p271 = scmp.eq.s32.totalorder %s31, 0
      %p272 = por %p270, %p271
      %p273 = scmp.ne.s32.totalorder %s259, %s260
      %p274 = scmp.eq.s32.totalorder %s32, 1
      %p275 = por %p273, %p274
      %p277 = scmp.ne.s32.totalorder %s260, %s276
      %p278 = scmp.eq.s32.totalorder %s32, 0
      %p279 = por %p277, %p278
      %s280 = ssub.s32 %s26, %s33
      %p281 = scmp.eq.s32.totalorder %s280, 0
      %s283 = sadd.s32 %s282, 1
      %s284 = scalar_select %p281, %s282, %s283
      %p287 = pneg %p281
      %p288 = scmp.eq.s32.totalorder %s26, 1
      %p289 = por %p287, %p288
      %p290 = scmp.ne.s32.totalorder %s282, %s285
      %p291 = scmp.eq.s32.totalorder %s26, 0
      %p292 = por %p290, %p291
      %p293 = scmp.ne.s32.totalorder %s282, %s285
      %p294 = scmp.eq.s32.totalorder %s31, 1
      %p295 = por %p293, %p294
      %p296 = scmp.ne.s32.totalorder %s285, %s286
      %p297 = scmp.eq.s32.totalorder %s31, 0
      %p298 = por %p296, %p297
      %p299 = scmp.ne.s32.totalorder %s285, %s286
      %p300 = scmp.eq.s32.totalorder %s32, 1
      %p301 = por %p299, %p300
      %p303 = scmp.ne.s32.totalorder %s286, %s302
      %p304 = scmp.eq.s32.totalorder %s32, 0
      %p305 = por %p303, %p304
      %s306 = ssub.s32 %s26, %s33
      %p307 = scmp.eq.s32.totalorder %s306, 0
      %s309 = sadd.s32 %s308, 1
      %s310 = scalar_select %p307, %s308, %s309
      %p313 = pneg %p307
      %p314 = scmp.eq.s32.totalorder %s26, 1
      %p315 = por %p313, %p314
      %p316 = scmp.ne.s32.totalorder %s308, %s311
      %p317 = scmp.eq.s32.totalorder %s26, 0
      %p318 = por %p316, %p317
      %p319 = scmp.ne.s32.totalorder %s308, %s311
      %p320 = scmp.eq.s32.totalorder %s31, 1
      %p321 = por %p319, %p320
      %p322 = scmp.ne.s32.totalorder %s311, %s312
      %p323 = scmp.eq.s32.totalorder %s31, 0
      %p324 = por %p322, %p323
      %p325 = scmp.ne.s32.totalorder %s311, %s312
      %p326 = scmp.eq.s32.totalorder %s32, 1
      %p327 = por %p325, %p326
      %p329 = scmp.ne.s32.totalorder %s312, %s328
      %p330 = scmp.eq.s32.totalorder %s32, 0
      %p331 = por %p329, %p330
      %s332 = ssub.s32 %s26, %s33
      %p333 = scmp.eq.s32.totalorder %s332, 0
      %s335 = sadd.s32 %s334, 1
      %s336 = scalar_select %p333, %s334, %s335
      %p339 = pneg %p333
      %p340 = scmp.eq.s32.totalorder %s26, 1
      %p341 = por %p339, %p340
      %p342 = scmp.ne.s32.totalorder %s334, %s337
      %p343 = scmp.eq.s32.totalorder %s26, 0
      %p344 = por %p342, %p343
      %p345 = scmp.ne.s32.totalorder %s334, %s337
      %p346 = scmp.eq.s32.totalorder %s31, 1
      %p347 = por %p345, %p346
      %p348 = scmp.ne.s32.totalorder %s337, %s338
      %p349 = scmp.eq.s32.totalorder %s31, 0
      %p350 = por %p348, %p349
      %p351 = scmp.ne.s32.totalorder %s337, %s338
      %p352 = scmp.eq.s32.totalorder %s32, 1
      %p353 = por %p351, %p352
      %p355 = scmp.ne.s32.totalorder %s338, %s354
      %p356 = scmp.eq.s32.totalorder %s32, 0
      %p357 = por %p355, %p356
      %s358 = ssub.s32 %s26, %s33
      %p359 = scmp.eq.s32.totalorder %s358, 0
      %s361 = sadd.s32 %s360, 1
      %s362 = scalar_select %p359, %s360, %s361
      %p365 = pneg %p359
      %p366 = scmp.eq.s32.totalorder %s26, 1
      %p367 = por %p365, %p366
      %p368 = scmp.ne.s32.totalorder %s360, %s363
      %p369 = scmp.eq.s32.totalorder %s26, 0
      %p370 = por %p368, %p369
      %p371 = scmp.ne.s32.totalorder %s360, %s363
      %p372 = scmp.eq.s32.totalorder %s31, 1
      %p373 = por %p371, %p372
      %p374 = scmp.ne.s32.totalorder %s363, %s364
      %p375 = scmp.eq.s32.totalorder %s31, 0
      %p376 = por %p374, %p375
      %p377 = scmp.ne.s32.totalorder %s363, %s364
      %p378 = scmp.eq.s32.totalorder %s32, 1
      %p379 = por %p377, %p378
      %p381 = scmp.ne.s32.totalorder %s364, %s380
      %p382 = scmp.eq.s32.totalorder %s32, 0
      %p383 = por %p381, %p382
      %s384 = ssub.s32 %s26, %s33
      %p385 = scmp.eq.s32.totalorder %s384, 0
      %s387 = sadd.s32 %s386, 1
      %s388 = scalar_select %p385, %s386, %s387
      %p391 = pneg %p385
      %p392 = scmp.eq.s32.totalorder %s26, 1
      %p393 = por %p391, %p392
      %p394 = scmp.ne.s32.totalorder %s386, %s389
      %p395 = scmp.eq.s32.totalorder %s26, 0
      %p396 = por %p394, %p395
      %p397 = scmp.ne.s32.totalorder %s386, %s389
      %p398 = scmp.eq.s32.totalorder %s31, 1
      %p399 = por %p397, %p398
      %p400 = scmp.ne.s32.totalorder %s389, %s390
      %p401 = scmp.eq.s32.totalorder %s31, 0
      %p402 = por %p400, %p401
      %p403 = scmp.ne.s32.totalorder %s389, %s390
      %p404 = scmp.eq.s32.totalorder %s32, 1
      %p405 = por %p403, %p404
      %p407 = scmp.ne.s32.totalorder %s390, %s406
      %p408 = scmp.eq.s32.totalorder %s32, 0
      %p409 = por %p407, %p408
      %s410 = ssub.s32 %s26, %s33
      %p411 = scmp.eq.s32.totalorder %s410, 0
      %s413 = sadd.s32 %s412, 1
      %s414 = scalar_select %p411, %s412, %s413
      %p417 = pneg %p411
      %p418 = scmp.eq.s32.totalorder %s26, 1
      %p419 = por %p417, %p418
      %p420 = scmp.ne.s32.totalorder %s412, %s415
      %p421 = scmp.eq.s32.totalorder %s26, 0
      %p422 = por %p420, %p421
      %p423 = scmp.ne.s32.totalorder %s412, %s415
      %p424 = scmp.eq.s32.totalorder %s31, 1
      %p425 = por %p423, %p424
      %p426 = scmp.ne.s32.totalorder %s415, %s416
      %p427 = scmp.eq.s32.totalorder %s31, 0
      %p428 = por %p426, %p427
      %p429 = scmp.ne.s32.totalorder %s415, %s416
      %p430 = scmp.eq.s32.totalorder %s32, 1
      %p431 = por %p429, %p430
      %p433 = scmp.ne.s32.totalorder %s416, %s432
      %p434 = scmp.eq.s32.totalorder %s32, 0
      %p435 = por %p433, %p434
      %s437 = sadd.s32 %s436, 1
      %p440 = scmp.eq.s32.totalorder %s26, 1
      %p441 = scmp.ne.s32.totalorder %s436, %s438
      %p442 = scmp.eq.s32.totalorder %s26, 0
      %p443 = por %p441, %p442
      %p444 = scmp.ne.s32.totalorder %s436, %s438
      %p445 = scmp.eq.s32.totalorder %s31, 1
      %p446 = por %p444, %p445
      %p447 = scmp.ne.s32.totalorder %s438, %s439
      %p448 = scmp.eq.s32.totalorder %s31, 0
      %p449 = por %p447, %p448
      %p450 = scmp.ne.s32.totalorder %s438, %s439
      %p451 = scmp.eq.s32.totalorder %s32, 1
      %p452 = por %p450, %p451
      %p454 = scmp.ne.s32.totalorder %s439, %s453
      %p455 = scmp.eq.s32.totalorder %s32, 0
      %p456 = por %p454, %p455
      %p457 = scmp.le.s32.totalorder 1, %s26
      %p458 = scmp.lt.s32.totalorder %s26, 3
      %p459 = pnand %p457, %p458
      %p460 = pneg %p459
      // Predicated region
      $region9: #{tpu_custom_call.1} parent=5 // pred_check
        _
      $region10: #{tpu_custom_call.1} parent=5 // pred_check_branch
        %462 = sbr.rel (%p459) target = $region12
      $region11: #{tpu_custom_call.1} parent=5 // pred_region
        %s463 = ssub.s32 %s26, 1
        // Predicated region
        $region13: #{tpu_custom_call.1} parent=11 // pred_check
          %p464 = pneg %p47
        $region14: #{tpu_custom_call.1} parent=11 // pred_check_branch
          %466 = sbr.rel (%p464) target = $region16
        $region15: #{tpu_custom_call.1} parent=11 // pred_region
          _
        $region16: #{tpu_custom_call.1} parent=11 // pred_fallthru
          _
        // Predicated region
        $region17: #{tpu_custom_call.1} parent=11 // pred_check
          %p467 = pneg %p68
        $region18: #{tpu_custom_call.1} parent=11 // pred_check_branch
          %469 = sbr.rel (%p467) target = $region20
        $region19: #{tpu_custom_call.1} parent=11 // pred_region
          _
        $region20: #{tpu_custom_call.1} parent=11 // pred_fallthru
          _
        // Predicated region
        $region21: #{tpu_custom_call.1} parent=11 // pred_check
          %p470 = pneg %p89
        $region22: #{tpu_custom_call.1} parent=11 // pred_check_branch
          %472 = sbr.rel (%p470) target = $region24
        $region23: #{tpu_custom_call.1} parent=11 // pred_region
          %474 = vsyncadd [#allocation5], 0
          %s475 = sshll.u32 %s2, 4
          %s476 = int_to_ptr.hbm [resolvable:$true] %s475
          %s477 = sshll.u32 [#allocation4], 4
          %s478 = int_to_ptr.vmem [resolvable:$true] %s477
          %483 = dma.hbm_to_vmem [thread:$0]  %s476, 1536, %s478, [#allocation5], 64, 64, 4
        $region24: #{tpu_custom_call.1} parent=11 // pred_fallthru
          _
        // Predicated region
        $region25: #{tpu_custom_call.1} parent=11 // pred_check
          %p484 = pneg %p110
        $region26: #{tpu_custom_call.1} parent=11 // pred_check_branch
          %486 = sbr.rel (%p484) target = $region28
        $region27: #{tpu_custom_call.1} parent=11 // pred_region
          _
        $region28: #{tpu_custom_call.1} parent=11 // pred_fallthru
          _
        // Predicated region
        $region29: #{tpu_custom_call.1} parent=11 // pred_check
          %p487 = pneg %p131
        $region30: #{tpu_custom_call.1} parent=11 // pred_check_branch
          %489 = sbr.rel (%p487) target = $region32
        $region31: #{tpu_custom_call.1} parent=11 // pred_region
          _
        $region32: #{tpu_custom_call.1} parent=11 // pred_fallthru
          _
        // Predicated region
        $region33: #{tpu_custom_call.1} parent=11 // pred_check
          %p490 = pneg %p152
        $region34: #{tpu_custom_call.1} parent=11 // pred_check_branch
          %492 = sbr.rel (%p490) target = $region36
        $region35: #{tpu_custom_call.1} parent=11 // pred_region
          _
        $region36: #{tpu_custom_call.1} parent=11 // pred_fallthru
          _
        // Predicated region
        $region37: #{tpu_custom_call.1} parent=11 // pred_check
          %p493 = pneg %p173
        $region38: #{tpu_custom_call.1} parent=11 // pred_check_branch
          %495 = sbr.rel (%p493) target = $region40
        $region39: #{tpu_custom_call.1} parent=11 // pred_region
          %497 = vsyncadd [#allocation8], 0
          %s498 = sshll.u32 %s6, 4
          %s499 = int_to_ptr.hbm [resolvable:$true] %s498
          %s500 = sshll.u32 [#allocation7], 4
          %s501 = int_to_ptr.vmem [resolvable:$true] %s500
          %506 = dma.hbm_to_vmem [thread:$0]  %s499, 1024, %s501, [#allocation8], 64, 64, 4
        $region40: #{tpu_custom_call.1} parent=11 // pred_fallthru
          _
        // Predicated region
        $region41: #{tpu_custom_call.1} parent=11 // pred_check
          %p507 = pneg %p194
        $region42: #{tpu_custom_call.1} parent=11 // pred_check_branch
          %509 = sbr.rel (%p507) target = $region44
        $region43: #{tpu_custom_call.1} parent=11 // pred_region
          _
        $region44: #{tpu_custom_call.1} parent=11 // pred_fallthru
          _
      $region12: #{tpu_custom_call.1} parent=5 // pred_fallthru
        _
      %p510 = scmp.lt.s32.totalorder %s26, 2
      // Predicated region
      $region45: #{tpu_custom_call.1} parent=5 // pred_check
        %p511 = pneg %p510
      $region46: #{tpu_custom_call.1} parent=5 // pred_check_branch
        %513 = sbr.rel (%p511) target = $region48
      $region47: #{tpu_custom_call.1} parent=5 // pred_region
        // Predicated region
        $region49: #{tpu_custom_call.1} parent=47 // pred_check
          %p514 = pneg %p214
        $region50: #{tpu_custom_call.1} parent=47 // pred_check_branch
          %516 = sbr.rel (%p514) target = $region52
        $region51: #{tpu_custom_call.1} parent=47 // pred_region
          %p517 = scmp.lt.s32.totalorder %s26, 1
          %s518 = scalar_select %p517, %s26, 1
          %s519 = smul.addr %s518, 8
          %s520 = scalar_lea.vmem %s8, %s519
        $region52: #{tpu_custom_call.1} parent=47 // pred_fallthru
          _
        // Predicated region
        $region53: #{tpu_custom_call.1} parent=47 // pred_check
          %p521 = pneg %p240
        $region54: #{tpu_custom_call.1} parent=47 // pred_check_branch
          %523 = sbr.rel (%p521) target = $region56
        $region55: #{tpu_custom_call.1} parent=47 // pred_region
          %p524 = scmp.lt.s32.totalorder %s26, 1
          %s525 = scalar_select %p524, %s26, 1
          %s526 = scalar_lea.vmem %s9, %s525
        $region56: #{tpu_custom_call.1} parent=47 // pred_fallthru
          _
        // Predicated region
        $region57: #{tpu_custom_call.1} parent=47 // pred_check
          %p527 = pneg %p266
        $region58: #{tpu_custom_call.1} parent=47 // pred_check_branch
          %529 = sbr.rel (%p527) target = $region60
        $region59: #{tpu_custom_call.1} parent=47 // pred_region
          %s530 = sand.u32 %s26, 1
          %s531 = scalar_lea.sflag [#allocation5], %s530
          %s532 = sand.u32 %s256, 1
          %s533 = smul.addr %s532, 128
          %s534 = scalar_lea.vmem [#allocation9], %s533
          %536 = vsyncadd %s531, 0
          %s537 = smul.addr %s26, 32
          %s538 = smul.addr %s537, 4
          %s539 = scalar_lea.hbm %s10, %s538
          %s540 = sshll.u32 %s539, 4
          %s541 = int_to_ptr.hbm [resolvable:$true] %s540
          %s542 = sshll.u32 %s534, 4
          %s543 = int_to_ptr.vmem [resolvable:$true] %s542
          %548 = dma.hbm_to_vmem [thread:$0]  %s541, 2048, %s543, %s531, 128, 128, 8
        $region60: #{tpu_custom_call.1} parent=47 // pred_fallthru
          _
        // Predicated region
        $region61: #{tpu_custom_call.1} parent=47 // pred_check
          %p549 = pneg %p292
        $region62: #{tpu_custom_call.1} parent=47 // pred_check_branch
          %551 = sbr.rel (%p549) target = $region64
        $region63: #{tpu_custom_call.1} parent=47 // pred_region
          %p552 = scmp.lt.s32.totalorder %s26, 1
          %s553 = scalar_select %p552, %s26, 1
          %s554 = smul.addr %s553, 2
          %s555 = scalar_lea.vmem %s11, %s554
        $region64: #{tpu_custom_call.1} parent=47 // pred_fallthru
          _
        // Predicated region
        $region65: #{tpu_custom_call.1} parent=47 // pred_check
          %p556 = pneg %p318
        $region66: #{tpu_custom_call.1} parent=47 // pred_check_branch
          %558 = sbr.rel (%p556) target = $region68
        $region67: #{tpu_custom_call.1} parent=47 // pred_region
          %s559 = sand.u32 %s26, 1
          %s560 = scalar_lea.sflag [#allocation5], %s559
          %s561 = sand.u32 %s308, 1
          %s562 = smul.addr %s561, 128
          %s563 = scalar_lea.vmem [#allocation10], %s562
          %565 = vsyncadd %s560, 0
          %s566 = smul.addr %s26, 32
          %s567 = smul.addr %s566, 4
          %s568 = scalar_lea.hbm %s12, %s567
          %s569 = sshll.u32 %s568, 4
          %s570 = int_to_ptr.hbm [resolvable:$true] %s569
          %s571 = sshll.u32 %s563, 4
          %s572 = int_to_ptr.vmem [resolvable:$true] %s571
          %577 = dma.hbm_to_vmem [thread:$0]  %s570, 2048, %s572, %s560, 128, 128, 8
        $region68: #{tpu_custom_call.1} parent=47 // pred_fallthru
          _
        // Predicated region
        $region69: #{tpu_custom_call.1} parent=47 // pred_check
          %p578 = pneg %p344
        $region70: #{tpu_custom_call.1} parent=47 // pred_check_branch
          %580 = sbr.rel (%p578) target = $region72
        $region71: #{tpu_custom_call.1} parent=47 // pred_region
          %p581 = scmp.lt.s32.totalorder %s26, 1
          %s582 = scalar_select %p581, %s26, 1
          %s583 = smul.addr %s582, 2
          %s584 = scalar_lea.vmem %s13, %s583
        $region72: #{tpu_custom_call.1} parent=47 // pred_fallthru
          _
        // Predicated region
        $region73: #{tpu_custom_call.1} parent=47 // pred_check
          %p585 = pneg %p370
        $region74: #{tpu_custom_call.1} parent=47 // pred_check_branch
          %587 = sbr.rel (%p585) target = $region76
        $region75: #{tpu_custom_call.1} parent=47 // pred_region
          %s588 = sand.u32 %s26, 1
          %s589 = scalar_lea.sflag [#allocation5], %s588
          %s590 = sand.u32 %s360, 1
          %s591 = smul.addr %s590, 128
          %s592 = scalar_lea.vmem [#allocation11], %s591
          %594 = vsyncadd %s589, 0
          %s595 = smul.addr %s26, 32
          %s596 = smul.addr %s595, 4
          %s597 = scalar_lea.hbm %s14, %s596
          %s598 = sshll.u32 %s597, 4
          %s599 = int_to_ptr.hbm [resolvable:$true] %s598
          %s600 = sshll.u32 %s592, 4
          %s601 = int_to_ptr.vmem [resolvable:$true] %s600
          %606 = dma.hbm_to_vmem [thread:$0]  %s599, 2048, %s601, %s589, 64, 64, 4
        $region76: #{tpu_custom_call.1} parent=47 // pred_fallthru
          _
        // Predicated region
        $region77: #{tpu_custom_call.1} parent=47 // pred_check
          %p607 = pneg %p396
        $region78: #{tpu_custom_call.1} parent=47 // pred_check_branch
          %609 = sbr.rel (%p607) target = $region80
        $region79: #{tpu_custom_call.1} parent=47 // pred_region
          %p610 = scmp.lt.s32.totalorder %s26, 1
          %s611 = scalar_select %p610, %s26, 1
          %s612 = scalar_lea.vmem %s15, %s611
        $region80: #{tpu_custom_call.1} parent=47 // pred_fallthru
          _
        // Predicated region
        $region81: #{tpu_custom_call.1} parent=47 // pred_check
          %p613 = pneg %p422
        $region82: #{tpu_custom_call.1} parent=47 // pred_check_branch
          %615 = sbr.rel (%p613) target = $region84
        $region83: #{tpu_custom_call.1} parent=47 // pred_region
          %p616 = scmp.lt.s32.totalorder %s26, 1
          %s617 = scalar_select %p616, %s26, 1
          %s618 = scalar_lea.vmem %s16, %s617
        $region84: #{tpu_custom_call.1} parent=47 // pred_fallthru
          _
      $region48: #{tpu_custom_call.1} parent=5 // pred_fallthru
        _
      %p619 = scmp.le.s32.totalorder 1, %s26
      %p620 = scmp.lt.s32.totalorder %s26, 3
      %p621 = pnand %p619, %p620
      %p622 = pneg %p621
      // Predicated region
      $region85: #{tpu_custom_call.1} parent=5 // pred_check
        _
      $region86: #{tpu_custom_call.1} parent=5 // pred_check_branch
        %624 = sbr.rel (%p621) target = $region88
      $region87: #{tpu_custom_call.1} parent=5 // pred_region
        %s625 = ssub.s32 %s26, 1
        // Predicated region
        $region89: #{tpu_custom_call.1} parent=87 // pred_check
          %p626 = pneg %p89
        $region90: #{tpu_custom_call.1} parent=87 // pred_check_branch
          %628 = sbr.rel (%p626) target = $region92
        $region91: #{tpu_custom_call.1} parent=87 // pred_region
          %630 = dma.done [#allocation5], 1536
        $region92: #{tpu_custom_call.1} parent=87 // pred_fallthru
          _
        // Predicated region
        $region93: #{tpu_custom_call.1} parent=87 // pred_check
          %p631 = pneg %p173
        $region94: #{tpu_custom_call.1} parent=87 // pred_check_branch
          %633 = sbr.rel (%p631) target = $region96
        $region95: #{tpu_custom_call.1} parent=87 // pred_region
          %635 = dma.done [#allocation8], 1024
        $region96: #{tpu_custom_call.1} parent=87 // pred_fallthru
          _
        %s636 = sand.u32 %s31, 1
        %s637 = scalar_lea.sflag [#allocation5], %s636
        %s638 = sand.u32 %s259, 1
        %s639 = smul.addr %s638, 128
        %s640 = scalar_lea.vmem [#allocation9], %s639
        // Predicated region
        $region97: #{tpu_custom_call.1} parent=87 // pred_check
          %p641 = pneg %p272
        $region98: #{tpu_custom_call.1} parent=87 // pred_check_branch
          %643 = sbr.rel (%p641) target = $region100
        $region99: #{tpu_custom_call.1} parent=87 // pred_region
          %645 = dma.done %s637, 2048
        $region100: #{tpu_custom_call.1} parent=87 // pred_fallthru
          _
        %s646 = sand.u32 %s31, 1
        %s647 = scalar_lea.sflag [#allocation5], %s646
        %s648 = sand.u32 %s311, 1
        %s649 = smul.addr %s648, 128
        %s650 = scalar_lea.vmem [#allocation10], %s649
        // Predicated region
        $region101: #{tpu_custom_call.1} parent=87 // pred_check
          %p651 = pneg %p324
        $region102: #{tpu_custom_call.1} parent=87 // pred_check_branch
          %653 = sbr.rel (%p651) target = $region104
        $region103: #{tpu_custom_call.1} parent=87 // pred_region
          %655 = dma.done %s647, 2048
        $region104: #{tpu_custom_call.1} parent=87 // pred_fallthru
          _
        %s656 = sand.u32 %s31, 1
        %s657 = scalar_lea.sflag [#allocation5], %s656
        %s658 = sand.u32 %s363, 1
        %s659 = smul.addr %s658, 128
        %s660 = scalar_lea.vmem [#allocation11], %s659
        // Predicated region
        $region105: #{tpu_custom_call.1} parent=87 // pred_check
          %p661 = pneg %p376
        $region106: #{tpu_custom_call.1} parent=87 // pred_check_branch
          %663 = sbr.rel (%p661) target = $region108
        $region107: #{tpu_custom_call.1} parent=87 // pred_region
          %665 = dma.done %s657, 2048
        $region108: #{tpu_custom_call.1} parent=87 // pred_fallthru
          _
        %p666 = pneg %p47
        %p667 = pneg %p44
        %p668 = pneg %p68
        %p669 = pneg %p65
        %p670 = pneg %p89
        %p671 = pneg %p86
        %p672 = pneg %p110
        %p673 = pneg %p107
        %p674 = pneg %p131
        %p675 = pneg %p128
        %p676 = pneg %p152
        %p677 = pneg %p149
        %p678 = pneg %p173
        %p679 = pneg %p170
        %p680 = pneg %p194
        %p681 = pneg %p191
        %p682 = scmp.lt.s32.totalorder %s31, 1
        %s683 = scalar_select %p682, %s31, 1
        %s684 = smul.addr %s683, 8
        %s685 = scalar_lea.vmem %s8, %s684
        %p686 = pneg %p220
        %p687 = pneg %p217
        %p688 = scmp.lt.s32.totalorder %s31, 1
        %s689 = scalar_select %p688, %s31, 1
        %s690 = scalar_lea.vmem %s9, %s689
        %p691 = pneg %p246
        %p692 = pneg %p243
        %s693 = sand.u32 %s31, 1
        %s694 = scalar_lea.sflag [#allocation5], %s693
        %s695 = sand.u32 %s259, 1
        %s696 = smul.addr %s695, 128
        %s697 = scalar_lea.vmem [#allocation9], %s696
        %p698 = pneg %p272
        %p699 = pneg %p269
        %p700 = scmp.lt.s32.totalorder %s31, 1
        %s701 = scalar_select %p700, %s31, 1
        %s702 = smul.addr %s701, 2
        %s703 = scalar_lea.vmem %s11, %s702
        %p704 = pneg %p298
        %p705 = pneg %p295
        %s706 = sand.u32 %s31, 1
        %s707 = scalar_lea.sflag [#allocation5], %s706
        %s708 = sand.u32 %s311, 1
        %s709 = smul.addr %s708, 128
        %s710 = scalar_lea.vmem [#allocation10], %s709
        %p711 = pneg %p324
        %p712 = pneg %p321
        %p713 = scmp.lt.s32.totalorder %s31, 1
        %s714 = scalar_select %p713, %s31, 1
        %s715 = smul.addr %s714, 2
        %s716 = scalar_lea.vmem %s13, %s715
        %p717 = pneg %p350
        %p718 = pneg %p347
        %s719 = sand.u32 %s31, 1
        %s720 = scalar_lea.sflag [#allocation5], %s719
        %s721 = sand.u32 %s363, 1
        %s722 = smul.addr %s721, 128
        %s723 = scalar_lea.vmem [#allocation11], %s722
        %p724 = pneg %p376
        %p725 = pneg %p373
        %p726 = scmp.lt.s32.totalorder %s31, 1
        %s727 = scalar_select %p726, %s31, 1
        %s728 = scalar_lea.vmem %s15, %s727
        %p729 = pneg %p402
        %p730 = pneg %p399
        %p731 = scmp.lt.s32.totalorder %s31, 1
        %s732 = scalar_select %p731, %s31, 1
        %s733 = scalar_lea.vmem %s16, %s732
        %p734 = pneg %p428
        %p735 = pneg %p425
        %p736 = pneg %p449
        %p737 = pneg %p446
        %p738 = scmp.lt.s32.totalorder %s31, 1
        %s739 = scalar_select %p738, %s31, 1
        %s740 = smul.addr %s739, 8
        %s741 = scalar_lea.vmem %s8, %s740
        %p742 = scmp.lt.s32.totalorder %s31, 1
        %s743 = scalar_select %p742, %s31, 1
        %s744 = scalar_lea.vmem %s9, %s743
        %p745 = scmp.lt.s32.totalorder %s31, 1
        %s746 = scalar_select %p745, %s31, 1
        %s747 = smul.addr %s746, 2
        %s748 = scalar_lea.vmem %s11, %s747
        %p749 = scmp.lt.s32.totalorder %s31, 1
        %s750 = scalar_select %p749, %s31, 1
        %s751 = smul.addr %s750, 2
        %s752 = scalar_lea.vmem %s13, %s751
        %p753 = scmp.lt.s32.totalorder %s31, 1
        %s754 = scalar_select %p753, %s31, 1
        %s755 = scalar_lea.vmem %s15, %s754
        %p756 = scmp.lt.s32.totalorder %s31, 1
        %s757 = scalar_select %p756, %s31, 1
        %s758 = scalar_lea.vmem %s16, %s757
        %p760 = scmp.eq.s32.totalorder %s31, 0
        // Predicated region
        $region109: #{tpu_custom_call.1} parent=87 // pred_check
          %p761 = pneg %p760
        $region110: #{tpu_custom_call.1} parent=87 // pred_check_branch
          %763 = sbr.rel (%p761) target = $region112
        $region111: #{tpu_custom_call.1} parent=87 // pred_region
          %764 = vst [vmem:[#allocation2] sm:$0xff] 0.0
          %765 = vst [vmem:[#allocation2 + $0x8] sm:$0xff] 0.0
          %766 = vst [vmem:[#allocation2 + $0x10] sm:$0xff] 0.0
          %767 = vst [vmem:[#allocation2 + $0x18] sm:$0xff] 0.0
          %768 = vst [vmem:[#allocation2 + $0x20] sm:$0xff] 0.0
          %769 = vst [vmem:[#allocation2 + $0x28] sm:$0xff] 0.0
          %770 = vst [vmem:[#allocation2 + $0x30] sm:$0xff] 0.0
          %771 = vst [vmem:[#allocation2 + $0x38] sm:$0xff] 0.0
          %772 = vst [vmem:[#allocation2 + $0x40] sm:$0xff] 0.0
          %773 = vst [vmem:[#allocation2 + $0x48] sm:$0xff] 0.0
          %774 = vst [vmem:[#allocation2 + $0x50] sm:$0xff] 0.0
          %775 = vst [vmem:[#allocation2 + $0x58] sm:$0xff] 0.0
          %776 = vst [vmem:[#allocation2 + $0x60] sm:$0xff] 0.0
          %777 = vst [vmem:[#allocation2 + $0x68] sm:$0xff] 0.0
          %778 = vst [vmem:[#allocation2 + $0x70] sm:$0xff] 0.0
          %779 = vst [vmem:[#allocation2 + $0x78] sm:$0xff] 0.0
          %780 = vst [vmem:[#allocation2 + $0x80] sm:$0xff] 0.0
          %781 = vst [vmem:[#allocation2 + $0x88] sm:$0xff] 0.0
          %782 = vst [vmem:[#allocation2 + $0x90] sm:$0xff] 0.0
          %783 = vst [vmem:[#allocation2 + $0x98] sm:$0xff] 0.0
          %v784 = vld [vmem:[%s0] sm:$0xff]
          %v785 = vld [vmem:[%s0 + $0x8] sm:$0xff]
          %v786 = vld [vmem:[%s0 + $0x10] sm:$0xff]
          %v787 = vld [vmem:[%s0 + $0x18] sm:$0xff]
          %v788 = vld [vmem:[%s0 + $0x20] sm:$0xff]
          %v789 = vld [vmem:[%s0 + $0x28] sm:$0xff]
          %v790 = vld [vmem:[%s0 + $0x30] sm:$0xff]
          %v791 = vld [vmem:[%s0 + $0x38] sm:$0xff]
          %v792 = vld [vmem:[%s0 + $0x40] sm:$0xff]
          %v793 = vld [vmem:[%s0 + $0x48] sm:$0xff]
          %v794 = vld [vmem:[%s0 + $0x50] sm:$0xff]
          %v795 = vld [vmem:[%s0 + $0x58] sm:$0xff]
          %v796 = vld [vmem:[%s0 + $0x60] sm:$0xff]
          %v797 = vld [vmem:[%s0 + $0x68] sm:$0xff]
          %v798 = vld [vmem:[%s0 + $0x70] sm:$0xff]
          %v799 = vld [vmem:[%s0 + $0x78] sm:$0xff]
          %v800 = vld [vmem:[#allocation4] sm:$0xf]
          %v801 = vld [vmem:[#allocation4 + $0x4] sm:$0xf]
          %v802 = vld [vmem:[#allocation4 + $0x8] sm:$0xf]
          %v803 = vld [vmem:[#allocation4 + $0xc] sm:$0xf]
          %v804 = vld [vmem:[#allocation4 + $0x10] sm:$0xf]
          %v805 = vld [vmem:[#allocation4 + $0x14] sm:$0xf]
          %v806 = vld [vmem:[#allocation4 + $0x18] sm:$0xf]
          %v807 = vld [vmem:[#allocation4 + $0x1c] sm:$0xf]
          %v808 = vld [vmem:[#allocation4 + $0x20] sm:$0xf]
          %v809 = vld [vmem:[#allocation4 + $0x24] sm:$0xf]
          %v810 = vld [vmem:[#allocation4 + $0x28] sm:$0xf]
          %v811 = vld [vmem:[#allocation4 + $0x2c] sm:$0xf]
          %v812 = vld [vmem:[#allocation4 + $0x30] sm:$0xf]
          %v813 = vld [vmem:[#allocation4 + $0x34] sm:$0xf]
          %v814 = vld [vmem:[#allocation4 + $0x38] sm:$0xf]
          %v815 = vld [vmem:[#allocation4 + $0x3c] sm:$0xf]
          %v816 = vld [vmem:[#allocation4 + $0x40] sm:$0xf]
          %v817 = vld [vmem:[#allocation4 + $0x44] sm:$0xf]
          %v818 = vld [vmem:[#allocation4 + $0x48] sm:$0xf]
          %v819 = vld [vmem:[#allocation4 + $0x4c] sm:$0xf]
          %v820 = vld [vmem:[#allocation4 + $0x50] sm:$0xf]
          %v821 = vld [vmem:[#allocation4 + $0x54] sm:$0xf]
          %v822 = vld [vmem:[#allocation4 + $0x58] sm:$0xf]
          %v823 = vld [vmem:[#allocation4 + $0x5c] sm:$0xf]
          %v824 = vld [vmem:[%s3] sm:$0x1]
          %v826 = vperm.slane %v824, 0
          %v844 = vunpack.c.l.b16 %v784
          %v845 = vunpack.c.h.b16 %v784
          %v846 = vunpack.c.l.b16 %v785
          %v847 = vunpack.c.h.b16 %v785
          %v848 = vunpack.c.l.b16 %v786
          %v849 = vunpack.c.h.b16 %v786
          %v850 = vunpack.c.l.b16 %v787
          %v851 = vunpack.c.h.b16 %v787
          %v852 = vunpack.c.l.b16 %v788
          %v853 = vunpack.c.h.b16 %v788
          %v854 = vunpack.c.l.b16 %v789
          %v855 = vunpack.c.h.b16 %v789
          %v856 = vunpack.c.l.b16 %v790
          %v857 = vunpack.c.h.b16 %v790
          %v858 = vunpack.c.l.b16 %v791
          %v859 = vunpack.c.h.b16 %v791
          %v860 = vunpack.c.l.b16 %v792
          %v861 = vunpack.c.h.b16 %v792
          %v862 = vunpack.c.l.b16 %v793
          %v863 = vunpack.c.h.b16 %v793
          %v864 = vunpack.c.l.b16 %v794
          %v865 = vunpack.c.h.b16 %v794
          %v866 = vunpack.c.l.b16 %v795
          %v867 = vunpack.c.h.b16 %v795
          %v868 = vunpack.c.l.b16 %v796
          %v869 = vunpack.c.h.b16 %v796
          %v870 = vunpack.c.l.b16 %v797
          %v871 = vunpack.c.h.b16 %v797
          %v872 = vunpack.c.l.b16 %v798
          %v873 = vunpack.c.h.b16 %v798
          %v874 = vunpack.c.l.b16 %v799
          %v875 = vunpack.c.h.b16 %v799
          %v876 = vpack.c.b16 %v846, %v844
          %v877 = vpack.c.b16 %v847, %v845
          %v878 = vpack.c.b16 %v850, %v848
          %v879 = vpack.c.b16 %v851, %v849
          %v880 = vpack.c.b16 %v854, %v852
          %v881 = vpack.c.b16 %v855, %v853
          %v882 = vpack.c.b16 %v858, %v856
          %v883 = vpack.c.b16 %v859, %v857
          %v884 = vpack.c.b16 %v862, %v860
          %v885 = vpack.c.b16 %v863, %v861
          %v886 = vpack.c.b16 %v866, %v864
          %v887 = vpack.c.b16 %v867, %v865
          %v888 = vpack.c.b16 %v870, %v868
          %v889 = vpack.c.b16 %v871, %v869
          %v890 = vpack.c.b16 %v874, %v872
          %v891 = vpack.c.b16 %v875, %v873
          %v924 = vunpack.c.l.b16 %v800
          %v925 = vunpack.c.l.b16 %v801
          %v926 = vunpack.c.l.b16 %v802
          %v927 = vunpack.c.l.b16 %v803
          %v928 = vunpack.c.l.b16 %v804
          %v929 = vunpack.c.l.b16 %v805
          %v930 = vunpack.c.l.b16 %v806
          %v931 = vunpack.c.l.b16 %v807
          %v932 = vunpack.c.l.b16 %v808
          %v933 = vunpack.c.l.b16 %v809
          %v934 = vunpack.c.l.b16 %v810
          %v935 = vunpack.c.l.b16 %v811
          %v936 = vunpack.c.l.b16 %v812
          %v937 = vunpack.c.l.b16 %v813
          %v938 = vunpack.c.l.b16 %v814
          %v939 = vunpack.c.l.b16 %v815
          %v940 = vunpack.c.l.b16 %v816
          %v941 = vunpack.c.l.b16 %v817
          %v942 = vunpack.c.l.b16 %v818
          %v943 = vunpack.c.l.b16 %v819
          %v944 = vunpack.c.l.b16 %v820
          %v945 = vunpack.c.l.b16 %v821
          %v946 = vunpack.c.l.b16 %v822
          %v947 = vunpack.c.l.b16 %v823
          %v948 = vpack.c.b16 %v925, %v924
          %v949 = vpack.c.b16 %v927, %v926
          %v950 = vpack.c.b16 %v929, %v928
          %v951 = vpack.c.b16 %v931, %v930
          %v952 = vpack.c.b16 %v933, %v932
          %v953 = vpack.c.b16 %v935, %v934
          %v954 = vpack.c.b16 %v937, %v936
          %v955 = vpack.c.b16 %v939, %v938
          %v956 = vpack.c.b16 %v941, %v940
          %v957 = vpack.c.b16 %v943, %v942
          %v958 = vpack.c.b16 %v945, %v944
          %v959 = vpack.c.b16 %v947, %v946
          %vm972 = vcmask 523264
          %v974 = vsel %vm972, %v877, 0
          %v977 = vsel %vm972, %v879, 0
          %v980 = vsel %vm972, %v881, 0
          %v983 = vsel %vm972, %v883, 0
          %v986 = vsel %vm972, %v885, 0
          %v989 = vsel %vm972, %v887, 0
          %v992 = vsel %vm972, %v889, 0
          %v995 = vsel %vm972, %v891, 0
          %997 = vmatpush.bf16.msra.mxu0 %v955
          %998 = vmatpush.bf16.msra.mxu0 %v954
          %999 = vmatpush.bf16.msra.mxu0 %v953
          %1000 = vmatpush.bf16.msra.mxu0 %v952
          %1001 = vmatpush.bf16.msra.mxu0 %v951
          %1002 = vmatpush.bf16.msra.mxu0 %v950
          %1003 = vmatpush.bf16.msra.mxu0 %v949
          %1004 = vmatpush.bf16.msra.mxu0 %v948
          %1005 = vmatmul.bf16.gmra.mxu0 %v876
          %v1006 = vpop.f32.mrf.mxu0
          %v1007 = vadd.f32 %v826, %v1006
          %v1008 = vpop.f32.mrf.mxu0
          %v1009 = vadd.f32 %v826, %v1008
          %1010 = vmatmul.bf16.gmra.mxu0 %v878
          %v1011 = vpop.f32.mrf.mxu0
          %v1012 = vadd.f32 %v826, %v1011
          %v1013 = vpop.f32.mrf.mxu0
          %v1014 = vadd.f32 %v826, %v1013
          %1015 = vmatmul.bf16.gmra.mxu0 %v880
          %v1016 = vpop.f32.mrf.mxu0
          %v1017 = vadd.f32 %v826, %v1016
          %v1018 = vpop.f32.mrf.mxu0
          %v1019 = vadd.f32 %v826, %v1018
          %1020 = vmatmul.bf16.gmra.mxu0 %v882
          %v1021 = vpop.f32.mrf.mxu0
          %v1022 = vadd.f32 %v826, %v1021
          %v1023 = vpop.f32.mrf.mxu0
          %v1024 = vadd.f32 %v826, %v1023
          %1025 = vmatmul.bf16.gmra.mxu0 %v884
          %v1026 = vpop.f32.mrf.mxu0
          %v1027 = vadd.f32 %v826, %v1026
          %v1028 = vpop.f32.mrf.mxu0
          %v1029 = vadd.f32 %v826, %v1028
          %1030 = vmatmul.bf16.gmra.mxu0 %v886
          %v1031 = vpop.f32.mrf.mxu0
          %v1032 = vadd.f32 %v826, %v1031
          %v1033 = vpop.f32.mrf.mxu0
          %v1034 = vadd.f32 %v826, %v1033
          %1035 = vmatmul.bf16.gmra.mxu0 %v888
          %v1036 = vpop.f32.mrf.mxu0
          %v1037 = vadd.f32 %v826, %v1036
          %v1038 = vpop.f32.mrf.mxu0
          %v1039 = vadd.f32 %v826, %v1038
          %1040 = vmatmul.bf16.gmra.mxu0 %v890
          %v1041 = vpop.f32.mrf.mxu0
          %v1042 = vadd.f32 %v826, %v1041
          %v1043 = vpop.f32.mrf.mxu0
          %v1044 = vadd.f32 %v826, %v1043
          %1045 = vdwg.mxu0
          %1046 = vmatpush.bf16.msra.mxu0 0
          %1047 = vmatpush.bf16.msra.mxu0 0
          %1048 = vmatpush.bf16.msra.mxu0 0
          %1049 = vmatpush.bf16.msra.mxu0 0
          %1050 = vmatpush.bf16.msra.mxu0 %v959
          %1051 = vmatpush.bf16.msra.mxu0 %v958
          %1052 = vmatpush.bf16.msra.mxu0 %v957
          %1053 = vmatpush.bf16.msra.mxu0 %v956
          %1054 = vmatmul.bf16.gmra.mxu0 %v974
          %v1055 = vpop.f32.mrf.mxu0
          %v1056 = vadd.f32 %v1007, %v1055
          %v1057 = vpop.f32.mrf.mxu0
          %v1058 = vadd.f32 %v1009, %v1057
          %1059 = vmatmul.bf16.gmra.mxu0 %v977
          %v1060 = vpop.f32.mrf.mxu0
          %v1061 = vadd.f32 %v1012, %v1060
          %v1062 = vpop.f32.mrf.mxu0
          %v1063 = vadd.f32 %v1014, %v1062
          %1064 = vmatmul.bf16.gmra.mxu0 %v980
          %v1065 = vpop.f32.mrf.mxu0
          %v1066 = vadd.f32 %v1017, %v1065
          %v1067 = vpop.f32.mrf.mxu0
          %v1068 = vadd.f32 %v1019, %v1067
          %1069 = vmatmul.bf16.gmra.mxu0 %v983
          %v1070 = vpop.f32.mrf.mxu0
          %v1071 = vadd.f32 %v1022, %v1070
          %v1072 = vpop.f32.mrf.mxu0
          %v1073 = vadd.f32 %v1024, %v1072
          %1074 = vmatmul.bf16.gmra.mxu0 %v986
          %v1075 = vpop.f32.mrf.mxu0
          %v1076 = vadd.f32 %v1027, %v1075
          %v1077 = vpop.f32.mrf.mxu0
          %v1078 = vadd.f32 %v1029, %v1077
          %1079 = vmatmul.bf16.gmra.mxu0 %v989
          %v1080 = vpop.f32.mrf.mxu0
          %v1081 = vadd.f32 %v1032, %v1080
          %v1082 = vpop.f32.mrf.mxu0
          %v1083 = vadd.f32 %v1034, %v1082
          %1084 = vmatmul.bf16.gmra.mxu0 %v992
          %v1085 = vpop.f32.mrf.mxu0
          %v1086 = vadd.f32 %v1037, %v1085
          %v1087 = vpop.f32.mrf.mxu0
          %v1088 = vadd.f32 %v1039, %v1087
          %1089 = vmatmul.bf16.gmra.mxu0 %v995
          %v1090 = vpop.f32.mrf.mxu0
          %v1091 = vadd.f32 %v1042, %v1090
          %v1092 = vpop.f32.mrf.mxu0
          %v1093 = vadd.f32 %v1044, %v1092
          %1094 = vdwg.mxu0
          %1095 = vst [vmem:[#allocation2 + $0x8] sm:$0xff] %v1056
          %1096 = vst [vmem:[#allocation2 + $0x10] sm:$0xff] %v1058
          %1097 = vst [vmem:[#allocation2 + $0x18] sm:$0xff] %v1061
          %1098 = vst [vmem:[#allocation2 + $0x20] sm:$0xff] %v1063
          %1099 = vst [vmem:[#allocation2 + $0x28] sm:$0xff] %v1066
          %1100 = vst [vmem:[#allocation2 + $0x30] sm:$0xff] %v1068
          %1101 = vst [vmem:[#allocation2 + $0x38] sm:$0xff] %v1071
          %1102 = vst [vmem:[#allocation2 + $0x40] sm:$0xff] %v1073
          %1103 = vst [vmem:[#allocation2 + $0x58] sm:$0xff] %v1076
          %1104 = vst [vmem:[#allocation2 + $0x60] sm:$0xff] %v1078
          %1105 = vst [vmem:[#allocation2 + $0x68] sm:$0xff] %v1081
          %1106 = vst [vmem:[#allocation2 + $0x70] sm:$0xff] %v1083
          %1107 = vst [vmem:[#allocation2 + $0x78] sm:$0xff] %v1086
          %1108 = vst [vmem:[#allocation2 + $0x80] sm:$0xff] %v1088
          %1109 = vst [vmem:[#allocation2 + $0x88] sm:$0xff] %v1091
          %1110 = vst [vmem:[#allocation2 + $0x90] sm:$0xff] %v1093
          %v1111 = vld [vmem:[%s1] sm:$0xff]
          %v1112 = vld [vmem:[%s1 + $0x8] sm:$0xff]
          %v1113 = vld [vmem:[%s1 + $0x10] sm:$0xff]
          %v1114 = vld [vmem:[%s1 + $0x18] sm:$0xff]
          %v1115 = vld [vmem:[%s1 + $0x20] sm:$0xff]
          %v1116 = vld [vmem:[%s1 + $0x28] sm:$0xff]
          %v1117 = vld [vmem:[%s1 + $0x30] sm:$0xff]
          %v1118 = vld [vmem:[%s1 + $0x38] sm:$0xff]
          %v1119 = vld [vmem:[%s1 + $0x40] sm:$0xff]
          %v1120 = vld [vmem:[%s1 + $0x48] sm:$0xff]
          %v1121 = vld [vmem:[%s1 + $0x50] sm:$0xff]
          %v1122 = vld [vmem:[%s1 + $0x58] sm:$0xff]
          %v1123 = vld [vmem:[%s1 + $0x60] sm:$0xff]
          %v1124 = vld [vmem:[%s1 + $0x68] sm:$0xff]
          %v1125 = vld [vmem:[%s1 + $0x70] sm:$0xff]
          %v1126 = vld [vmem:[%s1 + $0x78] sm:$0xff]
          %v1127 = vld [vmem:[%s4] sm:$0x1]
          %1129 = vset.pattern.permute.xlu0 0
          %1130 = vperm.xlu0 %1129, %v1111
          %v1131 = vpop.permute.xlu0 %1130
          %1134 = vset.pattern.permute.xlu0 0
          %1135 = vperm.xlu0 %1134, %v1112
          %v1136 = vpop.permute.xlu0 %1135
          %1139 = vset.pattern.permute.xlu0 0
          %1140 = vperm.xlu0 %1139, %v1113
          %v1141 = vpop.permute.xlu0 %1140
          %1144 = vset.pattern.permute.xlu0 0
          %1145 = vperm.xlu0 %1144, %v1114
          %v1146 = vpop.permute.xlu0 %1145
          %1149 = vset.pattern.permute.xlu0 0
          %1150 = vperm.xlu0 %1149, %v1115
          %v1151 = vpop.permute.xlu0 %1150
          %1154 = vset.pattern.permute.xlu0 0
          %1155 = vperm.xlu0 %1154, %v1116
          %v1156 = vpop.permute.xlu0 %1155
          %1159 = vset.pattern.permute.xlu0 0
          %1160 = vperm.xlu0 %1159, %v1117
          %v1161 = vpop.permute.xlu0 %1160
          %1164 = vset.pattern.permute.xlu0 0
          %1165 = vperm.xlu0 %1164, %v1118
          %v1166 = vpop.permute.xlu0 %1165
          %1169 = vset.pattern.permute.xlu0 0
          %1170 = vperm.xlu0 %1169, %v1119
          %v1171 = vpop.permute.xlu0 %1170
          %1174 = vset.pattern.permute.xlu0 0
          %1175 = vperm.xlu0 %1174, %v1120
          %v1176 = vpop.permute.xlu0 %1175
          %1179 = vset.pattern.permute.xlu0 0
          %1180 = vperm.xlu0 %1179, %v1121
          %v1181 = vpop.permute.xlu0 %1180
          %1184 = vset.pattern.permute.xlu0 0
          %1185 = vperm.xlu0 %1184, %v1122
          %v1186 = vpop.permute.xlu0 %1185
          %1189 = vset.pattern.permute.xlu0 0
          %1190 = vperm.xlu0 %1189, %v1123
          %v1191 = vpop.permute.xlu0 %1190
          %1194 = vset.pattern.permute.xlu0 0
          %1195 = vperm.xlu0 %1194, %v1124
          %v1196 = vpop.permute.xlu0 %1195
          %1199 = vset.pattern.permute.xlu0 0
          %1200 = vperm.xlu0 %1199, %v1125
          %v1201 = vpop.permute.xlu0 %1200
          %1204 = vset.pattern.permute.xlu0 0
          %1205 = vperm.xlu0 %1204, %v1126
          %v1206 = vpop.permute.xlu0 %1205
          %v1209 = vperm.slane %v1127, 0
          %v1211 = vmul.f32 %v1131, %v1209
          %v1212 = vmul.f32 %v1136, %v1209
          %v1213 = vmul.f32 %v1141, %v1209
          %v1214 = vmul.f32 %v1146, %v1209
          %v1215 = vmul.f32 %v1151, %v1209
          %v1216 = vmul.f32 %v1156, %v1209
          %v1217 = vmul.f32 %v1161, %v1209
          %v1218 = vmul.f32 %v1166, %v1209
          %v1219 = vmul.f32 %v1171, %v1209
          %v1220 = vmul.f32 %v1176, %v1209
          %v1221 = vmul.f32 %v1181, %v1209
          %v1222 = vmul.f32 %v1186, %v1209
          %v1223 = vmul.f32 %v1191, %v1209
          %v1224 = vmul.f32 %v1196, %v1209
          %v1225 = vmul.f32 %v1201, %v1209
          %v1226 = vmul.f32 %v1206, %v1209
          %v1227 = vld [vmem:[%s5] sm:$0x1]
          %v1229 = vperm.slane %v1227, 0
          %v1231 = vadd.f32 %v1211, %v1229
          %v1232 = vadd.f32 %v1212, %v1229
          %v1233 = vadd.f32 %v1213, %v1229
          %v1234 = vadd.f32 %v1214, %v1229
          %v1235 = vadd.f32 %v1215, %v1229
          %v1236 = vadd.f32 %v1216, %v1229
          %v1237 = vadd.f32 %v1217, %v1229
          %v1238 = vadd.f32 %v1218, %v1229
          %v1239 = vadd.f32 %v1219, %v1229
          %v1240 = vadd.f32 %v1220, %v1229
          %v1241 = vadd.f32 %v1221, %v1229
          %v1242 = vadd.f32 %v1222, %v1229
          %v1243 = vadd.f32 %v1223, %v1229
          %v1244 = vadd.f32 %v1224, %v1229
          %v1245 = vadd.f32 %v1225, %v1229
          %v1246 = vadd.f32 %v1226, %v1229
          %v1247 = vand.u32 2147483647, %v1231
          %vm1248 = vcmp.le.f32.partialorder %v1247, 0.7853982
          %vm1249 = vcmp.lt.s32.totalorder %v1231, 0
          %v1250 = vand.u32 %v1231, 2139095040
          %v1251 = vshrl.u32 %v1250, 23
          %v1252 = vsub.s32 %v1251, 127
          %v1253 = vand.u32 2147483647, %v1231
          %v1254 = vand.u32 %v1253, 8388607
          %v1255 = vor.u32 %v1254, 8388608
          %v1256 = vsub.s32 0, %v1255
          %v1257 = vadd.s32 %v1252, 1
          %vm1258 = vcmp.gt.s32.totalorder %v1257, 0
          %v1259 = vsel %vm1258, %v1257, 0
          %v1260 = vshrl.u32 %v1259, 5
          %v1261 = vand.u32 %v1259, 31
          %v1262 = vsub.s32 32, %v1261
          %v1263 = vshrl.u32 683565275, %v1262
          %v1264 = vshll.u32 683565275, %v1261
          %v1265 = vshrl.u32 2475754826, %v1262
          %v1266 = vor.u32 %v1264, %v1265
          %v1267 = vshll.u32 2475754826, %v1261
          %v1268 = vshrl.u32 2131351028, %v1262
          %v1269 = vor.u32 %v1267, %v1268
          %v1270 = vshll.u32 2131351028, %v1261
          %v1271 = vshrl.u32 2102212464, %v1262
          %v1272 = vor.u32 %v1270, %v1271
          %v1273 = vshll.u32 2102212464, %v1261
          %v1274 = vshrl.u32 920167782, %v1262
          %v1275 = vor.u32 %v1273, %v1274
          %v1276 = vshll.u32 920167782, %v1261
          %v1277 = vshrl.u32 1326507024, %v1262
          %v1278 = vor.u32 %v1276, %v1277
          %vm1279 = vcmp.lt.s32.totalorder %v1260, 1
          %vm1280 = vcmp.lt.s32.totalorder %v1260, 2
          %vm1281 = vcmp.lt.s32.totalorder %v1260, 3
          %vm1282 = vcmp.lt.s32.totalorder %v1260, 4
          %v1283 = vsel %vm1279, %v1263, %v1266
          %v1284 = vsel %vm1282, %v1272, 2102212464
          %v1285 = vsel %vm1281, %v1269, %v1284
          %v1286 = vsel %vm1280, %v1283, %v1285
          %v1287 = vsel %vm1279, %v1266, %v1269
          %v1288 = vsel %vm1282, %v1275, 920167782
          %v1289 = vsel %vm1281, %v1272, %v1288
          %v1290 = vsel %vm1280, %v1287, %v1289
          %v1291 = vsel %vm1279, %v1269, %v1272
          %v1292 = vsel %vm1282, %v1278, 1326507024
          %v1293 = vsel %vm1281, %v1275, %v1292
          %v1294 = vsel %vm1280, %v1291, %v1293
          %v1295 = vshll.u32 %v1255, 8
          %v1296 = vand.u32 %v1295, 65535
          %v1297 = vshrl.u32 %v1295, 16
          %v1298 = vand.u32 %v1294, 65535
          %v1299 = vshrl.u32 %v1294, 16
          %v1300 = vmul.u32 %v1296, %v1298
          %v1301 = vmul.u32 %v1296, %v1299
          %v1302 = vmul.u32 %v1297, %v1298
          %v1303 = vmul.u32 %v1297, %v1299
          %v1304 = vshll.u32 %v1301, 16
          %v1305 = vshrl.u32 %v1301, 16
          %v1306 = vshll.u32 %v1302, 16
          %v1307 = vshrl.u32 %v1302, 16
          %vm1308 = vc.u32 %v1300, %v1304
          %v1309 = vsel %vm1308, 1, 0
          %v1310 = vadd.s32 %v1300, %v1304
          %v1311 = vadd.s32 %v1303, %v1309
          %vm1312 = vc.u32 %v1310, %v1306
          %v1313 = vsel %vm1312, 1, 0
          %v1314 = vadd.s32 %v1310, %v1306
          %v1315 = vadd.s32 %v1311, %v1313
          %v1316 = vadd.s32 %v1315, %v1305
          %v1317 = vadd.s32 %v1316, %v1307
          %v1318 = vand.u32 %v1295, 65535
          %v1319 = vshrl.u32 %v1295, 16
          %v1320 = vand.u32 %v1290, 65535
          %v1321 = vshrl.u32 %v1290, 16
          %v1322 = vmul.u32 %v1318, %v1320
          %v1323 = vmul.u32 %v1318, %v1321
          %v1324 = vmul.u32 %v1319, %v1320
          %v1325 = vmul.u32 %v1319, %v1321
          %v1326 = vshll.u32 %v1323, 16
          %v1327 = vshrl.u32 %v1323, 16
          %v1328 = vshll.u32 %v1324, 16
          %v1329 = vshrl.u32 %v1324, 16
          %vm1330 = vc.u32 %v1322, %v1326
          %v1331 = vsel %vm1330, 1, 0
          %v1332 = vadd.s32 %v1322, %v1326
          %v1333 = vadd.s32 %v1325, %v1331
          %vm1334 = vc.u32 %v1332, %v1328
          %v1335 = vsel %vm1334, 1, 0
          %v1336 = vadd.s32 %v1332, %v1328
          %v1337 = vadd.s32 %v1333, %v1335
          %v1338 = vadd.s32 %v1337, %v1327
          %v1339 = vadd.s32 %v1338, %v1329
          %v1340 = vmul.u32 %v1295, %v1286
          %v1341 = vadd.s32 %v1317, %v1336
          %vm1342 = vc.u32 %v1317, %v1336
          %v1343 = vadd.s32 %v1339, 1
          %v1344 = vsel %vm1342, %v1343, %v1339
          %v1345 = vadd.s32 %v1340, %v1344
          %v1346 = vadd.s32 %v1345, 536870912
          %v1347 = vshrl.u32 %v1346, 30
          %v1348 = vshll.u32 %v1347, 30
          %v1349 = vsub.s32 %v1345, %v1348
          %vm1350 = vcmp.lt.s32.totalorder %v1349, 0
          %v1351 = vsub.s32 0, %v1349
          %v1352 = vsel %vm1350, %v1351, %v1349
          %v1353 = vclz %v1352
          %v1354 = vsub.s32 %v1353, 2
          %vm1355 = vcmp.gt.s32.totalorder 0, %v1354
          %v1356 = vsel %vm1355, 0, %v1354
          %v1357 = vsub.s32 32, %v1356
          %v1358 = vshll.u32 %v1349, %v1356
          %v1359 = vshrl.u32 %v1341, %v1357
          %v1360 = vor.u32 %v1358, %v1359
          %v1361 = vsub.s32 4294967266, %v1356
          %v1362 = vadd.s32 %v1361, 127
          %v1363 = vshll.u32 %v1362, 23
          %v1364 = vor.u32 4788187, %v1363
          %v1365 = vand.u32 2147483647, %v1364
          %v1367 = vcvt.s32.f32 %v1360
          %v1368 = vmul.f32 %v1367, %v1365
          %v1369 = vxor.u32 %v1368, 2147483648
          %v1370 = vsel %vm1249, %v1369, %v1368
          %v1371 = vsub.s32 4, %v1347
          %v1372 = vsel %vm1249, %v1371, %v1347
          %v1373 = vsel %vm1248, %v1231, %v1370
          %v1374 = vsel %vm1248, 0, %v1372
          %v1375 = vmul.f32 %v1373, %v1373
          %v1376 = vmul.f32 %v1375, -0.001358992
          %v1377 = vadd.f32 %v1376, 0.041655596
          %v1378 = vmul.f32 %v1375, %v1377
          %v1379 = vadd.f32 %v1378, -0.4999988
          %v1380 = vmul.f32 %v1375, %v1379
          %v1381 = vadd.f32 1.0, %v1380
          %v1382 = vmul.f32 %v1373, %v1373
          %v1383 = vmul.f32 %v1382, -0.00019511016
          %v1384 = vadd.f32 %v1383, 0.008332121
          %v1385 = vmul.f32 %v1382, %v1384
          %v1386 = vadd.f32 %v1385, -0.16666654
          %v1387 = vmul.f32 %v1382, %v1386
          %v1388 = vadd.f32 %v1387, 1.0
          %v1389 = vmul.f32 %v1388, %v1373
          %vm1390 = vweird.f32 %v1231
          %v1391 = vadd.s32 %v1374, 3
          %v1392 = vand.u32 %v1391, 3
          %vm1393 = vcmp.lt.s32.totalorder %v1392, 2
          %vm1394 = vcmp.eq.s32.totalorder %v1392, 0
          %v1395 = vxor.u32 %v1389, 2147483648
          %v1396 = vsel %vm1394, %v1381, %v1395
          %vm1397 = vcmp.eq.s32.totalorder %v1392, 2
          %v1398 = vxor.u32 %v1381, 2147483648
          %v1399 = vsel %vm1397, %v1398, %v1389
          %v1400 = vsel %vm1393, %v1396, %v1399
          %v1401 = vsel %vm1390, nan, %v1400
          %v1402 = vand.u32 2147483647, %v1232
          %vm1403 = vcmp.le.f32.partialorder %v1402, 0.7853982
          %vm1404 = vcmp.lt.s32.totalorder %v1232, 0
          %v1405 = vand.u32 %v1232, 2139095040
          %v1406 = vshrl.u32 %v1405, 23
          %v1407 = vsub.s32 %v1406, 127
          %v1408 = vand.u32 2147483647, %v1232
          %v1409 = vand.u32 %v1408, 8388607
          %v1410 = vor.u32 %v1409, 8388608
          %v1411 = vsub.s32 0, %v1410
          %v1412 = vadd.s32 %v1407, 1
          %vm1413 = vcmp.gt.s32.totalorder %v1412, 0
          %v1414 = vsel %vm1413, %v1412, 0
          %v1415 = vshrl.u32 %v1414, 5
          %v1416 = vand.u32 %v1414, 31
          %v1417 = vsub.s32 32, %v1416
          %v1418 = vshrl.u32 683565275, %v1417
          %v1419 = vshll.u32 683565275, %v1416
          %v1420 = vshrl.u32 2475754826, %v1417
          %v1421 = vor.u32 %v1419, %v1420
          %v1422 = vshll.u32 2475754826, %v1416
          %v1423 = vshrl.u32 2131351028, %v1417
          %v1424 = vor.u32 %v1422, %v1423
          %v1425 = vshll.u32 2131351028, %v1416
          %v1426 = vshrl.u32 2102212464, %v1417
          %v1427 = vor.u32 %v1425, %v1426
          %v1428 = vshll.u32 2102212464, %v1416
          %v1429 = vshrl.u32 920167782, %v1417
          %v1430 = vor.u32 %v1428, %v1429
          %v1431 = vshll.u32 920167782, %v1416
          %v1432 = vshrl.u32 1326507024, %v1417
          %v1433 = vor.u32 %v1431, %v1432
          %vm1434 = vcmp.lt.s32.totalorder %v1415, 1
          %vm1435 = vcmp.lt.s32.totalorder %v1415, 2
          %vm1436 = vcmp.lt.s32.totalorder %v1415, 3
          %vm1437 = vcmp.lt.s32.totalorder %v1415, 4
          %v1438 = vsel %vm1434, %v1418, %v1421
          %v1439 = vsel %vm1437, %v1427, 2102212464
          %v1440 = vsel %vm1436, %v1424, %v1439
          %v1441 = vsel %vm1435, %v1438, %v1440
          %v1442 = vsel %vm1434, %v1421, %v1424
          %v1443 = vsel %vm1437, %v1430, 920167782
          %v1444 = vsel %vm1436, %v1427, %v1443
          %v1445 = vsel %vm1435, %v1442, %v1444
          %v1446 = vsel %vm1434, %v1424, %v1427
          %v1447 = vsel %vm1437, %v1433, 1326507024
          %v1448 = vsel %vm1436, %v1430, %v1447
          %v1449 = vsel %vm1435, %v1446, %v1448
          %v1450 = vshll.u32 %v1410, 8
          %v1451 = vand.u32 %v1450, 65535
          %v1452 = vshrl.u32 %v1450, 16
          %v1453 = vand.u32 %v1449, 65535
          %v1454 = vshrl.u32 %v1449, 16
          %v1455 = vmul.u32 %v1451, %v1453
          %v1456 = vmul.u32 %v1451, %v1454
          %v1457 = vmul.u32 %v1452, %v1453
          %v1458 = vmul.u32 %v1452, %v1454
          %v1459 = vshll.u32 %v1456, 16
          %v1460 = vshrl.u32 %v1456, 16
          %v1461 = vshll.u32 %v1457, 16
          %v1462 = vshrl.u32 %v1457, 16
          %vm1463 = vc.u32 %v1455, %v1459
          %v1464 = vsel %vm1463, 1, 0
          %v1465 = vadd.s32 %v1455, %v1459
          %v1466 = vadd.s32 %v1458, %v1464
          %vm1467 = vc.u32 %v1465, %v1461
          %v1468 = vsel %vm1467, 1, 0
          %v1469 = vadd.s32 %v1465, %v1461
          %v1470 = vadd.s32 %v1466, %v1468
          %v1471 = vadd.s32 %v1470, %v1460
          %v1472 = vadd.s32 %v1471, %v1462
          %v1473 = vand.u32 %v1450, 65535
          %v1474 = vshrl.u32 %v1450, 16
          %v1475 = vand.u32 %v1445, 65535
          %v1476 = vshrl.u32 %v1445, 16
          %v1477 = vmul.u32 %v1473, %v1475
          %v1478 = vmul.u32 %v1473, %v1476
          %v1479 = vmul.u32 %v1474, %v1475
          %v1480 = vmul.u32 %v1474, %v1476
          %v1481 = vshll.u32 %v1478, 16
          %v1482 = vshrl.u32 %v1478, 16
          %v1483 = vshll.u32 %v1479, 16
          %v1484 = vshrl.u32 %v1479, 16
          %vm1485 = vc.u32 %v1477, %v1481
          %v1486 = vsel %vm1485, 1, 0
          %v1487 = vadd.s32 %v1477, %v1481
          %v1488 = vadd.s32 %v1480, %v1486
          %vm1489 = vc.u32 %v1487, %v1483
          %v1490 = vsel %vm1489, 1, 0
          %v1491 = vadd.s32 %v1487, %v1483
          %v1492 = vadd.s32 %v1488, %v1490
          %v1493 = vadd.s32 %v1492, %v1482
          %v1494 = vadd.s32 %v1493, %v1484
          %v1495 = vmul.u32 %v1450, %v1441
          %v1496 = vadd.s32 %v1472, %v1491
          %vm1497 = vc.u32 %v1472, %v1491
          %v1498 = vadd.s32 %v1494, 1
          %v1499 = vsel %vm1497, %v1498, %v1494
          %v1500 = vadd.s32 %v1495, %v1499
          %v1501 = vadd.s32 %v1500, 536870912
          %v1502 = vshrl.u32 %v1501, 30
          %v1503 = vshll.u32 %v1502, 30
          %v1504 = vsub.s32 %v1500, %v1503
          %vm1505 = vcmp.lt.s32.totalorder %v1504, 0
          %v1506 = vsub.s32 0, %v1504
          %v1507 = vsel %vm1505, %v1506, %v1504
          %v1508 = vclz %v1507
          %v1509 = vsub.s32 %v1508, 2
          %vm1510 = vcmp.gt.s32.totalorder 0, %v1509
          %v1511 = vsel %vm1510, 0, %v1509
          %v1512 = vsub.s32 32, %v1511
          %v1513 = vshll.u32 %v1504, %v1511
          %v1514 = vshrl.u32 %v1496, %v1512
          %v1515 = vor.u32 %v1513, %v1514
          %v1516 = vsub.s32 4294967266, %v1511
          %v1517 = vadd.s32 %v1516, 127
          %v1518 = vshll.u32 %v1517, 23
          %v1519 = vor.u32 4788187, %v1518
          %v1520 = vand.u32 2147483647, %v1519
          %v1522 = vcvt.s32.f32 %v1515
          %v1523 = vmul.f32 %v1522, %v1520
          %v1524 = vxor.u32 %v1523, 2147483648
          %v1525 = vsel %vm1404, %v1524, %v1523
          %v1526 = vsub.s32 4, %v1502
          %v1527 = vsel %vm1404, %v1526, %v1502
          %v1528 = vsel %vm1403, %v1232, %v1525
          %v1529 = vsel %vm1403, 0, %v1527
          %v1530 = vmul.f32 %v1528, %v1528
          %v1531 = vmul.f32 %v1530, -0.001358992
          %v1532 = vadd.f32 %v1531, 0.041655596
          %v1533 = vmul.f32 %v1530, %v1532
          %v1534 = vadd.f32 %v1533, -0.4999988
          %v1535 = vmul.f32 %v1530, %v1534
          %v1536 = vadd.f32 1.0, %v1535
          %v1537 = vmul.f32 %v1528, %v1528
          %v1538 = vmul.f32 %v1537, -0.00019511016
          %v1539 = vadd.f32 %v1538, 0.008332121
          %v1540 = vmul.f32 %v1537, %v1539
          %v1541 = vadd.f32 %v1540, -0.16666654
          %v1542 = vmul.f32 %v1537, %v1541
          %v1543 = vadd.f32 %v1542, 1.0
          %v1544 = vmul.f32 %v1543, %v1528
          %vm1545 = vweird.f32 %v1232
          %v1546 = vadd.s32 %v1529, 3
          %v1547 = vand.u32 %v1546, 3
          %vm1548 = vcmp.lt.s32.totalorder %v1547, 2
          %vm1549 = vcmp.eq.s32.totalorder %v1547, 0
          %v1550 = vxor.u32 %v1544, 2147483648
          %v1551 = vsel %vm1549, %v1536, %v1550
          %vm1552 = vcmp.eq.s32.totalorder %v1547, 2
          %v1553 = vxor.u32 %v1536, 2147483648
          %v1554 = vsel %vm1552, %v1553, %v1544
          %v1555 = vsel %vm1548, %v1551, %v1554
          %v1556 = vsel %vm1545, nan, %v1555
          %v1557 = vand.u32 2147483647, %v1233
          %vm1558 = vcmp.le.f32.partialorder %v1557, 0.7853982
          %vm1559 = vcmp.lt.s32.totalorder %v1233, 0
          %v1560 = vand.u32 %v1233, 2139095040
          %v1561 = vshrl.u32 %v1560, 23
          %v1562 = vsub.s32 %v1561, 127
          %v1563 = vand.u32 2147483647, %v1233
          %v1564 = vand.u32 %v1563, 8388607
          %v1565 = vor.u32 %v1564, 8388608
          %v1566 = vsub.s32 0, %v1565
          %v1567 = vadd.s32 %v1562, 1
          %vm1568 = vcmp.gt.s32.totalorder %v1567, 0
          %v1569 = vsel %vm1568, %v1567, 0
          %v1570 = vshrl.u32 %v1569, 5
          %v1571 = vand.u32 %v1569, 31
          %v1572 = vsub.s32 32, %v1571
          %v1573 = vshrl.u32 683565275, %v1572
          %v1574 = vshll.u32 683565275, %v1571
          %v1575 = vshrl.u32 2475754826, %v1572
          %v1576 = vor.u32 %v1574, %v1575
          %v1577 = vshll.u32 2475754826, %v1571
          %v1578 = vshrl.u32 2131351028, %v1572
          %v1579 = vor.u32 %v1577, %v1578
          %v1580 = vshll.u32 2131351028, %v1571
          %v1581 = vshrl.u32 2102212464, %v1572
          %v1582 = vor.u32 %v1580, %v1581
          %v1583 = vshll.u32 2102212464, %v1571
          %v1584 = vshrl.u32 920167782, %v1572
          %v1585 = vor.u32 %v1583, %v1584
          %v1586 = vshll.u32 920167782, %v1571
          %v1587 = vshrl.u32 1326507024, %v1572
          %v1588 = vor.u32 %v1586, %v1587
          %vm1589 = vcmp.lt.s32.totalorder %v1570, 1
          %vm1590 = vcmp.lt.s32.totalorder %v1570, 2
          %vm1591 = vcmp.lt.s32.totalorder %v1570, 3
          %vm1592 = vcmp.lt.s32.totalorder %v1570, 4
          %v1593 = vsel %vm1589, %v1573, %v1576
          %v1594 = vsel %vm1592, %v1582, 2102212464
          %v1595 = vsel %vm1591, %v1579, %v1594
          %v1596 = vsel %vm1590, %v1593, %v1595
          %v1597 = vsel %vm1589, %v1576, %v1579
          %v1598 = vsel %vm1592, %v1585, 920167782
          %v1599 = vsel %vm1591, %v1582, %v1598
          %v1600 = vsel %vm1590, %v1597, %v1599
          %v1601 = vsel %vm1589, %v1579, %v1582
          %v1602 = vsel %vm1592, %v1588, 1326507024
          %v1603 = vsel %vm1591, %v1585, %v1602
          %v1604 = vsel %vm1590, %v1601, %v1603
          %v1605 = vshll.u32 %v1565, 8
          %v1606 = vand.u32 %v1605, 65535
          %v1607 = vshrl.u32 %v1605, 16
          %v1608 = vand.u32 %v1604, 65535
          %v1609 = vshrl.u32 %v1604, 16
          %v1610 = vmul.u32 %v1606, %v1608
          %v1611 = vmul.u32 %v1606, %v1609
          %v1612 = vmul.u32 %v1607, %v1608
          %v1613 = vmul.u32 %v1607, %v1609
          %v1614 = vshll.u32 %v1611, 16
          %v1615 = vshrl.u32 %v1611, 16
          %v1616 = vshll.u32 %v1612, 16
          %v1617 = vshrl.u32 %v1612, 16
          %vm1618 = vc.u32 %v1610, %v1614
          %v1619 = vsel %vm1618, 1, 0
          %v1620 = vadd.s32 %v1610, %v1614
          %v1621 = vadd.s32 %v1613, %v1619
          %vm1622 = vc.u32 %v1620, %v1616
          %v1623 = vsel %vm1622, 1, 0
          %v1624 = vadd.s32 %v1620, %v1616
          %v1625 = vadd.s32 %v1621, %v1623
          %v1626 = vadd.s32 %v1625, %v1615
          %v1627 = vadd.s32 %v1626, %v1617
          %v1628 = vand.u32 %v1605, 65535
          %v1629 = vshrl.u32 %v1605, 16
          %v1630 = vand.u32 %v1600, 65535
          %v1631 = vshrl.u32 %v1600, 16
          %v1632 = vmul.u32 %v1628, %v1630
          %v1633 = vmul.u32 %v1628, %v1631
          %v1634 = vmul.u32 %v1629, %v1630
          %v1635 = vmul.u32 %v1629, %v1631
          %v1636 = vshll.u32 %v1633, 16
          %v1637 = vshrl.u32 %v1633, 16
          %v1638 = vshll.u32 %v1634, 16
          %v1639 = vshrl.u32 %v1634, 16
          %vm1640 = vc.u32 %v1632, %v1636
          %v1641 = vsel %vm1640, 1, 0
          %v1642 = vadd.s32 %v1632, %v1636
          %v1643 = vadd.s32 %v1635, %v1641
          %vm1644 = vc.u32 %v1642, %v1638
          %v1645 = vsel %vm1644, 1, 0
          %v1646 = vadd.s32 %v1642, %v1638
          %v1647 = vadd.s32 %v1643, %v1645
          %v1648 = vadd.s32 %v1647, %v1637
          %v1649 = vadd.s32 %v1648, %v1639
          %v1650 = vmul.u32 %v1605, %v1596
          %v1651 = vadd.s32 %v1627, %v1646
          %vm1652 = vc.u32 %v1627, %v1646
          %v1653 = vadd.s32 %v1649, 1
          %v1654 = vsel %vm1652, %v1653, %v1649
          %v1655 = vadd.s32 %v1650, %v1654
          %v1656 = vadd.s32 %v1655, 536870912
          %v1657 = vshrl.u32 %v1656, 30
          %v1658 = vshll.u32 %v1657, 30
          %v1659 = vsub.s32 %v1655, %v1658
          %vm1660 = vcmp.lt.s32.totalorder %v1659, 0
          %v1661 = vsub.s32 0, %v1659
          %v1662 = vsel %vm1660, %v1661, %v1659
          %v1663 = vclz %v1662
          %v1664 = vsub.s32 %v1663, 2
          %vm1665 = vcmp.gt.s32.totalorder 0, %v1664
          %v1666 = vsel %vm1665, 0, %v1664
          %v1667 = vsub.s32 32, %v1666
          %v1668 = vshll.u32 %v1659, %v1666
          %v1669 = vshrl.u32 %v1651, %v1667
          %v1670 = vor.u32 %v1668, %v1669
          %v1671 = vsub.s32 4294967266, %v1666
          %v1672 = vadd.s32 %v1671, 127
          %v1673 = vshll.u32 %v1672, 23
          %v1674 = vor.u32 4788187, %v1673
          %v1675 = vand.u32 2147483647, %v1674
          %v1677 = vcvt.s32.f32 %v1670
          %v1678 = vmul.f32 %v1677, %v1675
          %v1679 = vxor.u32 %v1678, 2147483648
          %v1680 = vsel %vm1559, %v1679, %v1678
          %v1681 = vsub.s32 4, %v1657
          %v1682 = vsel %vm1559, %v1681, %v1657
          %v1683 = vsel %vm1558, %v1233, %v1680
          %v1684 = vsel %vm1558, 0, %v1682
          %v1685 = vmul.f32 %v1683, %v1683
          %v1686 = vmul.f32 %v1685, -0.001358992
          %v1687 = vadd.f32 %v1686, 0.041655596
          %v1688 = vmul.f32 %v1685, %v1687
          %v1689 = vadd.f32 %v1688, -0.4999988
          %v1690 = vmul.f32 %v1685, %v1689
          %v1691 = vadd.f32 1.0, %v1690
          %v1692 = vmul.f32 %v1683, %v1683
          %v1693 = vmul.f32 %v1692, -0.00019511016
          %v1694 = vadd.f32 %v1693, 0.008332121
          %v1695 = vmul.f32 %v1692, %v1694
          %v1696 = vadd.f32 %v1695, -0.16666654
          %v1697 = vmul.f32 %v1692, %v1696
          %v1698 = vadd.f32 %v1697, 1.0
          %v1699 = vmul.f32 %v1698, %v1683
          %vm1700 = vweird.f32 %v1233
          %v1701 = vadd.s32 %v1684, 3
          %v1702 = vand.u32 %v1701, 3
          %vm1703 = vcmp.lt.s32.totalorder %v1702, 2
          %vm1704 = vcmp.eq.s32.totalorder %v1702, 0
          %v1705 = vxor.u32 %v1699, 2147483648
          %v1706 = vsel %vm1704, %v1691, %v1705
          %vm1707 = vcmp.eq.s32.totalorder %v1702, 2
          %v1708 = vxor.u32 %v1691, 2147483648
          %v1709 = vsel %vm1707, %v1708, %v1699
          %v1710 = vsel %vm1703, %v1706, %v1709
          %v1711 = vsel %vm1700, nan, %v1710
          %v1712 = vand.u32 2147483647, %v1234
          %vm1713 = vcmp.le.f32.partialorder %v1712, 0.7853982
          %vm1714 = vcmp.lt.s32.totalorder %v1234, 0
          %v1715 = vand.u32 %v1234, 2139095040
          %v1716 = vshrl.u32 %v1715, 23
          %v1717 = vsub.s32 %v1716, 127
          %v1718 = vand.u32 2147483647, %v1234
          %v1719 = vand.u32 %v1718, 8388607
          %v1720 = vor.u32 %v1719, 8388608
          %v1721 = vsub.s32 0, %v1720
          %v1722 = vadd.s32 %v1717, 1
          %vm1723 = vcmp.gt.s32.totalorder %v1722, 0
          %v1724 = vsel %vm1723, %v1722, 0
          %v1725 = vshrl.u32 %v1724, 5
          %v1726 = vand.u32 %v1724, 31
          %v1727 = vsub.s32 32, %v1726
          %v1728 = vshrl.u32 683565275, %v1727
          %v1729 = vshll.u32 683565275, %v1726
          %v1730 = vshrl.u32 2475754826, %v1727
          %v1731 = vor.u32 %v1729, %v1730
          %v1732 = vshll.u32 2475754826, %v1726
          %v1733 = vshrl.u32 2131351028, %v1727
          %v1734 = vor.u32 %v1732, %v1733
          %v1735 = vshll.u32 2131351028, %v1726
          %v1736 = vshrl.u32 2102212464, %v1727
          %v1737 = vor.u32 %v1735, %v1736
          %v1738 = vshll.u32 2102212464, %v1726
          %v1739 = vshrl.u32 920167782, %v1727
          %v1740 = vor.u32 %v1738, %v1739
          %v1741 = vshll.u32 920167782, %v1726
          %v1742 = vshrl.u32 1326507024, %v1727
          %v1743 = vor.u32 %v1741, %v1742
          %vm1744 = vcmp.lt.s32.totalorder %v1725, 1
          %vm1745 = vcmp.lt.s32.totalorder %v1725, 2
          %vm1746 = vcmp.lt.s32.totalorder %v1725, 3
          %vm1747 = vcmp.lt.s32.totalorder %v1725, 4
          %v1748 = vsel %vm1744, %v1728, %v1731
          %v1749 = vsel %vm1747, %v1737, 2102212464
          %v1750 = vsel %vm1746, %v1734, %v1749
          %v1751 = vsel %vm1745, %v1748, %v1750
          %v1752 = vsel %vm1744, %v1731, %v1734
          %v1753 = vsel %vm1747, %v1740, 920167782
          %v1754 = vsel %vm1746, %v1737, %v1753
          %v1755 = vsel %vm1745, %v1752, %v1754
          %v1756 = vsel %vm1744, %v1734, %v1737
          %v1757 = vsel %vm1747, %v1743, 1326507024
          %v1758 = vsel %vm1746, %v1740, %v1757
          %v1759 = vsel %vm1745, %v1756, %v1758
          %v1760 = vshll.u32 %v1720, 8
          %v1761 = vand.u32 %v1760, 65535
          %v1762 = vshrl.u32 %v1760, 16
          %v1763 = vand.u32 %v1759, 65535
          %v1764 = vshrl.u32 %v1759, 16
          %v1765 = vmul.u32 %v1761, %v1763
          %v1766 = vmul.u32 %v1761, %v1764
          %v1767 = vmul.u32 %v1762, %v1763
          %v1768 = vmul.u32 %v1762, %v1764
          %v1769 = vshll.u32 %v1766, 16
          %v1770 = vshrl.u32 %v1766, 16
          %v1771 = vshll.u32 %v1767, 16
          %v1772 = vshrl.u32 %v1767, 16
          %vm1773 = vc.u32 %v1765, %v1769
          %v1774 = vsel %vm1773, 1, 0
          %v1775 = vadd.s32 %v1765, %v1769
          %v1776 = vadd.s32 %v1768, %v1774
          %vm1777 = vc.u32 %v1775, %v1771
          %v1778 = vsel %vm1777, 1, 0
          %v1779 = vadd.s32 %v1775, %v1771
          %v1780 = vadd.s32 %v1776, %v1778
          %v1781 = vadd.s32 %v1780, %v1770
          %v1782 = vadd.s32 %v1781, %v1772
          %v1783 = vand.u32 %v1760, 65535
          %v1784 = vshrl.u32 %v1760, 16
          %v1785 = vand.u32 %v1755, 65535
          %v1786 = vshrl.u32 %v1755, 16
          %v1787 = vmul.u32 %v1783, %v1785
          %v1788 = vmul.u32 %v1783, %v1786
          %v1789 = vmul.u32 %v1784, %v1785
          %v1790 = vmul.u32 %v1784, %v1786
          %v1791 = vshll.u32 %v1788, 16
          %v1792 = vshrl.u32 %v1788, 16
          %v1793 = vshll.u32 %v1789, 16
          %v1794 = vshrl.u32 %v1789, 16
          %vm1795 = vc.u32 %v1787, %v1791
          %v1796 = vsel %vm1795, 1, 0
          %v1797 = vadd.s32 %v1787, %v1791
          %v1798 = vadd.s32 %v1790, %v1796
          %vm1799 = vc.u32 %v1797, %v1793
          %v1800 = vsel %vm1799, 1, 0
          %v1801 = vadd.s32 %v1797, %v1793
          %v1802 = vadd.s32 %v1798, %v1800
          %v1803 = vadd.s32 %v1802, %v1792
          %v1804 = vadd.s32 %v1803, %v1794
          %v1805 = vmul.u32 %v1760, %v1751
          %v1806 = vadd.s32 %v1782, %v1801
          %vm1807 = vc.u32 %v1782, %v1801
          %v1808 = vadd.s32 %v1804, 1
          %v1809 = vsel %vm1807, %v1808, %v1804
          %v1810 = vadd.s32 %v1805, %v1809
          %v1811 = vadd.s32 %v1810, 536870912
          %v1812 = vshrl.u32 %v1811, 30
          %v1813 = vshll.u32 %v1812, 30
          %v1814 = vsub.s32 %v1810, %v1813
          %vm1815 = vcmp.lt.s32.totalorder %v1814, 0
          %v1816 = vsub.s32 0, %v1814
          %v1817 = vsel %vm1815, %v1816, %v1814
          %v1818 = vclz %v1817
          %v1819 = vsub.s32 %v1818, 2
          %vm1820 = vcmp.gt.s32.totalorder 0, %v1819
          %v1821 = vsel %vm1820, 0, %v1819
          %v1822 = vsub.s32 32, %v1821
          %v1823 = vshll.u32 %v1814, %v1821
          %v1824 = vshrl.u32 %v1806, %v1822
          %v1825 = vor.u32 %v1823, %v1824
          %v1826 = vsub.s32 4294967266, %v1821
          %v1827 = vadd.s32 %v1826, 127
          %v1828 = vshll.u32 %v1827, 23
          %v1829 = vor.u32 4788187, %v1828
          %v1830 = vand.u32 2147483647, %v1829
          %v1832 = vcvt.s32.f32 %v1825
          %v1833 = vmul.f32 %v1832, %v1830
          %v1834 = vxor.u32 %v1833, 2147483648
          %v1835 = vsel %vm1714, %v1834, %v1833
          %v1836 = vsub.s32 4, %v1812
          %v1837 = vsel %vm1714, %v1836, %v1812
          %v1838 = vsel %vm1713, %v1234, %v1835
          %v1839 = vsel %vm1713, 0, %v1837
          %v1840 = vmul.f32 %v1838, %v1838
          %v1841 = vmul.f32 %v1840, -0.001358992
          %v1842 = vadd.f32 %v1841, 0.041655596
          %v1843 = vmul.f32 %v1840, %v1842
          %v1844 = vadd.f32 %v1843, -0.4999988
          %v1845 = vmul.f32 %v1840, %v1844
          %v1846 = vadd.f32 1.0, %v1845
          %v1847 = vmul.f32 %v1838, %v1838
          %v1848 = vmul.f32 %v1847, -0.00019511016
          %v1849 = vadd.f32 %v1848, 0.008332121
          %v1850 = vmul.f32 %v1847, %v1849
          %v1851 = vadd.f32 %v1850, -0.16666654
          %v1852 = vmul.f32 %v1847, %v1851
          %v1853 = vadd.f32 %v1852, 1.0
          %v1854 = vmul.f32 %v1853, %v1838
          %vm1855 = vweird.f32 %v1234
          %v1856 = vadd.s32 %v1839, 3
          %v1857 = vand.u32 %v1856, 3
          %vm1858 = vcmp.lt.s32.totalorder %v1857, 2
          %vm1859 = vcmp.eq.s32.totalorder %v1857, 0
          %v1860 = vxor.u32 %v1854, 2147483648
          %v1861 = vsel %vm1859, %v1846, %v1860
          %vm1862 = vcmp.eq.s32.totalorder %v1857, 2
          %v1863 = vxor.u32 %v1846, 2147483648
          %v1864 = vsel %vm1862, %v1863, %v1854
          %v1865 = vsel %vm1858, %v1861, %v1864
          %v1866 = vsel %vm1855, nan, %v1865
          %v1867 = vand.u32 2147483647, %v1235
          %vm1868 = vcmp.le.f32.partialorder %v1867, 0.7853982
          %vm1869 = vcmp.lt.s32.totalorder %v1235, 0
          %v1870 = vand.u32 %v1235, 2139095040
          %v1871 = vshrl.u32 %v1870, 23
          %v1872 = vsub.s32 %v1871, 127
          %v1873 = vand.u32 2147483647, %v1235
          %v1874 = vand.u32 %v1873, 8388607
          %v1875 = vor.u32 %v1874, 8388608
          %v1876 = vsub.s32 0, %v1875
          %v1877 = vadd.s32 %v1872, 1
          %vm1878 = vcmp.gt.s32.totalorder %v1877, 0
          %v1879 = vsel %vm1878, %v1877, 0
          %v1880 = vshrl.u32 %v1879, 5
          %v1881 = vand.u32 %v1879, 31
          %v1882 = vsub.s32 32, %v1881
          %v1883 = vshrl.u32 683565275, %v1882
          %v1884 = vshll.u32 683565275, %v1881
          %v1885 = vshrl.u32 2475754826, %v1882
          %v1886 = vor.u32 %v1884, %v1885
          %v1887 = vshll.u32 2475754826, %v1881
          %v1888 = vshrl.u32 2131351028, %v1882
          %v1889 = vor.u32 %v1887, %v1888
          %v1890 = vshll.u32 2131351028, %v1881
          %v1891 = vshrl.u32 2102212464, %v1882
          %v1892 = vor.u32 %v1890, %v1891
          %v1893 = vshll.u32 2102212464, %v1881
          %v1894 = vshrl.u32 920167782, %v1882
          %v1895 = vor.u32 %v1893, %v1894
          %v1896 = vshll.u32 920167782, %v1881
          %v1897 = vshrl.u32 1326507024, %v1882
          %v1898 = vor.u32 %v1896, %v1897
          %vm1899 = vcmp.lt.s32.totalorder %v1880, 1
          %vm1900 = vcmp.lt.s32.totalorder %v1880, 2
          %vm1901 = vcmp.lt.s32.totalorder %v1880, 3
          %vm1902 = vcmp.lt.s32.totalorder %v1880, 4
          %v1903 = vsel %vm1899, %v1883, %v1886
          %v1904 = vsel %vm1902, %v1892, 2102212464
          %v1905 = vsel %vm1901, %v1889, %v1904
          %v1906 = vsel %vm1900, %v1903, %v1905
          %v1907 = vsel %vm1899, %v1886, %v1889
          %v1908 = vsel %vm1902, %v1895, 920167782
          %v1909 = vsel %vm1901, %v1892, %v1908
          %v1910 = vsel %vm1900, %v1907, %v1909
          %v1911 = vsel %vm1899, %v1889, %v1892
          %v1912 = vsel %vm1902, %v1898, 1326507024
          %v1913 = vsel %vm1901, %v1895, %v1912
          %v1914 = vsel %vm1900, %v1911, %v1913
          %v1915 = vshll.u32 %v1875, 8
          %v1916 = vand.u32 %v1915, 65535
          %v1917 = vshrl.u32 %v1915, 16
          %v1918 = vand.u32 %v1914, 65535
          %v1919 = vshrl.u32 %v1914, 16
          %v1920 = vmul.u32 %v1916, %v1918
          %v1921 = vmul.u32 %v1916, %v1919
          %v1922 = vmul.u32 %v1917, %v1918
          %v1923 = vmul.u32 %v1917, %v1919
          %v1924 = vshll.u32 %v1921, 16
          %v1925 = vshrl.u32 %v1921, 16
          %v1926 = vshll.u32 %v1922, 16
          %v1927 = vshrl.u32 %v1922, 16
          %vm1928 = vc.u32 %v1920, %v1924
          %v1929 = vsel %vm1928, 1, 0
          %v1930 = vadd.s32 %v1920, %v1924
          %v1931 = vadd.s32 %v1923, %v1929
          %vm1932 = vc.u32 %v1930, %v1926
          %v1933 = vsel %vm1932, 1, 0
          %v1934 = vadd.s32 %v1930, %v1926
          %v1935 = vadd.s32 %v1931, %v1933
          %v1936 = vadd.s32 %v1935, %v1925
          %v1937 = vadd.s32 %v1936, %v1927
          %v1938 = vand.u32 %v1915, 65535
          %v1939 = vshrl.u32 %v1915, 16
          %v1940 = vand.u32 %v1910, 65535
          %v1941 = vshrl.u32 %v1910, 16
          %v1942 = vmul.u32 %v1938, %v1940
          %v1943 = vmul.u32 %v1938, %v1941
          %v1944 = vmul.u32 %v1939, %v1940
          %v1945 = vmul.u32 %v1939, %v1941
          %v1946 = vshll.u32 %v1943, 16
          %v1947 = vshrl.u32 %v1943, 16
          %v1948 = vshll.u32 %v1944, 16
          %v1949 = vshrl.u32 %v1944, 16
          %vm1950 = vc.u32 %v1942, %v1946
          %v1951 = vsel %vm1950, 1, 0
          %v1952 = vadd.s32 %v1942, %v1946
          %v1953 = vadd.s32 %v1945, %v1951
          %vm1954 = vc.u32 %v1952, %v1948
          %v1955 = vsel %vm1954, 1, 0
          %v1956 = vadd.s32 %v1952, %v1948
          %v1957 = vadd.s32 %v1953, %v1955
          %v1958 = vadd.s32 %v1957, %v1947
          %v1959 = vadd.s32 %v1958, %v1949
          %v1960 = vmul.u32 %v1915, %v1906
          %v1961 = vadd.s32 %v1937, %v1956
          %vm1962 = vc.u32 %v1937, %v1956
          %v1963 = vadd.s32 %v1959, 1
          %v1964 = vsel %vm1962, %v1963, %v1959
          %v1965 = vadd.s32 %v1960, %v1964
          %v1966 = vadd.s32 %v1965, 536870912
          %v1967 = vshrl.u32 %v1966, 30
          %v1968 = vshll.u32 %v1967, 30
          %v1969 = vsub.s32 %v1965, %v1968
          %vm1970 = vcmp.lt.s32.totalorder %v1969, 0
          %v1971 = vsub.s32 0, %v1969
          %v1972 = vsel %vm1970, %v1971, %v1969
          %v1973 = vclz %v1972
          %v1974 = vsub.s32 %v1973, 2
          %vm1975 = vcmp.gt.s32.totalorder 0, %v1974
          %v1976 = vsel %vm1975, 0, %v1974
          %v1977 = vsub.s32 32, %v1976
          %v1978 = vshll.u32 %v1969, %v1976
          %v1979 = vshrl.u32 %v1961, %v1977
          %v1980 = vor.u32 %v1978, %v1979
          %v1981 = vsub.s32 4294967266, %v1976
          %v1982 = vadd.s32 %v1981, 127
          %v1983 = vshll.u32 %v1982, 23
          %v1984 = vor.u32 4788187, %v1983
          %v1985 = vand.u32 2147483647, %v1984
          %v1987 = vcvt.s32.f32 %v1980
          %v1988 = vmul.f32 %v1987, %v1985
          %v1989 = vxor.u32 %v1988, 2147483648
          %v1990 = vsel %vm1869, %v1989, %v1988
          %v1991 = vsub.s32 4, %v1967
          %v1992 = vsel %vm1869, %v1991, %v1967
          %v1993 = vsel %vm1868, %v1235, %v1990
          %v1994 = vsel %vm1868, 0, %v1992
          %v1995 = vmul.f32 %v1993, %v1993
          %v1996 = vmul.f32 %v1995, -0.001358992
          %v1997 = vadd.f32 %v1996, 0.041655596
          %v1998 = vmul.f32 %v1995, %v1997
          %v1999 = vadd.f32 %v1998, -0.4999988
          %v2000 = vmul.f32 %v1995, %v1999
          %v2001 = vadd.f32 1.0, %v2000
          %v2002 = vmul.f32 %v1993, %v1993
          %v2003 = vmul.f32 %v2002, -0.00019511016
          %v2004 = vadd.f32 %v2003, 0.008332121
          %v2005 = vmul.f32 %v2002, %v2004
          %v2006 = vadd.f32 %v2005, -0.16666654
          %v2007 = vmul.f32 %v2002, %v2006
          %v2008 = vadd.f32 %v2007, 1.0
          %v2009 = vmul.f32 %v2008, %v1993
          %vm2010 = vweird.f32 %v1235
          %v2011 = vadd.s32 %v1994, 3
          %v2012 = vand.u32 %v2011, 3
          %vm2013 = vcmp.lt.s32.totalorder %v2012, 2
          %vm2014 = vcmp.eq.s32.totalorder %v2012, 0
          %v2015 = vxor.u32 %v2009, 2147483648
          %v2016 = vsel %vm2014, %v2001, %v2015
          %vm2017 = vcmp.eq.s32.totalorder %v2012, 2
          %v2018 = vxor.u32 %v2001, 2147483648
          %v2019 = vsel %vm2017, %v2018, %v2009
          %v2020 = vsel %vm2013, %v2016, %v2019
          %v2021 = vsel %vm2010, nan, %v2020
          %v2022 = vand.u32 2147483647, %v1236
          %vm2023 = vcmp.le.f32.partialorder %v2022, 0.7853982
          %vm2024 = vcmp.lt.s32.totalorder %v1236, 0
          %v2025 = vand.u32 %v1236, 2139095040
          %v2026 = vshrl.u32 %v2025, 23
          %v2027 = vsub.s32 %v2026, 127
          %v2028 = vand.u32 2147483647, %v1236
          %v2029 = vand.u32 %v2028, 8388607
          %v2030 = vor.u32 %v2029, 8388608
          %v2031 = vsub.s32 0, %v2030
          %v2032 = vadd.s32 %v2027, 1
          %vm2033 = vcmp.gt.s32.totalorder %v2032, 0
          %v2034 = vsel %vm2033, %v2032, 0
          %v2035 = vshrl.u32 %v2034, 5
          %v2036 = vand.u32 %v2034, 31
          %v2037 = vsub.s32 32, %v2036
          %v2038 = vshrl.u32 683565275, %v2037
          %v2039 = vshll.u32 683565275, %v2036
          %v2040 = vshrl.u32 2475754826, %v2037
          %v2041 = vor.u32 %v2039, %v2040
          %v2042 = vshll.u32 2475754826, %v2036
          %v2043 = vshrl.u32 2131351028, %v2037
          %v2044 = vor.u32 %v2042, %v2043
          %v2045 = vshll.u32 2131351028, %v2036
          %v2046 = vshrl.u32 2102212464, %v2037
          %v2047 = vor.u32 %v2045, %v2046
          %v2048 = vshll.u32 2102212464, %v2036
          %v2049 = vshrl.u32 920167782, %v2037
          %v2050 = vor.u32 %v2048, %v2049
          %v2051 = vshll.u32 920167782, %v2036
          %v2052 = vshrl.u32 1326507024, %v2037
          %v2053 = vor.u32 %v2051, %v2052
          %vm2054 = vcmp.lt.s32.totalorder %v2035, 1
          %vm2055 = vcmp.lt.s32.totalorder %v2035, 2
          %vm2056 = vcmp.lt.s32.totalorder %v2035, 3
          %vm2057 = vcmp.lt.s32.totalorder %v2035, 4
          %v2058 = vsel %vm2054, %v2038, %v2041
          %v2059 = vsel %vm2057, %v2047, 2102212464
          %v2060 = vsel %vm2056, %v2044, %v2059
          %v2061 = vsel %vm2055, %v2058, %v2060
          %v2062 = vsel %vm2054, %v2041, %v2044
          %v2063 = vsel %vm2057, %v2050, 920167782
          %v2064 = vsel %vm2056, %v2047, %v2063
          %v2065 = vsel %vm2055, %v2062, %v2064
          %v2066 = vsel %vm2054, %v2044, %v2047
          %v2067 = vsel %vm2057, %v2053, 1326507024
          %v2068 = vsel %vm2056, %v2050, %v2067
          %v2069 = vsel %vm2055, %v2066, %v2068
          %v2070 = vshll.u32 %v2030, 8
          %v2071 = vand.u32 %v2070, 65535
          %v2072 = vshrl.u32 %v2070, 16
          %v2073 = vand.u32 %v2069, 65535
          %v2074 = vshrl.u32 %v2069, 16
          %v2075 = vmul.u32 %v2071, %v2073
          %v2076 = vmul.u32 %v2071, %v2074
          %v2077 = vmul.u32 %v2072, %v2073
          %v2078 = vmul.u32 %v2072, %v2074
          %v2079 = vshll.u32 %v2076, 16
          %v2080 = vshrl.u32 %v2076, 16
          %v2081 = vshll.u32 %v2077, 16
          %v2082 = vshrl.u32 %v2077, 16
          %vm2083 = vc.u32 %v2075, %v2079
          %v2084 = vsel %vm2083, 1, 0
          %v2085 = vadd.s32 %v2075, %v2079
          %v2086 = vadd.s32 %v2078, %v2084
          %vm2087 = vc.u32 %v2085, %v2081
          %v2088 = vsel %vm2087, 1, 0
          %v2089 = vadd.s32 %v2085, %v2081
          %v2090 = vadd.s32 %v2086, %v2088
          %v2091 = vadd.s32 %v2090, %v2080
          %v2092 = vadd.s32 %v2091, %v2082
          %v2093 = vand.u32 %v2070, 65535
          %v2094 = vshrl.u32 %v2070, 16
          %v2095 = vand.u32 %v2065, 65535
          %v2096 = vshrl.u32 %v2065, 16
          %v2097 = vmul.u32 %v2093, %v2095
          %v2098 = vmul.u32 %v2093, %v2096
          %v2099 = vmul.u32 %v2094, %v2095
          %v2100 = vmul.u32 %v2094, %v2096
          %v2101 = vshll.u32 %v2098, 16
          %v2102 = vshrl.u32 %v2098, 16
          %v2103 = vshll.u32 %v2099, 16
          %v2104 = vshrl.u32 %v2099, 16
          %vm2105 = vc.u32 %v2097, %v2101
          %v2106 = vsel %vm2105, 1, 0
          %v2107 = vadd.s32 %v2097, %v2101
          %v2108 = vadd.s32 %v2100, %v2106
          %vm2109 = vc.u32 %v2107, %v2103
          %v2110 = vsel %vm2109, 1, 0
          %v2111 = vadd.s32 %v2107, %v2103
          %v2112 = vadd.s32 %v2108, %v2110
          %v2113 = vadd.s32 %v2112, %v2102
          %v2114 = vadd.s32 %v2113, %v2104
          %v2115 = vmul.u32 %v2070, %v2061
          %v2116 = vadd.s32 %v2092, %v2111
          %vm2117 = vc.u32 %v2092, %v2111
          %v2118 = vadd.s32 %v2114, 1
          %v2119 = vsel %vm2117, %v2118, %v2114
          %v2120 = vadd.s32 %v2115, %v2119
          %v2121 = vadd.s32 %v2120, 536870912
          %v2122 = vshrl.u32 %v2121, 30
          %v2123 = vshll.u32 %v2122, 30
          %v2124 = vsub.s32 %v2120, %v2123
          %vm2125 = vcmp.lt.s32.totalorder %v2124, 0
          %v2126 = vsub.s32 0, %v2124
          %v2127 = vsel %vm2125, %v2126, %v2124
          %v2128 = vclz %v2127
          %v2129 = vsub.s32 %v2128, 2
          %vm2130 = vcmp.gt.s32.totalorder 0, %v2129
          %v2131 = vsel %vm2130, 0, %v2129
          %v2132 = vsub.s32 32, %v2131
          %v2133 = vshll.u32 %v2124, %v2131
          %v2134 = vshrl.u32 %v2116, %v2132
          %v2135 = vor.u32 %v2133, %v2134
          %v2136 = vsub.s32 4294967266, %v2131
          %v2137 = vadd.s32 %v2136, 127
          %v2138 = vshll.u32 %v2137, 23
          %v2139 = vor.u32 4788187, %v2138
          %v2140 = vand.u32 2147483647, %v2139
          %v2142 = vcvt.s32.f32 %v2135
          %v2143 = vmul.f32 %v2142, %v2140
          %v2144 = vxor.u32 %v2143, 2147483648
          %v2145 = vsel %vm2024, %v2144, %v2143
          %v2146 = vsub.s32 4, %v2122
          %v2147 = vsel %vm2024, %v2146, %v2122
          %v2148 = vsel %vm2023, %v1236, %v2145
          %v2149 = vsel %vm2023, 0, %v2147
          %v2150 = vmul.f32 %v2148, %v2148
          %v2151 = vmul.f32 %v2150, -0.001358992
          %v2152 = vadd.f32 %v2151, 0.041655596
          %v2153 = vmul.f32 %v2150, %v2152
          %v2154 = vadd.f32 %v2153, -0.4999988
          %v2155 = vmul.f32 %v2150, %v2154
          %v2156 = vadd.f32 1.0, %v2155
          %v2157 = vmul.f32 %v2148, %v2148
          %v2158 = vmul.f32 %v2157, -0.00019511016
          %v2159 = vadd.f32 %v2158, 0.008332121
          %v2160 = vmul.f32 %v2157, %v2159
          %v2161 = vadd.f32 %v2160, -0.16666654
          %v2162 = vmul.f32 %v2157, %v2161
          %v2163 = vadd.f32 %v2162, 1.0
          %v2164 = vmul.f32 %v2163, %v2148
          %vm2165 = vweird.f32 %v1236
          %v2166 = vadd.s32 %v2149, 3
          %v2167 = vand.u32 %v2166, 3
          %vm2168 = vcmp.lt.s32.totalorder %v2167, 2
          %vm2169 = vcmp.eq.s32.totalorder %v2167, 0
          %v2170 = vxor.u32 %v2164, 2147483648
          %v2171 = vsel %vm2169, %v2156, %v2170
          %vm2172 = vcmp.eq.s32.totalorder %v2167, 2
          %v2173 = vxor.u32 %v2156, 2147483648
          %v2174 = vsel %vm2172, %v2173, %v2164
          %v2175 = vsel %vm2168, %v2171, %v2174
          %v2176 = vsel %vm2165, nan, %v2175
          %v2177 = vand.u32 2147483647, %v1237
          %vm2178 = vcmp.le.f32.partialorder %v2177, 0.7853982
          %vm2179 = vcmp.lt.s32.totalorder %v1237, 0
          %v2180 = vand.u32 %v1237, 2139095040
          %v2181 = vshrl.u32 %v2180, 23
          %v2182 = vsub.s32 %v2181, 127
          %v2183 = vand.u32 2147483647, %v1237
          %v2184 = vand.u32 %v2183, 8388607
          %v2185 = vor.u32 %v2184, 8388608
          %v2186 = vsub.s32 0, %v2185
          %v2187 = vadd.s32 %v2182, 1
          %vm2188 = vcmp.gt.s32.totalorder %v2187, 0
          %v2189 = vsel %vm2188, %v2187, 0
          %v2190 = vshrl.u32 %v2189, 5
          %v2191 = vand.u32 %v2189, 31
          %v2192 = vsub.s32 32, %v2191
          %v2193 = vshrl.u32 683565275, %v2192
          %v2194 = vshll.u32 683565275, %v2191
          %v2195 = vshrl.u32 2475754826, %v2192
          %v2196 = vor.u32 %v2194, %v2195
          %v2197 = vshll.u32 2475754826, %v2191
          %v2198 = vshrl.u32 2131351028, %v2192
          %v2199 = vor.u32 %v2197, %v2198
          %v2200 = vshll.u32 2131351028, %v2191
          %v2201 = vshrl.u32 2102212464, %v2192
          %v2202 = vor.u32 %v2200, %v2201
          %v2203 = vshll.u32 2102212464, %v2191
          %v2204 = vshrl.u32 920167782, %v2192
          %v2205 = vor.u32 %v2203, %v2204
          %v2206 = vshll.u32 920167782, %v2191
          %v2207 = vshrl.u32 1326507024, %v2192
          %v2208 = vor.u32 %v2206, %v2207
          %vm2209 = vcmp.lt.s32.totalorder %v2190, 1
          %vm2210 = vcmp.lt.s32.totalorder %v2190, 2
          %vm2211 = vcmp.lt.s32.totalorder %v2190, 3
          %vm2212 = vcmp.lt.s32.totalorder %v2190, 4
          %v2213 = vsel %vm2209, %v2193, %v2196
          %v2214 = vsel %vm2212, %v2202, 2102212464
          %v2215 = vsel %vm2211, %v2199, %v2214
          %v2216 = vsel %vm2210, %v2213, %v2215
          %v2217 = vsel %vm2209, %v2196, %v2199
          %v2218 = vsel %vm2212, %v2205, 920167782
          %v2219 = vsel %vm2211, %v2202, %v2218
          %v2220 = vsel %vm2210, %v2217, %v2219
          %v2221 = vsel %vm2209, %v2199, %v2202
          %v2222 = vsel %vm2212, %v2208, 1326507024
          %v2223 = vsel %vm2211, %v2205, %v2222
          %v2224 = vsel %vm2210, %v2221, %v2223
          %v2225 = vshll.u32 %v2185, 8
          %v2226 = vand.u32 %v2225, 65535
          %v2227 = vshrl.u32 %v2225, 16
          %v2228 = vand.u32 %v2224, 65535
          %v2229 = vshrl.u32 %v2224, 16
          %v2230 = vmul.u32 %v2226, %v2228
          %v2231 = vmul.u32 %v2226, %v2229
          %v2232 = vmul.u32 %v2227, %v2228
          %v2233 = vmul.u32 %v2227, %v2229
          %v2234 = vshll.u32 %v2231, 16
          %v2235 = vshrl.u32 %v2231, 16
          %v2236 = vshll.u32 %v2232, 16
          %v2237 = vshrl.u32 %v2232, 16
          %vm2238 = vc.u32 %v2230, %v2234
          %v2239 = vsel %vm2238, 1, 0
          %v2240 = vadd.s32 %v2230, %v2234
          %v2241 = vadd.s32 %v2233, %v2239
          %vm2242 = vc.u32 %v2240, %v2236
          %v2243 = vsel %vm2242, 1, 0
          %v2244 = vadd.s32 %v2240, %v2236
          %v2245 = vadd.s32 %v2241, %v2243
          %v2246 = vadd.s32 %v2245, %v2235
          %v2247 = vadd.s32 %v2246, %v2237
          %v2248 = vand.u32 %v2225, 65535
          %v2249 = vshrl.u32 %v2225, 16
          %v2250 = vand.u32 %v2220, 65535
          %v2251 = vshrl.u32 %v2220, 16
          %v2252 = vmul.u32 %v2248, %v2250
          %v2253 = vmul.u32 %v2248, %v2251
          %v2254 = vmul.u32 %v2249, %v2250
          %v2255 = vmul.u32 %v2249, %v2251
          %v2256 = vshll.u32 %v2253, 16
          %v2257 = vshrl.u32 %v2253, 16
          %v2258 = vshll.u32 %v2254, 16
          %v2259 = vshrl.u32 %v2254, 16
          %vm2260 = vc.u32 %v2252, %v2256
          %v2261 = vsel %vm2260, 1, 0
          %v2262 = vadd.s32 %v2252, %v2256
          %v2263 = vadd.s32 %v2255, %v2261
          %vm2264 = vc.u32 %v2262, %v2258
          %v2265 = vsel %vm2264, 1, 0
          %v2266 = vadd.s32 %v2262, %v2258
          %v2267 = vadd.s32 %v2263, %v2265
          %v2268 = vadd.s32 %v2267, %v2257
          %v2269 = vadd.s32 %v2268, %v2259
          %v2270 = vmul.u32 %v2225, %v2216
          %v2271 = vadd.s32 %v2247, %v2266
          %vm2272 = vc.u32 %v2247, %v2266
          %v2273 = vadd.s32 %v2269, 1
          %v2274 = vsel %vm2272, %v2273, %v2269
          %v2275 = vadd.s32 %v2270, %v2274
          %v2276 = vadd.s32 %v2275, 536870912
          %v2277 = vshrl.u32 %v2276, 30
          %v2278 = vshll.u32 %v2277, 30
          %v2279 = vsub.s32 %v2275, %v2278
          %vm2280 = vcmp.lt.s32.totalorder %v2279, 0
          %v2281 = vsub.s32 0, %v2279
          %v2282 = vsel %vm2280, %v2281, %v2279
          %v2283 = vclz %v2282
          %v2284 = vsub.s32 %v2283, 2
          %vm2285 = vcmp.gt.s32.totalorder 0, %v2284
          %v2286 = vsel %vm2285, 0, %v2284
          %v2287 = vsub.s32 32, %v2286
          %v2288 = vshll.u32 %v2279, %v2286
          %v2289 = vshrl.u32 %v2271, %v2287
          %v2290 = vor.u32 %v2288, %v2289
          %v2291 = vsub.s32 4294967266, %v2286
          %v2292 = vadd.s32 %v2291, 127
          %v2293 = vshll.u32 %v2292, 23
          %v2294 = vor.u32 4788187, %v2293
          %v2295 = vand.u32 2147483647, %v2294
          %v2297 = vcvt.s32.f32 %v2290
          %v2298 = vmul.f32 %v2297, %v2295
          %v2299 = vxor.u32 %v2298, 2147483648
          %v2300 = vsel %vm2179, %v2299, %v2298
          %v2301 = vsub.s32 4, %v2277
          %v2302 = vsel %vm2179, %v2301, %v2277
          %v2303 = vsel %vm2178, %v1237, %v2300
          %v2304 = vsel %vm2178, 0, %v2302
          %v2305 = vmul.f32 %v2303, %v2303
          %v2306 = vmul.f32 %v2305, -0.001358992
          %v2307 = vadd.f32 %v2306, 0.041655596
          %v2308 = vmul.f32 %v2305, %v2307
          %v2309 = vadd.f32 %v2308, -0.4999988
          %v2310 = vmul.f32 %v2305, %v2309
          %v2311 = vadd.f32 1.0, %v2310
          %v2312 = vmul.f32 %v2303, %v2303
          %v2313 = vmul.f32 %v2312, -0.00019511016
          %v2314 = vadd.f32 %v2313, 0.008332121
          %v2315 = vmul.f32 %v2312, %v2314
          %v2316 = vadd.f32 %v2315, -0.16666654
          %v2317 = vmul.f32 %v2312, %v2316
          %v2318 = vadd.f32 %v2317, 1.0
          %v2319 = vmul.f32 %v2318, %v2303
          %vm2320 = vweird.f32 %v1237
          %v2321 = vadd.s32 %v2304, 3
          %v2322 = vand.u32 %v2321, 3
          %vm2323 = vcmp.lt.s32.totalorder %v2322, 2
          %vm2324 = vcmp.eq.s32.totalorder %v2322, 0
          %v2325 = vxor.u32 %v2319, 2147483648
          %v2326 = vsel %vm2324, %v2311, %v2325
          %vm2327 = vcmp.eq.s32.totalorder %v2322, 2
          %v2328 = vxor.u32 %v2311, 2147483648
          %v2329 = vsel %vm2327, %v2328, %v2319
          %v2330 = vsel %vm2323, %v2326, %v2329
          %v2331 = vsel %vm2320, nan, %v2330
          %v2332 = vand.u32 2147483647, %v1238
          %vm2333 = vcmp.le.f32.partialorder %v2332, 0.7853982
          %vm2334 = vcmp.lt.s32.totalorder %v1238, 0
          %v2335 = vand.u32 %v1238, 2139095040
          %v2336 = vshrl.u32 %v2335, 23
          %v2337 = vsub.s32 %v2336, 127
          %v2338 = vand.u32 2147483647, %v1238
          %v2339 = vand.u32 %v2338, 8388607
          %v2340 = vor.u32 %v2339, 8388608
          %v2341 = vsub.s32 0, %v2340
          %v2342 = vadd.s32 %v2337, 1
          %vm2343 = vcmp.gt.s32.totalorder %v2342, 0
          %v2344 = vsel %vm2343, %v2342, 0
          %v2345 = vshrl.u32 %v2344, 5
          %v2346 = vand.u32 %v2344, 31
          %v2347 = vsub.s32 32, %v2346
          %v2348 = vshrl.u32 683565275, %v2347
          %v2349 = vshll.u32 683565275, %v2346
          %v2350 = vshrl.u32 2475754826, %v2347
          %v2351 = vor.u32 %v2349, %v2350
          %v2352 = vshll.u32 2475754826, %v2346
          %v2353 = vshrl.u32 2131351028, %v2347
          %v2354 = vor.u32 %v2352, %v2353
          %v2355 = vshll.u32 2131351028, %v2346
          %v2356 = vshrl.u32 2102212464, %v2347
          %v2357 = vor.u32 %v2355, %v2356
          %v2358 = vshll.u32 2102212464, %v2346
          %v2359 = vshrl.u32 920167782, %v2347
          %v2360 = vor.u32 %v2358, %v2359
          %v2361 = vshll.u32 920167782, %v2346
          %v2362 = vshrl.u32 1326507024, %v2347
          %v2363 = vor.u32 %v2361, %v2362
          %vm2364 = vcmp.lt.s32.totalorder %v2345, 1
          %vm2365 = vcmp.lt.s32.totalorder %v2345, 2
          %vm2366 = vcmp.lt.s32.totalorder %v2345, 3
          %vm2367 = vcmp.lt.s32.totalorder %v2345, 4
          %v2368 = vsel %vm2364, %v2348, %v2351
          %v2369 = vsel %vm2367, %v2357, 2102212464
          %v2370 = vsel %vm2366, %v2354, %v2369
          %v2371 = vsel %vm2365, %v2368, %v2370
          %v2372 = vsel %vm2364, %v2351, %v2354
          %v2373 = vsel %vm2367, %v2360, 920167782
          %v2374 = vsel %vm2366, %v2357, %v2373
          %v2375 = vsel %vm2365, %v2372, %v2374
          %v2376 = vsel %vm2364, %v2354, %v2357
          %v2377 = vsel %vm2367, %v2363, 1326507024
          %v2378 = vsel %vm2366, %v2360, %v2377
          %v2379 = vsel %vm2365, %v2376, %v2378
          %v2380 = vshll.u32 %v2340, 8
          %v2381 = vand.u32 %v2380, 65535
          %v2382 = vshrl.u32 %v2380, 16
          %v2383 = vand.u32 %v2379, 65535
          %v2384 = vshrl.u32 %v2379, 16
          %v2385 = vmul.u32 %v2381, %v2383
          %v2386 = vmul.u32 %v2381, %v2384
          %v2387 = vmul.u32 %v2382, %v2383
          %v2388 = vmul.u32 %v2382, %v2384
          %v2389 = vshll.u32 %v2386, 16
          %v2390 = vshrl.u32 %v2386, 16
          %v2391 = vshll.u32 %v2387, 16
          %v2392 = vshrl.u32 %v2387, 16
          %vm2393 = vc.u32 %v2385, %v2389
          %v2394 = vsel %vm2393, 1, 0
          %v2395 = vadd.s32 %v2385, %v2389
          %v2396 = vadd.s32 %v2388, %v2394
          %vm2397 = vc.u32 %v2395, %v2391
          %v2398 = vsel %vm2397, 1, 0
          %v2399 = vadd.s32 %v2395, %v2391
          %v2400 = vadd.s32 %v2396, %v2398
          %v2401 = vadd.s32 %v2400, %v2390
          %v2402 = vadd.s32 %v2401, %v2392
          %v2403 = vand.u32 %v2380, 65535
          %v2404 = vshrl.u32 %v2380, 16
          %v2405 = vand.u32 %v2375, 65535
          %v2406 = vshrl.u32 %v2375, 16
          %v2407 = vmul.u32 %v2403, %v2405
          %v2408 = vmul.u32 %v2403, %v2406
          %v2409 = vmul.u32 %v2404, %v2405
          %v2410 = vmul.u32 %v2404, %v2406
          %v2411 = vshll.u32 %v2408, 16
          %v2412 = vshrl.u32 %v2408, 16
          %v2413 = vshll.u32 %v2409, 16
          %v2414 = vshrl.u32 %v2409, 16
          %vm2415 = vc.u32 %v2407, %v2411
          %v2416 = vsel %vm2415, 1, 0
          %v2417 = vadd.s32 %v2407, %v2411
          %v2418 = vadd.s32 %v2410, %v2416
          %vm2419 = vc.u32 %v2417, %v2413
          %v2420 = vsel %vm2419, 1, 0
          %v2421 = vadd.s32 %v2417, %v2413
          %v2422 = vadd.s32 %v2418, %v2420
          %v2423 = vadd.s32 %v2422, %v2412
          %v2424 = vadd.s32 %v2423, %v2414
          %v2425 = vmul.u32 %v2380, %v2371
          %v2426 = vadd.s32 %v2402, %v2421
          %vm2427 = vc.u32 %v2402, %v2421
          %v2428 = vadd.s32 %v2424, 1
          %v2429 = vsel %vm2427, %v2428, %v2424
          %v2430 = vadd.s32 %v2425, %v2429
          %v2431 = vadd.s32 %v2430, 536870912
          %v2432 = vshrl.u32 %v2431, 30
          %v2433 = vshll.u32 %v2432, 30
          %v2434 = vsub.s32 %v2430, %v2433
          %vm2435 = vcmp.lt.s32.totalorder %v2434, 0
          %v2436 = vsub.s32 0, %v2434
          %v2437 = vsel %vm2435, %v2436, %v2434
          %v2438 = vclz %v2437
          %v2439 = vsub.s32 %v2438, 2
          %vm2440 = vcmp.gt.s32.totalorder 0, %v2439
          %v2441 = vsel %vm2440, 0, %v2439
          %v2442 = vsub.s32 32, %v2441
          %v2443 = vshll.u32 %v2434, %v2441
          %v2444 = vshrl.u32 %v2426, %v2442
          %v2445 = vor.u32 %v2443, %v2444
          %v2446 = vsub.s32 4294967266, %v2441
          %v2447 = vadd.s32 %v2446, 127
          %v2448 = vshll.u32 %v2447, 23
          %v2449 = vor.u32 4788187, %v2448
          %v2450 = vand.u32 2147483647, %v2449
          %v2452 = vcvt.s32.f32 %v2445
          %v2453 = vmul.f32 %v2452, %v2450
          %v2454 = vxor.u32 %v2453, 2147483648
          %v2455 = vsel %vm2334, %v2454, %v2453
          %v2456 = vsub.s32 4, %v2432
          %v2457 = vsel %vm2334, %v2456, %v2432
          %v2458 = vsel %vm2333, %v1238, %v2455
          %v2459 = vsel %vm2333, 0, %v2457
          %v2460 = vmul.f32 %v2458, %v2458
          %v2461 = vmul.f32 %v2460, -0.001358992
          %v2462 = vadd.f32 %v2461, 0.041655596
          %v2463 = vmul.f32 %v2460, %v2462
          %v2464 = vadd.f32 %v2463, -0.4999988
          %v2465 = vmul.f32 %v2460, %v2464
          %v2466 = vadd.f32 1.0, %v2465
          %v2467 = vmul.f32 %v2458, %v2458
          %v2468 = vmul.f32 %v2467, -0.00019511016
          %v2469 = vadd.f32 %v2468, 0.008332121
          %v2470 = vmul.f32 %v2467, %v2469
          %v2471 = vadd.f32 %v2470, -0.16666654
          %v2472 = vmul.f32 %v2467, %v2471
          %v2473 = vadd.f32 %v2472, 1.0
          %v2474 = vmul.f32 %v2473, %v2458
          %vm2475 = vweird.f32 %v1238
          %v2476 = vadd.s32 %v2459, 3
          %v2477 = vand.u32 %v2476, 3
          %vm2478 = vcmp.lt.s32.totalorder %v2477, 2
          %vm2479 = vcmp.eq.s32.totalorder %v2477, 0
          %v2480 = vxor.u32 %v2474, 2147483648
          %v2481 = vsel %vm2479, %v2466, %v2480
          %vm2482 = vcmp.eq.s32.totalorder %v2477, 2
          %v2483 = vxor.u32 %v2466, 2147483648
          %v2484 = vsel %vm2482, %v2483, %v2474
          %v2485 = vsel %vm2478, %v2481, %v2484
          %v2486 = vsel %vm2475, nan, %v2485
          %v2487 = vand.u32 2147483647, %v1239
          %vm2488 = vcmp.le.f32.partialorder %v2487, 0.7853982
          %vm2489 = vcmp.lt.s32.totalorder %v1239, 0
          %v2490 = vand.u32 %v1239, 2139095040
          %v2491 = vshrl.u32 %v2490, 23
          %v2492 = vsub.s32 %v2491, 127
          %v2493 = vand.u32 2147483647, %v1239
          %v2494 = vand.u32 %v2493, 8388607
          %v2495 = vor.u32 %v2494, 8388608
          %v2496 = vsub.s32 0, %v2495
          %v2497 = vadd.s32 %v2492, 1
          %vm2498 = vcmp.gt.s32.totalorder %v2497, 0
          %v2499 = vsel %vm2498, %v2497, 0
          %v2500 = vshrl.u32 %v2499, 5
          %v2501 = vand.u32 %v2499, 31
          %v2502 = vsub.s32 32, %v2501
          %v2503 = vshrl.u32 683565275, %v2502
          %v2504 = vshll.u32 683565275, %v2501
          %v2505 = vshrl.u32 2475754826, %v2502
          %v2506 = vor.u32 %v2504, %v2505
          %v2507 = vshll.u32 2475754826, %v2501
          %v2508 = vshrl.u32 2131351028, %v2502
          %v2509 = vor.u32 %v2507, %v2508
          %v2510 = vshll.u32 2131351028, %v2501
          %v2511 = vshrl.u32 2102212464, %v2502
          %v2512 = vor.u32 %v2510, %v2511
          %v2513 = vshll.u32 2102212464, %v2501
          %v2514 = vshrl.u32 920167782, %v2502
          %v2515 = vor.u32 %v2513, %v2514
          %v2516 = vshll.u32 920167782, %v2501
          %v2517 = vshrl.u32 1326507024, %v2502
          %v2518 = vor.u32 %v2516, %v2517
          %vm2519 = vcmp.lt.s32.totalorder %v2500, 1
          %vm2520 = vcmp.lt.s32.totalorder %v2500, 2
          %vm2521 = vcmp.lt.s32.totalorder %v2500, 3
          %vm2522 = vcmp.lt.s32.totalorder %v2500, 4
          %v2523 = vsel %vm2519, %v2503, %v2506
          %v2524 = vsel %vm2522, %v2512, 2102212464
          %v2525 = vsel %vm2521, %v2509, %v2524
          %v2526 = vsel %vm2520, %v2523, %v2525
          %v2527 = vsel %vm2519, %v2506, %v2509
          %v2528 = vsel %vm2522, %v2515, 920167782
          %v2529 = vsel %vm2521, %v2512, %v2528
          %v2530 = vsel %vm2520, %v2527, %v2529
          %v2531 = vsel %vm2519, %v2509, %v2512
          %v2532 = vsel %vm2522, %v2518, 1326507024
          %v2533 = vsel %vm2521, %v2515, %v2532
          %v2534 = vsel %vm2520, %v2531, %v2533
          %v2535 = vshll.u32 %v2495, 8
          %v2536 = vand.u32 %v2535, 65535
          %v2537 = vshrl.u32 %v2535, 16
          %v2538 = vand.u32 %v2534, 65535
          %v2539 = vshrl.u32 %v2534, 16
          %v2540 = vmul.u32 %v2536, %v2538
          %v2541 = vmul.u32 %v2536, %v2539
          %v2542 = vmul.u32 %v2537, %v2538
          %v2543 = vmul.u32 %v2537, %v2539
          %v2544 = vshll.u32 %v2541, 16
          %v2545 = vshrl.u32 %v2541, 16
          %v2546 = vshll.u32 %v2542, 16
          %v2547 = vshrl.u32 %v2542, 16
          %vm2548 = vc.u32 %v2540, %v2544
          %v2549 = vsel %vm2548, 1, 0
          %v2550 = vadd.s32 %v2540, %v2544
          %v2551 = vadd.s32 %v2543, %v2549
          %vm2552 = vc.u32 %v2550, %v2546
          %v2553 = vsel %vm2552, 1, 0
          %v2554 = vadd.s32 %v2550, %v2546
          %v2555 = vadd.s32 %v2551, %v2553
          %v2556 = vadd.s32 %v2555, %v2545
          %v2557 = vadd.s32 %v2556, %v2547
          %v2558 = vand.u32 %v2535, 65535
          %v2559 = vshrl.u32 %v2535, 16
          %v2560 = vand.u32 %v2530, 65535
          %v2561 = vshrl.u32 %v2530, 16
          %v2562 = vmul.u32 %v2558, %v2560
          %v2563 = vmul.u32 %v2558, %v2561
          %v2564 = vmul.u32 %v2559, %v2560
          %v2565 = vmul.u32 %v2559, %v2561
          %v2566 = vshll.u32 %v2563, 16
          %v2567 = vshrl.u32 %v2563, 16
          %v2568 = vshll.u32 %v2564, 16
          %v2569 = vshrl.u32 %v2564, 16
          %vm2570 = vc.u32 %v2562, %v2566
          %v2571 = vsel %vm2570, 1, 0
          %v2572 = vadd.s32 %v2562, %v2566
          %v2573 = vadd.s32 %v2565, %v2571
          %vm2574 = vc.u32 %v2572, %v2568
          %v2575 = vsel %vm2574, 1, 0
          %v2576 = vadd.s32 %v2572, %v2568
          %v2577 = vadd.s32 %v2573, %v2575
          %v2578 = vadd.s32 %v2577, %v2567
          %v2579 = vadd.s32 %v2578, %v2569
          %v2580 = vmul.u32 %v2535, %v2526
          %v2581 = vadd.s32 %v2557, %v2576
          %vm2582 = vc.u32 %v2557, %v2576
          %v2583 = vadd.s32 %v2579, 1
          %v2584 = vsel %vm2582, %v2583, %v2579
          %v2585 = vadd.s32 %v2580, %v2584
          %v2586 = vadd.s32 %v2585, 536870912
          %v2587 = vshrl.u32 %v2586, 30
          %v2588 = vshll.u32 %v2587, 30
          %v2589 = vsub.s32 %v2585, %v2588
          %vm2590 = vcmp.lt.s32.totalorder %v2589, 0
          %v2591 = vsub.s32 0, %v2589
          %v2592 = vsel %vm2590, %v2591, %v2589
          %v2593 = vclz %v2592
          %v2594 = vsub.s32 %v2593, 2
          %vm2595 = vcmp.gt.s32.totalorder 0, %v2594
          %v2596 = vsel %vm2595, 0, %v2594
          %v2597 = vsub.s32 32, %v2596
          %v2598 = vshll.u32 %v2589, %v2596
          %v2599 = vshrl.u32 %v2581, %v2597
          %v2600 = vor.u32 %v2598, %v2599
          %v2601 = vsub.s32 4294967266, %v2596
          %v2602 = vadd.s32 %v2601, 127
          %v2603 = vshll.u32 %v2602, 23
          %v2604 = vor.u32 4788187, %v2603
          %v2605 = vand.u32 2147483647, %v2604
          %v2607 = vcvt.s32.f32 %v2600
          %v2608 = vmul.f32 %v2607, %v2605
          %v2609 = vxor.u32 %v2608, 2147483648
          %v2610 = vsel %vm2489, %v2609, %v2608
          %v2611 = vsub.s32 4, %v2587
          %v2612 = vsel %vm2489, %v2611, %v2587
          %v2613 = vsel %vm2488, %v1239, %v2610
          %v2614 = vsel %vm2488, 0, %v2612
          %v2615 = vmul.f32 %v2613, %v2613
          %v2616 = vmul.f32 %v2615, -0.001358992
          %v2617 = vadd.f32 %v2616, 0.041655596
          %v2618 = vmul.f32 %v2615, %v2617
          %v2619 = vadd.f32 %v2618, -0.4999988
          %v2620 = vmul.f32 %v2615, %v2619
          %v2621 = vadd.f32 1.0, %v2620
          %v2622 = vmul.f32 %v2613, %v2613
          %v2623 = vmul.f32 %v2622, -0.00019511016
          %v2624 = vadd.f32 %v2623, 0.008332121
          %v2625 = vmul.f32 %v2622, %v2624
          %v2626 = vadd.f32 %v2625, -0.16666654
          %v2627 = vmul.f32 %v2622, %v2626
          %v2628 = vadd.f32 %v2627, 1.0
          %v2629 = vmul.f32 %v2628, %v2613
          %vm2630 = vweird.f32 %v1239
          %v2631 = vadd.s32 %v2614, 3
          %v2632 = vand.u32 %v2631, 3
          %vm2633 = vcmp.lt.s32.totalorder %v2632, 2
          %vm2634 = vcmp.eq.s32.totalorder %v2632, 0
          %v2635 = vxor.u32 %v2629, 2147483648
          %v2636 = vsel %vm2634, %v2621, %v2635
          %vm2637 = vcmp.eq.s32.totalorder %v2632, 2
          %v2638 = vxor.u32 %v2621, 2147483648
          %v2639 = vsel %vm2637, %v2638, %v2629
          %v2640 = vsel %vm2633, %v2636, %v2639
          %v2641 = vsel %vm2630, nan, %v2640
          %v2642 = vand.u32 2147483647, %v1240
          %vm2643 = vcmp.le.f32.partialorder %v2642, 0.7853982
          %vm2644 = vcmp.lt.s32.totalorder %v1240, 0
          %v2645 = vand.u32 %v1240, 2139095040
          %v2646 = vshrl.u32 %v2645, 23
          %v2647 = vsub.s32 %v2646, 127
          %v2648 = vand.u32 2147483647, %v1240
          %v2649 = vand.u32 %v2648, 8388607
          %v2650 = vor.u32 %v2649, 8388608
          %v2651 = vsub.s32 0, %v2650
          %v2652 = vadd.s32 %v2647, 1
          %vm2653 = vcmp.gt.s32.totalorder %v2652, 0
          %v2654 = vsel %vm2653, %v2652, 0
          %v2655 = vshrl.u32 %v2654, 5
          %v2656 = vand.u32 %v2654, 31
          %v2657 = vsub.s32 32, %v2656
          %v2658 = vshrl.u32 683565275, %v2657
          %v2659 = vshll.u32 683565275, %v2656
          %v2660 = vshrl.u32 2475754826, %v2657
          %v2661 = vor.u32 %v2659, %v2660
          %v2662 = vshll.u32 2475754826, %v2656
          %v2663 = vshrl.u32 2131351028, %v2657
          %v2664 = vor.u32 %v2662, %v2663
          %v2665 = vshll.u32 2131351028, %v2656
          %v2666 = vshrl.u32 2102212464, %v2657
          %v2667 = vor.u32 %v2665, %v2666
          %v2668 = vshll.u32 2102212464, %v2656
          %v2669 = vshrl.u32 920167782, %v2657
          %v2670 = vor.u32 %v2668, %v2669
          %v2671 = vshll.u32 920167782, %v2656
          %v2672 = vshrl.u32 1326507024, %v2657
          %v2673 = vor.u32 %v2671, %v2672
          %vm2674 = vcmp.lt.s32.totalorder %v2655, 1
          %vm2675 = vcmp.lt.s32.totalorder %v2655, 2
          %vm2676 = vcmp.lt.s32.totalorder %v2655, 3
          %vm2677 = vcmp.lt.s32.totalorder %v2655, 4
          %v2678 = vsel %vm2674, %v2658, %v2661
          %v2679 = vsel %vm2677, %v2667, 2102212464
          %v2680 = vsel %vm2676, %v2664, %v2679
          %v2681 = vsel %vm2675, %v2678, %v2680
          %v2682 = vsel %vm2674, %v2661, %v2664
          %v2683 = vsel %vm2677, %v2670, 920167782
          %v2684 = vsel %vm2676, %v2667, %v2683
          %v2685 = vsel %vm2675, %v2682, %v2684
          %v2686 = vsel %vm2674, %v2664, %v2667
          %v2687 = vsel %vm2677, %v2673, 1326507024
          %v2688 = vsel %vm2676, %v2670, %v2687
          %v2689 = vsel %vm2675, %v2686, %v2688
          %v2690 = vshll.u32 %v2650, 8
          %v2691 = vand.u32 %v2690, 65535
          %v2692 = vshrl.u32 %v2690, 16
          %v2693 = vand.u32 %v2689, 65535
          %v2694 = vshrl.u32 %v2689, 16
          %v2695 = vmul.u32 %v2691, %v2693
          %v2696 = vmul.u32 %v2691, %v2694
          %v2697 = vmul.u32 %v2692, %v2693
          %v2698 = vmul.u32 %v2692, %v2694
          %v2699 = vshll.u32 %v2696, 16
          %v2700 = vshrl.u32 %v2696, 16
          %v2701 = vshll.u32 %v2697, 16
          %v2702 = vshrl.u32 %v2697, 16
          %vm2703 = vc.u32 %v2695, %v2699
          %v2704 = vsel %vm2703, 1, 0
          %v2705 = vadd.s32 %v2695, %v2699
          %v2706 = vadd.s32 %v2698, %v2704
          %vm2707 = vc.u32 %v2705, %v2701
          %v2708 = vsel %vm2707, 1, 0
          %v2709 = vadd.s32 %v2705, %v2701
          %v2710 = vadd.s32 %v2706, %v2708
          %v2711 = vadd.s32 %v2710, %v2700
          %v2712 = vadd.s32 %v2711, %v2702
          %v2713 = vand.u32 %v2690, 65535
          %v2714 = vshrl.u32 %v2690, 16
          %v2715 = vand.u32 %v2685, 65535
          %v2716 = vshrl.u32 %v2685, 16
          %v2717 = vmul.u32 %v2713, %v2715
          %v2718 = vmul.u32 %v2713, %v2716
          %v2719 = vmul.u32 %v2714, %v2715
          %v2720 = vmul.u32 %v2714, %v2716
          %v2721 = vshll.u32 %v2718, 16
          %v2722 = vshrl.u32 %v2718, 16
          %v2723 = vshll.u32 %v2719, 16
          %v2724 = vshrl.u32 %v2719, 16
          %vm2725 = vc.u32 %v2717, %v2721
          %v2726 = vsel %vm2725, 1, 0
          %v2727 = vadd.s32 %v2717, %v2721
          %v2728 = vadd.s32 %v2720, %v2726
          %vm2729 = vc.u32 %v2727, %v2723
          %v2730 = vsel %vm2729, 1, 0
          %v2731 = vadd.s32 %v2727, %v2723
          %v2732 = vadd.s32 %v2728, %v2730
          %v2733 = vadd.s32 %v2732, %v2722
          %v2734 = vadd.s32 %v2733, %v2724
          %v2735 = vmul.u32 %v2690, %v2681
          %v2736 = vadd.s32 %v2712, %v2731
          %vm2737 = vc.u32 %v2712, %v2731
          %v2738 = vadd.s32 %v2734, 1
          %v2739 = vsel %vm2737, %v2738, %v2734
          %v2740 = vadd.s32 %v2735, %v2739
          %v2741 = vadd.s32 %v2740, 536870912
          %v2742 = vshrl.u32 %v2741, 30
          %v2743 = vshll.u32 %v2742, 30
          %v2744 = vsub.s32 %v2740, %v2743
          %vm2745 = vcmp.lt.s32.totalorder %v2744, 0
          %v2746 = vsub.s32 0, %v2744
          %v2747 = vsel %vm2745, %v2746, %v2744
          %v2748 = vclz %v2747
          %v2749 = vsub.s32 %v2748, 2
          %vm2750 = vcmp.gt.s32.totalorder 0, %v2749
          %v2751 = vsel %vm2750, 0, %v2749
          %v2752 = vsub.s32 32, %v2751
          %v2753 = vshll.u32 %v2744, %v2751
          %v2754 = vshrl.u32 %v2736, %v2752
          %v2755 = vor.u32 %v2753, %v2754
          %v2756 = vsub.s32 4294967266, %v2751
          %v2757 = vadd.s32 %v2756, 127
          %v2758 = vshll.u32 %v2757, 23
          %v2759 = vor.u32 4788187, %v2758
          %v2760 = vand.u32 2147483647, %v2759
          %v2762 = vcvt.s32.f32 %v2755
          %v2763 = vmul.f32 %v2762, %v2760
          %v2764 = vxor.u32 %v2763, 2147483648
          %v2765 = vsel %vm2644, %v2764, %v2763
          %v2766 = vsub.s32 4, %v2742
          %v2767 = vsel %vm2644, %v2766, %v2742
          %v2768 = vsel %vm2643, %v1240, %v2765
          %v2769 = vsel %vm2643, 0, %v2767
          %v2770 = vmul.f32 %v2768, %v2768
          %v2771 = vmul.f32 %v2770, -0.001358992
          %v2772 = vadd.f32 %v2771, 0.041655596
          %v2773 = vmul.f32 %v2770, %v2772
          %v2774 = vadd.f32 %v2773, -0.4999988
          %v2775 = vmul.f32 %v2770, %v2774
          %v2776 = vadd.f32 1.0, %v2775
          %v2777 = vmul.f32 %v2768, %v2768
          %v2778 = vmul.f32 %v2777, -0.00019511016
          %v2779 = vadd.f32 %v2778, 0.008332121
          %v2780 = vmul.f32 %v2777, %v2779
          %v2781 = vadd.f32 %v2780, -0.16666654
          %v2782 = vmul.f32 %v2777, %v2781
          %v2783 = vadd.f32 %v2782, 1.0
          %v2784 = vmul.f32 %v2783, %v2768
          %vm2785 = vweird.f32 %v1240
          %v2786 = vadd.s32 %v2769, 3
          %v2787 = vand.u32 %v2786, 3
          %vm2788 = vcmp.lt.s32.totalorder %v2787, 2
          %vm2789 = vcmp.eq.s32.totalorder %v2787, 0
          %v2790 = vxor.u32 %v2784, 2147483648
          %v2791 = vsel %vm2789, %v2776, %v2790
          %vm2792 = vcmp.eq.s32.totalorder %v2787, 2
          %v2793 = vxor.u32 %v2776, 2147483648
          %v2794 = vsel %vm2792, %v2793, %v2784
          %v2795 = vsel %vm2788, %v2791, %v2794
          %v2796 = vsel %vm2785, nan, %v2795
          %v2797 = vand.u32 2147483647, %v1241
          %vm2798 = vcmp.le.f32.partialorder %v2797, 0.7853982
          %vm2799 = vcmp.lt.s32.totalorder %v1241, 0
          %v2800 = vand.u32 %v1241, 2139095040
          %v2801 = vshrl.u32 %v2800, 23
          %v2802 = vsub.s32 %v2801, 127
          %v2803 = vand.u32 2147483647, %v1241
          %v2804 = vand.u32 %v2803, 8388607
          %v2805 = vor.u32 %v2804, 8388608
          %v2806 = vsub.s32 0, %v2805
          %v2807 = vadd.s32 %v2802, 1
          %vm2808 = vcmp.gt.s32.totalorder %v2807, 0
          %v2809 = vsel %vm2808, %v2807, 0
          %v2810 = vshrl.u32 %v2809, 5
          %v2811 = vand.u32 %v2809, 31
          %v2812 = vsub.s32 32, %v2811
          %v2813 = vshrl.u32 683565275, %v2812
          %v2814 = vshll.u32 683565275, %v2811
          %v2815 = vshrl.u32 2475754826, %v2812
          %v2816 = vor.u32 %v2814, %v2815
          %v2817 = vshll.u32 2475754826, %v2811
          %v2818 = vshrl.u32 2131351028, %v2812
          %v2819 = vor.u32 %v2817, %v2818
          %v2820 = vshll.u32 2131351028, %v2811
          %v2821 = vshrl.u32 2102212464, %v2812
          %v2822 = vor.u32 %v2820, %v2821
          %v2823 = vshll.u32 2102212464, %v2811
          %v2824 = vshrl.u32 920167782, %v2812
          %v2825 = vor.u32 %v2823, %v2824
          %v2826 = vshll.u32 920167782, %v2811
          %v2827 = vshrl.u32 1326507024, %v2812
          %v2828 = vor.u32 %v2826, %v2827
          %vm2829 = vcmp.lt.s32.totalorder %v2810, 1
          %vm2830 = vcmp.lt.s32.totalorder %v2810, 2
          %vm2831 = vcmp.lt.s32.totalorder %v2810, 3
          %vm2832 = vcmp.lt.s32.totalorder %v2810, 4
          %v2833 = vsel %vm2829, %v2813, %v2816
          %v2834 = vsel %vm2832, %v2822, 2102212464
          %v2835 = vsel %vm2831, %v2819, %v2834
          %v2836 = vsel %vm2830, %v2833, %v2835
          %v2837 = vsel %vm2829, %v2816, %v2819
          %v2838 = vsel %vm2832, %v2825, 920167782
          %v2839 = vsel %vm2831, %v2822, %v2838
          %v2840 = vsel %vm2830, %v2837, %v2839
          %v2841 = vsel %vm2829, %v2819, %v2822
          %v2842 = vsel %vm2832, %v2828, 1326507024
          %v2843 = vsel %vm2831, %v2825, %v2842
          %v2844 = vsel %vm2830, %v2841, %v2843
          %v2845 = vshll.u32 %v2805, 8
          %v2846 = vand.u32 %v2845, 65535
          %v2847 = vshrl.u32 %v2845, 16
          %v2848 = vand.u32 %v2844, 65535
          %v2849 = vshrl.u32 %v2844, 16
          %v2850 = vmul.u32 %v2846, %v2848
          %v2851 = vmul.u32 %v2846, %v2849
          %v2852 = vmul.u32 %v2847, %v2848
          %v2853 = vmul.u32 %v2847, %v2849
          %v2854 = vshll.u32 %v2851, 16
          %v2855 = vshrl.u32 %v2851, 16
          %v2856 = vshll.u32 %v2852, 16
          %v2857 = vshrl.u32 %v2852, 16
          %vm2858 = vc.u32 %v2850, %v2854
          %v2859 = vsel %vm2858, 1, 0
          %v2860 = vadd.s32 %v2850, %v2854
          %v2861 = vadd.s32 %v2853, %v2859
          %vm2862 = vc.u32 %v2860, %v2856
          %v2863 = vsel %vm2862, 1, 0
          %v2864 = vadd.s32 %v2860, %v2856
          %v2865 = vadd.s32 %v2861, %v2863
          %v2866 = vadd.s32 %v2865, %v2855
          %v2867 = vadd.s32 %v2866, %v2857
          %v2868 = vand.u32 %v2845, 65535
          %v2869 = vshrl.u32 %v2845, 16
          %v2870 = vand.u32 %v2840, 65535
          %v2871 = vshrl.u32 %v2840, 16
          %v2872 = vmul.u32 %v2868, %v2870
          %v2873 = vmul.u32 %v2868, %v2871
          %v2874 = vmul.u32 %v2869, %v2870
          %v2875 = vmul.u32 %v2869, %v2871
          %v2876 = vshll.u32 %v2873, 16
          %v2877 = vshrl.u32 %v2873, 16
          %v2878 = vshll.u32 %v2874, 16
          %v2879 = vshrl.u32 %v2874, 16
          %vm2880 = vc.u32 %v2872, %v2876
          %v2881 = vsel %vm2880, 1, 0
          %v2882 = vadd.s32 %v2872, %v2876
          %v2883 = vadd.s32 %v2875, %v2881
          %vm2884 = vc.u32 %v2882, %v2878
          %v2885 = vsel %vm2884, 1, 0
          %v2886 = vadd.s32 %v2882, %v2878
          %v2887 = vadd.s32 %v2883, %v2885
          %v2888 = vadd.s32 %v2887, %v2877
          %v2889 = vadd.s32 %v2888, %v2879
          %v2890 = vmul.u32 %v2845, %v2836
          %v2891 = vadd.s32 %v2867, %v2886
          %vm2892 = vc.u32 %v2867, %v2886
          %v2893 = vadd.s32 %v2889, 1
          %v2894 = vsel %vm2892, %v2893, %v2889
          %v2895 = vadd.s32 %v2890, %v2894
          %v2896 = vadd.s32 %v2895, 536870912
          %v2897 = vshrl.u32 %v2896, 30
          %v2898 = vshll.u32 %v2897, 30
          %v2899 = vsub.s32 %v2895, %v2898
          %vm2900 = vcmp.lt.s32.totalorder %v2899, 0
          %v2901 = vsub.s32 0, %v2899
          %v2902 = vsel %vm2900, %v2901, %v2899
          %v2903 = vclz %v2902
          %v2904 = vsub.s32 %v2903, 2
          %vm2905 = vcmp.gt.s32.totalorder 0, %v2904
          %v2906 = vsel %vm2905, 0, %v2904
          %v2907 = vsub.s32 32, %v2906
          %v2908 = vshll.u32 %v2899, %v2906
          %v2909 = vshrl.u32 %v2891, %v2907
          %v2910 = vor.u32 %v2908, %v2909
          %v2911 = vsub.s32 4294967266, %v2906
          %v2912 = vadd.s32 %v2911, 127
          %v2913 = vshll.u32 %v2912, 23
          %v2914 = vor.u32 4788187, %v2913
          %v2915 = vand.u32 2147483647, %v2914
          %v2917 = vcvt.s32.f32 %v2910
          %v2918 = vmul.f32 %v2917, %v2915
          %v2919 = vxor.u32 %v2918, 2147483648
          %v2920 = vsel %vm2799, %v2919, %v2918
          %v2921 = vsub.s32 4, %v2897
          %v2922 = vsel %vm2799, %v2921, %v2897
          %v2923 = vsel %vm2798, %v1241, %v2920
          %v2924 = vsel %vm2798, 0, %v2922
          %v2925 = vmul.f32 %v2923, %v2923
          %v2926 = vmul.f32 %v2925, -0.001358992
          %v2927 = vadd.f32 %v2926, 0.041655596
          %v2928 = vmul.f32 %v2925, %v2927
          %v2929 = vadd.f32 %v2928, -0.4999988
          %v2930 = vmul.f32 %v2925, %v2929
          %v2931 = vadd.f32 1.0, %v2930
          %v2932 = vmul.f32 %v2923, %v2923
          %v2933 = vmul.f32 %v2932, -0.00019511016
          %v2934 = vadd.f32 %v2933, 0.008332121
          %v2935 = vmul.f32 %v2932, %v2934
          %v2936 = vadd.f32 %v2935, -0.16666654
          %v2937 = vmul.f32 %v2932, %v2936
          %v2938 = vadd.f32 %v2937, 1.0
          %v2939 = vmul.f32 %v2938, %v2923
          %vm2940 = vweird.f32 %v1241
          %v2941 = vadd.s32 %v2924, 3
          %v2942 = vand.u32 %v2941, 3
          %vm2943 = vcmp.lt.s32.totalorder %v2942, 2
          %vm2944 = vcmp.eq.s32.totalorder %v2942, 0
          %v2945 = vxor.u32 %v2939, 2147483648
          %v2946 = vsel %vm2944, %v2931, %v2945
          %vm2947 = vcmp.eq.s32.totalorder %v2942, 2
          %v2948 = vxor.u32 %v2931, 2147483648
          %v2949 = vsel %vm2947, %v2948, %v2939
          %v2950 = vsel %vm2943, %v2946, %v2949
          %v2951 = vsel %vm2940, nan, %v2950
          %v2952 = vand.u32 2147483647, %v1242
          %vm2953 = vcmp.le.f32.partialorder %v2952, 0.7853982
          %vm2954 = vcmp.lt.s32.totalorder %v1242, 0
          %v2955 = vand.u32 %v1242, 2139095040
          %v2956 = vshrl.u32 %v2955, 23
          %v2957 = vsub.s32 %v2956, 127
          %v2958 = vand.u32 2147483647, %v1242
          %v2959 = vand.u32 %v2958, 8388607
          %v2960 = vor.u32 %v2959, 8388608
          %v2961 = vsub.s32 0, %v2960
          %v2962 = vadd.s32 %v2957, 1
          %vm2963 = vcmp.gt.s32.totalorder %v2962, 0
          %v2964 = vsel %vm2963, %v2962, 0
          %v2965 = vshrl.u32 %v2964, 5
          %v2966 = vand.u32 %v2964, 31
          %v2967 = vsub.s32 32, %v2966
          %v2968 = vshrl.u32 683565275, %v2967
          %v2969 = vshll.u32 683565275, %v2966
          %v2970 = vshrl.u32 2475754826, %v2967
          %v2971 = vor.u32 %v2969, %v2970
          %v2972 = vshll.u32 2475754826, %v2966
          %v2973 = vshrl.u32 2131351028, %v2967
          %v2974 = vor.u32 %v2972, %v2973
          %v2975 = vshll.u32 2131351028, %v2966
          %v2976 = vshrl.u32 2102212464, %v2967
          %v2977 = vor.u32 %v2975, %v2976
          %v2978 = vshll.u32 2102212464, %v2966
          %v2979 = vshrl.u32 920167782, %v2967
          %v2980 = vor.u32 %v2978, %v2979
          %v2981 = vshll.u32 920167782, %v2966
          %v2982 = vshrl.u32 1326507024, %v2967
          %v2983 = vor.u32 %v2981, %v2982
          %vm2984 = vcmp.lt.s32.totalorder %v2965, 1
          %vm2985 = vcmp.lt.s32.totalorder %v2965, 2
          %vm2986 = vcmp.lt.s32.totalorder %v2965, 3
          %vm2987 = vcmp.lt.s32.totalorder %v2965, 4
          %v2988 = vsel %vm2984, %v2968, %v2971
          %v2989 = vsel %vm2987, %v2977, 2102212464
          %v2990 = vsel %vm2986, %v2974, %v2989
          %v2991 = vsel %vm2985, %v2988, %v2990
          %v2992 = vsel %vm2984, %v2971, %v2974
          %v2993 = vsel %vm2987, %v2980, 920167782
          %v2994 = vsel %vm2986, %v2977, %v2993
          %v2995 = vsel %vm2985, %v2992, %v2994
          %v2996 = vsel %vm2984, %v2974, %v2977
          %v2997 = vsel %vm2987, %v2983, 1326507024
          %v2998 = vsel %vm2986, %v2980, %v2997
          %v2999 = vsel %vm2985, %v2996, %v2998
          %v3000 = vshll.u32 %v2960, 8
          %v3001 = vand.u32 %v3000, 65535
          %v3002 = vshrl.u32 %v3000, 16
          %v3003 = vand.u32 %v2999, 65535
          %v3004 = vshrl.u32 %v2999, 16
          %v3005 = vmul.u32 %v3001, %v3003
          %v3006 = vmul.u32 %v3001, %v3004
          %v3007 = vmul.u32 %v3002, %v3003
          %v3008 = vmul.u32 %v3002, %v3004
          %v3009 = vshll.u32 %v3006, 16
          %v3010 = vshrl.u32 %v3006, 16
          %v3011 = vshll.u32 %v3007, 16
          %v3012 = vshrl.u32 %v3007, 16
          %vm3013 = vc.u32 %v3005, %v3009
          %v3014 = vsel %vm3013, 1, 0
          %v3015 = vadd.s32 %v3005, %v3009
          %v3016 = vadd.s32 %v3008, %v3014
          %vm3017 = vc.u32 %v3015, %v3011
          %v3018 = vsel %vm3017, 1, 0
          %v3019 = vadd.s32 %v3015, %v3011
          %v3020 = vadd.s32 %v3016, %v3018
          %v3021 = vadd.s32 %v3020, %v3010
          %v3022 = vadd.s32 %v3021, %v3012
          %v3023 = vand.u32 %v3000, 65535
          %v3024 = vshrl.u32 %v3000, 16
          %v3025 = vand.u32 %v2995, 65535
          %v3026 = vshrl.u32 %v2995, 16
          %v3027 = vmul.u32 %v3023, %v3025
          %v3028 = vmul.u32 %v3023, %v3026
          %v3029 = vmul.u32 %v3024, %v3025
          %v3030 = vmul.u32 %v3024, %v3026
          %v3031 = vshll.u32 %v3028, 16
          %v3032 = vshrl.u32 %v3028, 16
          %v3033 = vshll.u32 %v3029, 16
          %v3034 = vshrl.u32 %v3029, 16
          %vm3035 = vc.u32 %v3027, %v3031
          %v3036 = vsel %vm3035, 1, 0
          %v3037 = vadd.s32 %v3027, %v3031
          %v3038 = vadd.s32 %v3030, %v3036
          %vm3039 = vc.u32 %v3037, %v3033
          %v3040 = vsel %vm3039, 1, 0
          %v3041 = vadd.s32 %v3037, %v3033
          %v3042 = vadd.s32 %v3038, %v3040
          %v3043 = vadd.s32 %v3042, %v3032
          %v3044 = vadd.s32 %v3043, %v3034
          %v3045 = vmul.u32 %v3000, %v2991
          %v3046 = vadd.s32 %v3022, %v3041
          %vm3047 = vc.u32 %v3022, %v3041
          %v3048 = vadd.s32 %v3044, 1
          %v3049 = vsel %vm3047, %v3048, %v3044
          %v3050 = vadd.s32 %v3045, %v3049
          %v3051 = vadd.s32 %v3050, 536870912
          %v3052 = vshrl.u32 %v3051, 30
          %v3053 = vshll.u32 %v3052, 30
          %v3054 = vsub.s32 %v3050, %v3053
          %vm3055 = vcmp.lt.s32.totalorder %v3054, 0
          %v3056 = vsub.s32 0, %v3054
          %v3057 = vsel %vm3055, %v3056, %v3054
          %v3058 = vclz %v3057
          %v3059 = vsub.s32 %v3058, 2
          %vm3060 = vcmp.gt.s32.totalorder 0, %v3059
          %v3061 = vsel %vm3060, 0, %v3059
          %v3062 = vsub.s32 32, %v3061
          %v3063 = vshll.u32 %v3054, %v3061
          %v3064 = vshrl.u32 %v3046, %v3062
          %v3065 = vor.u32 %v3063, %v3064
          %v3066 = vsub.s32 4294967266, %v3061
          %v3067 = vadd.s32 %v3066, 127
          %v3068 = vshll.u32 %v3067, 23
          %v3069 = vor.u32 4788187, %v3068
          %v3070 = vand.u32 2147483647, %v3069
          %v3072 = vcvt.s32.f32 %v3065
          %v3073 = vmul.f32 %v3072, %v3070
          %v3074 = vxor.u32 %v3073, 2147483648
          %v3075 = vsel %vm2954, %v3074, %v3073
          %v3076 = vsub.s32 4, %v3052
          %v3077 = vsel %vm2954, %v3076, %v3052
          %v3078 = vsel %vm2953, %v1242, %v3075
          %v3079 = vsel %vm2953, 0, %v3077
          %v3080 = vmul.f32 %v3078, %v3078
          %v3081 = vmul.f32 %v3080, -0.001358992
          %v3082 = vadd.f32 %v3081, 0.041655596
          %v3083 = vmul.f32 %v3080, %v3082
          %v3084 = vadd.f32 %v3083, -0.4999988
          %v3085 = vmul.f32 %v3080, %v3084
          %v3086 = vadd.f32 1.0, %v3085
          %v3087 = vmul.f32 %v3078, %v3078
          %v3088 = vmul.f32 %v3087, -0.00019511016
          %v3089 = vadd.f32 %v3088, 0.008332121
          %v3090 = vmul.f32 %v3087, %v3089
          %v3091 = vadd.f32 %v3090, -0.16666654
          %v3092 = vmul.f32 %v3087, %v3091
          %v3093 = vadd.f32 %v3092, 1.0
          %v3094 = vmul.f32 %v3093, %v3078
          %vm3095 = vweird.f32 %v1242
          %v3096 = vadd.s32 %v3079, 3
          %v3097 = vand.u32 %v3096, 3
          %vm3098 = vcmp.lt.s32.totalorder %v3097, 2
          %vm3099 = vcmp.eq.s32.totalorder %v3097, 0
          %v3100 = vxor.u32 %v3094, 2147483648
          %v3101 = vsel %vm3099, %v3086, %v3100
          %vm3102 = vcmp.eq.s32.totalorder %v3097, 2
          %v3103 = vxor.u32 %v3086, 2147483648
          %v3104 = vsel %vm3102, %v3103, %v3094
          %v3105 = vsel %vm3098, %v3101, %v3104
          %v3106 = vsel %vm3095, nan, %v3105
          %v3107 = vand.u32 2147483647, %v1243
          %vm3108 = vcmp.le.f32.partialorder %v3107, 0.7853982
          %vm3109 = vcmp.lt.s32.totalorder %v1243, 0
          %v3110 = vand.u32 %v1243, 2139095040
          %v3111 = vshrl.u32 %v3110, 23
          %v3112 = vsub.s32 %v3111, 127
          %v3113 = vand.u32 2147483647, %v1243
          %v3114 = vand.u32 %v3113, 8388607
          %v3115 = vor.u32 %v3114, 8388608
          %v3116 = vsub.s32 0, %v3115
          %v3117 = vadd.s32 %v3112, 1
          %vm3118 = vcmp.gt.s32.totalorder %v3117, 0
          %v3119 = vsel %vm3118, %v3117, 0
          %v3120 = vshrl.u32 %v3119, 5
          %v3121 = vand.u32 %v3119, 31
          %v3122 = vsub.s32 32, %v3121
          %v3123 = vshrl.u32 683565275, %v3122
          %v3124 = vshll.u32 683565275, %v3121
          %v3125 = vshrl.u32 2475754826, %v3122
          %v3126 = vor.u32 %v3124, %v3125
          %v3127 = vshll.u32 2475754826, %v3121
          %v3128 = vshrl.u32 2131351028, %v3122
          %v3129 = vor.u32 %v3127, %v3128
          %v3130 = vshll.u32 2131351028, %v3121
          %v3131 = vshrl.u32 2102212464, %v3122
          %v3132 = vor.u32 %v3130, %v3131
          %v3133 = vshll.u32 2102212464, %v3121
          %v3134 = vshrl.u32 920167782, %v3122
          %v3135 = vor.u32 %v3133, %v3134
          %v3136 = vshll.u32 920167782, %v3121
          %v3137 = vshrl.u32 1326507024, %v3122
          %v3138 = vor.u32 %v3136, %v3137
          %vm3139 = vcmp.lt.s32.totalorder %v3120, 1
          %vm3140 = vcmp.lt.s32.totalorder %v3120, 2
          %vm3141 = vcmp.lt.s32.totalorder %v3120, 3
          %vm3142 = vcmp.lt.s32.totalorder %v3120, 4
          %v3143 = vsel %vm3139, %v3123, %v3126
          %v3144 = vsel %vm3142, %v3132, 2102212464
          %v3145 = vsel %vm3141, %v3129, %v3144
          %v3146 = vsel %vm3140, %v3143, %v3145
          %v3147 = vsel %vm3139, %v3126, %v3129
          %v3148 = vsel %vm3142, %v3135, 920167782
          %v3149 = vsel %vm3141, %v3132, %v3148
          %v3150 = vsel %vm3140, %v3147, %v3149
          %v3151 = vsel %vm3139, %v3129, %v3132
          %v3152 = vsel %vm3142, %v3138, 1326507024
          %v3153 = vsel %vm3141, %v3135, %v3152
          %v3154 = vsel %vm3140, %v3151, %v3153
          %v3155 = vshll.u32 %v3115, 8
          %v3156 = vand.u32 %v3155, 65535
          %v3157 = vshrl.u32 %v3155, 16
          %v3158 = vand.u32 %v3154, 65535
          %v3159 = vshrl.u32 %v3154, 16
          %v3160 = vmul.u32 %v3156, %v3158
          %v3161 = vmul.u32 %v3156, %v3159
          %v3162 = vmul.u32 %v3157, %v3158
          %v3163 = vmul.u32 %v3157, %v3159
          %v3164 = vshll.u32 %v3161, 16
          %v3165 = vshrl.u32 %v3161, 16
          %v3166 = vshll.u32 %v3162, 16
          %v3167 = vshrl.u32 %v3162, 16
          %vm3168 = vc.u32 %v3160, %v3164
          %v3169 = vsel %vm3168, 1, 0
          %v3170 = vadd.s32 %v3160, %v3164
          %v3171 = vadd.s32 %v3163, %v3169
          %vm3172 = vc.u32 %v3170, %v3166
          %v3173 = vsel %vm3172, 1, 0
          %v3174 = vadd.s32 %v3170, %v3166
          %v3175 = vadd.s32 %v3171, %v3173
          %v3176 = vadd.s32 %v3175, %v3165
          %v3177 = vadd.s32 %v3176, %v3167
          %v3178 = vand.u32 %v3155, 65535
          %v3179 = vshrl.u32 %v3155, 16
          %v3180 = vand.u32 %v3150, 65535
          %v3181 = vshrl.u32 %v3150, 16
          %v3182 = vmul.u32 %v3178, %v3180
          %v3183 = vmul.u32 %v3178, %v3181
          %v3184 = vmul.u32 %v3179, %v3180
          %v3185 = vmul.u32 %v3179, %v3181
          %v3186 = vshll.u32 %v3183, 16
          %v3187 = vshrl.u32 %v3183, 16
          %v3188 = vshll.u32 %v3184, 16
          %v3189 = vshrl.u32 %v3184, 16
          %vm3190 = vc.u32 %v3182, %v3186
          %v3191 = vsel %vm3190, 1, 0
          %v3192 = vadd.s32 %v3182, %v3186
          %v3193 = vadd.s32 %v3185, %v3191
          %vm3194 = vc.u32 %v3192, %v3188
          %v3195 = vsel %vm3194, 1, 0
          %v3196 = vadd.s32 %v3192, %v3188
          %v3197 = vadd.s32 %v3193, %v3195
          %v3198 = vadd.s32 %v3197, %v3187
          %v3199 = vadd.s32 %v3198, %v3189
          %v3200 = vmul.u32 %v3155, %v3146
          %v3201 = vadd.s32 %v3177, %v3196
          %vm3202 = vc.u32 %v3177, %v3196
          %v3203 = vadd.s32 %v3199, 1
          %v3204 = vsel %vm3202, %v3203, %v3199
          %v3205 = vadd.s32 %v3200, %v3204
          %v3206 = vadd.s32 %v3205, 536870912
          %v3207 = vshrl.u32 %v3206, 30
          %v3208 = vshll.u32 %v3207, 30
          %v3209 = vsub.s32 %v3205, %v3208
          %vm3210 = vcmp.lt.s32.totalorder %v3209, 0
          %v3211 = vsub.s32 0, %v3209
          %v3212 = vsel %vm3210, %v3211, %v3209
          %v3213 = vclz %v3212
          %v3214 = vsub.s32 %v3213, 2
          %vm3215 = vcmp.gt.s32.totalorder 0, %v3214
          %v3216 = vsel %vm3215, 0, %v3214
          %v3217 = vsub.s32 32, %v3216
          %v3218 = vshll.u32 %v3209, %v3216
          %v3219 = vshrl.u32 %v3201, %v3217
          %v3220 = vor.u32 %v3218, %v3219
          %v3221 = vsub.s32 4294967266, %v3216
          %v3222 = vadd.s32 %v3221, 127
          %v3223 = vshll.u32 %v3222, 23
          %v3224 = vor.u32 4788187, %v3223
          %v3225 = vand.u32 2147483647, %v3224
          %v3227 = vcvt.s32.f32 %v3220
          %v3228 = vmul.f32 %v3227, %v3225
          %v3229 = vxor.u32 %v3228, 2147483648
          %v3230 = vsel %vm3109, %v3229, %v3228
          %v3231 = vsub.s32 4, %v3207
          %v3232 = vsel %vm3109, %v3231, %v3207
          %v3233 = vsel %vm3108, %v1243, %v3230
          %v3234 = vsel %vm3108, 0, %v3232
          %v3235 = vmul.f32 %v3233, %v3233
          %v3236 = vmul.f32 %v3235, -0.001358992
          %v3237 = vadd.f32 %v3236, 0.041655596
          %v3238 = vmul.f32 %v3235, %v3237
          %v3239 = vadd.f32 %v3238, -0.4999988
          %v3240 = vmul.f32 %v3235, %v3239
          %v3241 = vadd.f32 1.0, %v3240
          %v3242 = vmul.f32 %v3233, %v3233
          %v3243 = vmul.f32 %v3242, -0.00019511016
          %v3244 = vadd.f32 %v3243, 0.008332121
          %v3245 = vmul.f32 %v3242, %v3244
          %v3246 = vadd.f32 %v3245, -0.16666654
          %v3247 = vmul.f32 %v3242, %v3246
          %v3248 = vadd.f32 %v3247, 1.0
          %v3249 = vmul.f32 %v3248, %v3233
          %vm3250 = vweird.f32 %v1243
          %v3251 = vadd.s32 %v3234, 3
          %v3252 = vand.u32 %v3251, 3
          %vm3253 = vcmp.lt.s32.totalorder %v3252, 2
          %vm3254 = vcmp.eq.s32.totalorder %v3252, 0
          %v3255 = vxor.u32 %v3249, 2147483648
          %v3256 = vsel %vm3254, %v3241, %v3255
          %vm3257 = vcmp.eq.s32.totalorder %v3252, 2
          %v3258 = vxor.u32 %v3241, 2147483648
          %v3259 = vsel %vm3257, %v3258, %v3249
          %v3260 = vsel %vm3253, %v3256, %v3259
          %v3261 = vsel %vm3250, nan, %v3260
          %v3262 = vand.u32 2147483647, %v1244
          %vm3263 = vcmp.le.f32.partialorder %v3262, 0.7853982
          %vm3264 = vcmp.lt.s32.totalorder %v1244, 0
          %v3265 = vand.u32 %v1244, 2139095040
          %v3266 = vshrl.u32 %v3265, 23
          %v3267 = vsub.s32 %v3266, 127
          %v3268 = vand.u32 2147483647, %v1244
          %v3269 = vand.u32 %v3268, 8388607
          %v3270 = vor.u32 %v3269, 8388608
          %v3271 = vsub.s32 0, %v3270
          %v3272 = vadd.s32 %v3267, 1
          %vm3273 = vcmp.gt.s32.totalorder %v3272, 0
          %v3274 = vsel %vm3273, %v3272, 0
          %v3275 = vshrl.u32 %v3274, 5
          %v3276 = vand.u32 %v3274, 31
          %v3277 = vsub.s32 32, %v3276
          %v3278 = vshrl.u32 683565275, %v3277
          %v3279 = vshll.u32 683565275, %v3276
          %v3280 = vshrl.u32 2475754826, %v3277
          %v3281 = vor.u32 %v3279, %v3280
          %v3282 = vshll.u32 2475754826, %v3276
          %v3283 = vshrl.u32 2131351028, %v3277
          %v3284 = vor.u32 %v3282, %v3283
          %v3285 = vshll.u32 2131351028, %v3276
          %v3286 = vshrl.u32 2102212464, %v3277
          %v3287 = vor.u32 %v3285, %v3286
          %v3288 = vshll.u32 2102212464, %v3276
          %v3289 = vshrl.u32 920167782, %v3277
          %v3290 = vor.u32 %v3288, %v3289
          %v3291 = vshll.u32 920167782, %v3276
          %v3292 = vshrl.u32 1326507024, %v3277
          %v3293 = vor.u32 %v3291, %v3292
          %vm3294 = vcmp.lt.s32.totalorder %v3275, 1
          %vm3295 = vcmp.lt.s32.totalorder %v3275, 2
          %vm3296 = vcmp.lt.s32.totalorder %v3275, 3
          %vm3297 = vcmp.lt.s32.totalorder %v3275, 4
          %v3298 = vsel %vm3294, %v3278, %v3281
          %v3299 = vsel %vm3297, %v3287, 2102212464
          %v3300 = vsel %vm3296, %v3284, %v3299
          %v3301 = vsel %vm3295, %v3298, %v3300
          %v3302 = vsel %vm3294, %v3281, %v3284
          %v3303 = vsel %vm3297, %v3290, 920167782
          %v3304 = vsel %vm3296, %v3287, %v3303
          %v3305 = vsel %vm3295, %v3302, %v3304
          %v3306 = vsel %vm3294, %v3284, %v3287
          %v3307 = vsel %vm3297, %v3293, 1326507024
          %v3308 = vsel %vm3296, %v3290, %v3307
          %v3309 = vsel %vm3295, %v3306, %v3308
          %v3310 = vshll.u32 %v3270, 8
          %v3311 = vand.u32 %v3310, 65535
          %v3312 = vshrl.u32 %v3310, 16
          %v3313 = vand.u32 %v3309, 65535
          %v3314 = vshrl.u32 %v3309, 16
          %v3315 = vmul.u32 %v3311, %v3313
          %v3316 = vmul.u32 %v3311, %v3314
          %v3317 = vmul.u32 %v3312, %v3313
          %v3318 = vmul.u32 %v3312, %v3314
          %v3319 = vshll.u32 %v3316, 16
          %v3320 = vshrl.u32 %v3316, 16
          %v3321 = vshll.u32 %v3317, 16
          %v3322 = vshrl.u32 %v3317, 16
          %vm3323 = vc.u32 %v3315, %v3319
          %v3324 = vsel %vm3323, 1, 0
          %v3325 = vadd.s32 %v3315, %v3319
          %v3326 = vadd.s32 %v3318, %v3324
          %vm3327 = vc.u32 %v3325, %v3321
          %v3328 = vsel %vm3327, 1, 0
          %v3329 = vadd.s32 %v3325, %v3321
          %v3330 = vadd.s32 %v3326, %v3328
          %v3331 = vadd.s32 %v3330, %v3320
          %v3332 = vadd.s32 %v3331, %v3322
          %v3333 = vand.u32 %v3310, 65535
          %v3334 = vshrl.u32 %v3310, 16
          %v3335 = vand.u32 %v3305, 65535
          %v3336 = vshrl.u32 %v3305, 16
          %v3337 = vmul.u32 %v3333, %v3335
          %v3338 = vmul.u32 %v3333, %v3336
          %v3339 = vmul.u32 %v3334, %v3335
          %v3340 = vmul.u32 %v3334, %v3336
          %v3341 = vshll.u32 %v3338, 16
          %v3342 = vshrl.u32 %v3338, 16
          %v3343 = vshll.u32 %v3339, 16
          %v3344 = vshrl.u32 %v3339, 16
          %vm3345 = vc.u32 %v3337, %v3341
          %v3346 = vsel %vm3345, 1, 0
          %v3347 = vadd.s32 %v3337, %v3341
          %v3348 = vadd.s32 %v3340, %v3346
          %vm3349 = vc.u32 %v3347, %v3343
          %v3350 = vsel %vm3349, 1, 0
          %v3351 = vadd.s32 %v3347, %v3343
          %v3352 = vadd.s32 %v3348, %v3350
          %v3353 = vadd.s32 %v3352, %v3342
          %v3354 = vadd.s32 %v3353, %v3344
          %v3355 = vmul.u32 %v3310, %v3301
          %v3356 = vadd.s32 %v3332, %v3351
          %vm3357 = vc.u32 %v3332, %v3351
          %v3358 = vadd.s32 %v3354, 1
          %v3359 = vsel %vm3357, %v3358, %v3354
          %v3360 = vadd.s32 %v3355, %v3359
          %v3361 = vadd.s32 %v3360, 536870912
          %v3362 = vshrl.u32 %v3361, 30
          %v3363 = vshll.u32 %v3362, 30
          %v3364 = vsub.s32 %v3360, %v3363
          %vm3365 = vcmp.lt.s32.totalorder %v3364, 0
          %v3366 = vsub.s32 0, %v3364
          %v3367 = vsel %vm3365, %v3366, %v3364
          %v3368 = vclz %v3367
          %v3369 = vsub.s32 %v3368, 2
          %vm3370 = vcmp.gt.s32.totalorder 0, %v3369
          %v3371 = vsel %vm3370, 0, %v3369
          %v3372 = vsub.s32 32, %v3371
          %v3373 = vshll.u32 %v3364, %v3371
          %v3374 = vshrl.u32 %v3356, %v3372
          %v3375 = vor.u32 %v3373, %v3374
          %v3376 = vsub.s32 4294967266, %v3371
          %v3377 = vadd.s32 %v3376, 127
          %v3378 = vshll.u32 %v3377, 23
          %v3379 = vor.u32 4788187, %v3378
          %v3380 = vand.u32 2147483647, %v3379
          %v3382 = vcvt.s32.f32 %v3375
          %v3383 = vmul.f32 %v3382, %v3380
          %v3384 = vxor.u32 %v3383, 2147483648
          %v3385 = vsel %vm3264, %v3384, %v3383
          %v3386 = vsub.s32 4, %v3362
          %v3387 = vsel %vm3264, %v3386, %v3362
          %v3388 = vsel %vm3263, %v1244, %v3385
          %v3389 = vsel %vm3263, 0, %v3387
          %v3390 = vmul.f32 %v3388, %v3388
          %v3391 = vmul.f32 %v3390, -0.001358992
          %v3392 = vadd.f32 %v3391, 0.041655596
          %v3393 = vmul.f32 %v3390, %v3392
          %v3394 = vadd.f32 %v3393, -0.4999988
          %v3395 = vmul.f32 %v3390, %v3394
          %v3396 = vadd.f32 1.0, %v3395
          %v3397 = vmul.f32 %v3388, %v3388
          %v3398 = vmul.f32 %v3397, -0.00019511016
          %v3399 = vadd.f32 %v3398, 0.008332121
          %v3400 = vmul.f32 %v3397, %v3399
          %v3401 = vadd.f32 %v3400, -0.16666654
          %v3402 = vmul.f32 %v3397, %v3401
          %v3403 = vadd.f32 %v3402, 1.0
          %v3404 = vmul.f32 %v3403, %v3388
          %vm3405 = vweird.f32 %v1244
          %v3406 = vadd.s32 %v3389, 3
          %v3407 = vand.u32 %v3406, 3
          %vm3408 = vcmp.lt.s32.totalorder %v3407, 2
          %vm3409 = vcmp.eq.s32.totalorder %v3407, 0
          %v3410 = vxor.u32 %v3404, 2147483648
          %v3411 = vsel %vm3409, %v3396, %v3410
          %vm3412 = vcmp.eq.s32.totalorder %v3407, 2
          %v3413 = vxor.u32 %v3396, 2147483648
          %v3414 = vsel %vm3412, %v3413, %v3404
          %v3415 = vsel %vm3408, %v3411, %v3414
          %v3416 = vsel %vm3405, nan, %v3415
          %v3417 = vand.u32 2147483647, %v1245
          %vm3418 = vcmp.le.f32.partialorder %v3417, 0.7853982
          %vm3419 = vcmp.lt.s32.totalorder %v1245, 0
          %v3420 = vand.u32 %v1245, 2139095040
          %v3421 = vshrl.u32 %v3420, 23
          %v3422 = vsub.s32 %v3421, 127
          %v3423 = vand.u32 2147483647, %v1245
          %v3424 = vand.u32 %v3423, 8388607
          %v3425 = vor.u32 %v3424, 8388608
          %v3426 = vsub.s32 0, %v3425
          %v3427 = vadd.s32 %v3422, 1
          %vm3428 = vcmp.gt.s32.totalorder %v3427, 0
          %v3429 = vsel %vm3428, %v3427, 0
          %v3430 = vshrl.u32 %v3429, 5
          %v3431 = vand.u32 %v3429, 31
          %v3432 = vsub.s32 32, %v3431
          %v3433 = vshrl.u32 683565275, %v3432
          %v3434 = vshll.u32 683565275, %v3431
          %v3435 = vshrl.u32 2475754826, %v3432
          %v3436 = vor.u32 %v3434, %v3435
          %v3437 = vshll.u32 2475754826, %v3431
          %v3438 = vshrl.u32 2131351028, %v3432
          %v3439 = vor.u32 %v3437, %v3438
          %v3440 = vshll.u32 2131351028, %v3431
          %v3441 = vshrl.u32 2102212464, %v3432
          %v3442 = vor.u32 %v3440, %v3441
          %v3443 = vshll.u32 2102212464, %v3431
          %v3444 = vshrl.u32 920167782, %v3432
          %v3445 = vor.u32 %v3443, %v3444
          %v3446 = vshll.u32 920167782, %v3431
          %v3447 = vshrl.u32 1326507024, %v3432
          %v3448 = vor.u32 %v3446, %v3447
          %vm3449 = vcmp.lt.s32.totalorder %v3430, 1
          %vm3450 = vcmp.lt.s32.totalorder %v3430, 2
          %vm3451 = vcmp.lt.s32.totalorder %v3430, 3
          %vm3452 = vcmp.lt.s32.totalorder %v3430, 4
          %v3453 = vsel %vm3449, %v3433, %v3436
          %v3454 = vsel %vm3452, %v3442, 2102212464
          %v3455 = vsel %vm3451, %v3439, %v3454
          %v3456 = vsel %vm3450, %v3453, %v3455
          %v3457 = vsel %vm3449, %v3436, %v3439
          %v3458 = vsel %vm3452, %v3445, 920167782
          %v3459 = vsel %vm3451, %v3442, %v3458
          %v3460 = vsel %vm3450, %v3457, %v3459
          %v3461 = vsel %vm3449, %v3439, %v3442
          %v3462 = vsel %vm3452, %v3448, 1326507024
          %v3463 = vsel %vm3451, %v3445, %v3462
          %v3464 = vsel %vm3450, %v3461, %v3463
          %v3465 = vshll.u32 %v3425, 8
          %v3466 = vand.u32 %v3465, 65535
          %v3467 = vshrl.u32 %v3465, 16
          %v3468 = vand.u32 %v3464, 65535
          %v3469 = vshrl.u32 %v3464, 16
          %v3470 = vmul.u32 %v3466, %v3468
          %v3471 = vmul.u32 %v3466, %v3469
          %v3472 = vmul.u32 %v3467, %v3468
          %v3473 = vmul.u32 %v3467, %v3469
          %v3474 = vshll.u32 %v3471, 16
          %v3475 = vshrl.u32 %v3471, 16
          %v3476 = vshll.u32 %v3472, 16
          %v3477 = vshrl.u32 %v3472, 16
          %vm3478 = vc.u32 %v3470, %v3474
          %v3479 = vsel %vm3478, 1, 0
          %v3480 = vadd.s32 %v3470, %v3474
          %v3481 = vadd.s32 %v3473, %v3479
          %vm3482 = vc.u32 %v3480, %v3476
          %v3483 = vsel %vm3482, 1, 0
          %v3484 = vadd.s32 %v3480, %v3476
          %v3485 = vadd.s32 %v3481, %v3483
          %v3486 = vadd.s32 %v3485, %v3475
          %v3487 = vadd.s32 %v3486, %v3477
          %v3488 = vand.u32 %v3465, 65535
          %v3489 = vshrl.u32 %v3465, 16
          %v3490 = vand.u32 %v3460, 65535
          %v3491 = vshrl.u32 %v3460, 16
          %v3492 = vmul.u32 %v3488, %v3490
          %v3493 = vmul.u32 %v3488, %v3491
          %v3494 = vmul.u32 %v3489, %v3490
          %v3495 = vmul.u32 %v3489, %v3491
          %v3496 = vshll.u32 %v3493, 16
          %v3497 = vshrl.u32 %v3493, 16
          %v3498 = vshll.u32 %v3494, 16
          %v3499 = vshrl.u32 %v3494, 16
          %vm3500 = vc.u32 %v3492, %v3496
          %v3501 = vsel %vm3500, 1, 0
          %v3502 = vadd.s32 %v3492, %v3496
          %v3503 = vadd.s32 %v3495, %v3501
          %vm3504 = vc.u32 %v3502, %v3498
          %v3505 = vsel %vm3504, 1, 0
          %v3506 = vadd.s32 %v3502, %v3498
          %v3507 = vadd.s32 %v3503, %v3505
          %v3508 = vadd.s32 %v3507, %v3497
          %v3509 = vadd.s32 %v3508, %v3499
          %v3510 = vmul.u32 %v3465, %v3456
          %v3511 = vadd.s32 %v3487, %v3506
          %vm3512 = vc.u32 %v3487, %v3506
          %v3513 = vadd.s32 %v3509, 1
          %v3514 = vsel %vm3512, %v3513, %v3509
          %v3515 = vadd.s32 %v3510, %v3514
          %v3516 = vadd.s32 %v3515, 536870912
          %v3517 = vshrl.u32 %v3516, 30
          %v3518 = vshll.u32 %v3517, 30
          %v3519 = vsub.s32 %v3515, %v3518
          %vm3520 = vcmp.lt.s32.totalorder %v3519, 0
          %v3521 = vsub.s32 0, %v3519
          %v3522 = vsel %vm3520, %v3521, %v3519
          %v3523 = vclz %v3522
          %v3524 = vsub.s32 %v3523, 2
          %vm3525 = vcmp.gt.s32.totalorder 0, %v3524
          %v3526 = vsel %vm3525, 0, %v3524
          %v3527 = vsub.s32 32, %v3526
          %v3528 = vshll.u32 %v3519, %v3526
          %v3529 = vshrl.u32 %v3511, %v3527
          %v3530 = vor.u32 %v3528, %v3529
          %v3531 = vsub.s32 4294967266, %v3526
          %v3532 = vadd.s32 %v3531, 127
          %v3533 = vshll.u32 %v3532, 23
          %v3534 = vor.u32 4788187, %v3533
          %v3535 = vand.u32 2147483647, %v3534
          %v3537 = vcvt.s32.f32 %v3530
          %v3538 = vmul.f32 %v3537, %v3535
          %v3539 = vxor.u32 %v3538, 2147483648
          %v3540 = vsel %vm3419, %v3539, %v3538
          %v3541 = vsub.s32 4, %v3517
          %v3542 = vsel %vm3419, %v3541, %v3517
          %v3543 = vsel %vm3418, %v1245, %v3540
          %v3544 = vsel %vm3418, 0, %v3542
          %v3545 = vmul.f32 %v3543, %v3543
          %v3546 = vmul.f32 %v3545, -0.001358992
          %v3547 = vadd.f32 %v3546, 0.041655596
          %v3548 = vmul.f32 %v3545, %v3547
          %v3549 = vadd.f32 %v3548, -0.4999988
          %v3550 = vmul.f32 %v3545, %v3549
          %v3551 = vadd.f32 1.0, %v3550
          %v3552 = vmul.f32 %v3543, %v3543
          %v3553 = vmul.f32 %v3552, -0.00019511016
          %v3554 = vadd.f32 %v3553, 0.008332121
          %v3555 = vmul.f32 %v3552, %v3554
          %v3556 = vadd.f32 %v3555, -0.16666654
          %v3557 = vmul.f32 %v3552, %v3556
          %v3558 = vadd.f32 %v3557, 1.0
          %v3559 = vmul.f32 %v3558, %v3543
          %vm3560 = vweird.f32 %v1245
          %v3561 = vadd.s32 %v3544, 3
          %v3562 = vand.u32 %v3561, 3
          %vm3563 = vcmp.lt.s32.totalorder %v3562, 2
          %vm3564 = vcmp.eq.s32.totalorder %v3562, 0
          %v3565 = vxor.u32 %v3559, 2147483648
          %v3566 = vsel %vm3564, %v3551, %v3565
          %vm3567 = vcmp.eq.s32.totalorder %v3562, 2
          %v3568 = vxor.u32 %v3551, 2147483648
          %v3569 = vsel %vm3567, %v3568, %v3559
          %v3570 = vsel %vm3563, %v3566, %v3569
          %v3571 = vsel %vm3560, nan, %v3570
          %v3572 = vand.u32 2147483647, %v1246
          %vm3573 = vcmp.le.f32.partialorder %v3572, 0.7853982
          %vm3574 = vcmp.lt.s32.totalorder %v1246, 0
          %v3575 = vand.u32 %v1246, 2139095040
          %v3576 = vshrl.u32 %v3575, 23
          %v3577 = vsub.s32 %v3576, 127
          %v3578 = vand.u32 2147483647, %v1246
          %v3579 = vand.u32 %v3578, 8388607
          %v3580 = vor.u32 %v3579, 8388608
          %v3581 = vsub.s32 0, %v3580
          %v3582 = vadd.s32 %v3577, 1
          %vm3583 = vcmp.gt.s32.totalorder %v3582, 0
          %v3584 = vsel %vm3583, %v3582, 0
          %v3585 = vshrl.u32 %v3584, 5
          %v3586 = vand.u32 %v3584, 31
          %v3587 = vsub.s32 32, %v3586
          %v3588 = vshrl.u32 683565275, %v3587
          %v3589 = vshll.u32 683565275, %v3586
          %v3590 = vshrl.u32 2475754826, %v3587
          %v3591 = vor.u32 %v3589, %v3590
          %v3592 = vshll.u32 2475754826, %v3586
          %v3593 = vshrl.u32 2131351028, %v3587
          %v3594 = vor.u32 %v3592, %v3593
          %v3595 = vshll.u32 2131351028, %v3586
          %v3596 = vshrl.u32 2102212464, %v3587
          %v3597 = vor.u32 %v3595, %v3596
          %v3598 = vshll.u32 2102212464, %v3586
          %v3599 = vshrl.u32 920167782, %v3587
          %v3600 = vor.u32 %v3598, %v3599
          %v3601 = vshll.u32 920167782, %v3586
          %v3602 = vshrl.u32 1326507024, %v3587
          %v3603 = vor.u32 %v3601, %v3602
          %vm3604 = vcmp.lt.s32.totalorder %v3585, 1
          %vm3605 = vcmp.lt.s32.totalorder %v3585, 2
          %vm3606 = vcmp.lt.s32.totalorder %v3585, 3
          %vm3607 = vcmp.lt.s32.totalorder %v3585, 4
          %v3608 = vsel %vm3604, %v3588, %v3591
          %v3609 = vsel %vm3607, %v3597, 2102212464
          %v3610 = vsel %vm3606, %v3594, %v3609
          %v3611 = vsel %vm3605, %v3608, %v3610
          %v3612 = vsel %vm3604, %v3591, %v3594
          %v3613 = vsel %vm3607, %v3600, 920167782
          %v3614 = vsel %vm3606, %v3597, %v3613
          %v3615 = vsel %vm3605, %v3612, %v3614
          %v3616 = vsel %vm3604, %v3594, %v3597
          %v3617 = vsel %vm3607, %v3603, 1326507024
          %v3618 = vsel %vm3606, %v3600, %v3617
          %v3619 = vsel %vm3605, %v3616, %v3618
          %v3620 = vshll.u32 %v3580, 8
          %v3621 = vand.u32 %v3620, 65535
          %v3622 = vshrl.u32 %v3620, 16
          %v3623 = vand.u32 %v3619, 65535
          %v3624 = vshrl.u32 %v3619, 16
          %v3625 = vmul.u32 %v3621, %v3623
          %v3626 = vmul.u32 %v3621, %v3624
          %v3627 = vmul.u32 %v3622, %v3623
          %v3628 = vmul.u32 %v3622, %v3624
          %v3629 = vshll.u32 %v3626, 16
          %v3630 = vshrl.u32 %v3626, 16
          %v3631 = vshll.u32 %v3627, 16
          %v3632 = vshrl.u32 %v3627, 16
          %vm3633 = vc.u32 %v3625, %v3629
          %v3634 = vsel %vm3633, 1, 0
          %v3635 = vadd.s32 %v3625, %v3629
          %v3636 = vadd.s32 %v3628, %v3634
          %vm3637 = vc.u32 %v3635, %v3631
          %v3638 = vsel %vm3637, 1, 0
          %v3639 = vadd.s32 %v3635, %v3631
          %v3640 = vadd.s32 %v3636, %v3638
          %v3641 = vadd.s32 %v3640, %v3630
          %v3642 = vadd.s32 %v3641, %v3632
          %v3643 = vand.u32 %v3620, 65535
          %v3644 = vshrl.u32 %v3620, 16
          %v3645 = vand.u32 %v3615, 65535
          %v3646 = vshrl.u32 %v3615, 16
          %v3647 = vmul.u32 %v3643, %v3645
          %v3648 = vmul.u32 %v3643, %v3646
          %v3649 = vmul.u32 %v3644, %v3645
          %v3650 = vmul.u32 %v3644, %v3646
          %v3651 = vshll.u32 %v3648, 16
          %v3652 = vshrl.u32 %v3648, 16
          %v3653 = vshll.u32 %v3649, 16
          %v3654 = vshrl.u32 %v3649, 16
          %vm3655 = vc.u32 %v3647, %v3651
          %v3656 = vsel %vm3655, 1, 0
          %v3657 = vadd.s32 %v3647, %v3651
          %v3658 = vadd.s32 %v3650, %v3656
          %vm3659 = vc.u32 %v3657, %v3653
          %v3660 = vsel %vm3659, 1, 0
          %v3661 = vadd.s32 %v3657, %v3653
          %v3662 = vadd.s32 %v3658, %v3660
          %v3663 = vadd.s32 %v3662, %v3652
          %v3664 = vadd.s32 %v3663, %v3654
          %v3665 = vmul.u32 %v3620, %v3611
          %v3666 = vadd.s32 %v3642, %v3661
          %vm3667 = vc.u32 %v3642, %v3661
          %v3668 = vadd.s32 %v3664, 1
          %v3669 = vsel %vm3667, %v3668, %v3664
          %v3670 = vadd.s32 %v3665, %v3669
          %v3671 = vadd.s32 %v3670, 536870912
          %v3672 = vshrl.u32 %v3671, 30
          %v3673 = vshll.u32 %v3672, 30
          %v3674 = vsub.s32 %v3670, %v3673
          %vm3675 = vcmp.lt.s32.totalorder %v3674, 0
          %v3676 = vsub.s32 0, %v3674
          %v3677 = vsel %vm3675, %v3676, %v3674
          %v3678 = vclz %v3677
          %v3679 = vsub.s32 %v3678, 2
          %vm3680 = vcmp.gt.s32.totalorder 0, %v3679
          %v3681 = vsel %vm3680, 0, %v3679
          %v3682 = vsub.s32 32, %v3681
          %v3683 = vshll.u32 %v3674, %v3681
          %v3684 = vshrl.u32 %v3666, %v3682
          %v3685 = vor.u32 %v3683, %v3684
          %v3686 = vsub.s32 4294967266, %v3681
          %v3687 = vadd.s32 %v3686, 127
          %v3688 = vshll.u32 %v3687, 23
          %v3689 = vor.u32 4788187, %v3688
          %v3690 = vand.u32 2147483647, %v3689
          %v3692 = vcvt.s32.f32 %v3685
          %v3693 = vmul.f32 %v3692, %v3690
          %v3694 = vxor.u32 %v3693, 2147483648
          %v3695 = vsel %vm3574, %v3694, %v3693
          %v3696 = vsub.s32 4, %v3672
          %v3697 = vsel %vm3574, %v3696, %v3672
          %v3698 = vsel %vm3573, %v1246, %v3695
          %v3699 = vsel %vm3573, 0, %v3697
          %v3700 = vmul.f32 %v3698, %v3698
          %v3701 = vmul.f32 %v3700, -0.001358992
          %v3702 = vadd.f32 %v3701, 0.041655596
          %v3703 = vmul.f32 %v3700, %v3702
          %v3704 = vadd.f32 %v3703, -0.4999988
          %v3705 = vmul.f32 %v3700, %v3704
          %v3706 = vadd.f32 1.0, %v3705
          %v3707 = vmul.f32 %v3698, %v3698
          %v3708 = vmul.f32 %v3707, -0.00019511016
          %v3709 = vadd.f32 %v3708, 0.008332121
          %v3710 = vmul.f32 %v3707, %v3709
          %v3711 = vadd.f32 %v3710, -0.16666654
          %v3712 = vmul.f32 %v3707, %v3711
          %v3713 = vadd.f32 %v3712, 1.0
          %v3714 = vmul.f32 %v3713, %v3698
          %vm3715 = vweird.f32 %v1246
          %v3716 = vadd.s32 %v3699, 3
          %v3717 = vand.u32 %v3716, 3
          %vm3718 = vcmp.lt.s32.totalorder %v3717, 2
          %vm3719 = vcmp.eq.s32.totalorder %v3717, 0
          %v3720 = vxor.u32 %v3714, 2147483648
          %v3721 = vsel %vm3719, %v3706, %v3720
          %vm3722 = vcmp.eq.s32.totalorder %v3717, 2
          %v3723 = vxor.u32 %v3706, 2147483648
          %v3724 = vsel %vm3722, %v3723, %v3714
          %v3725 = vsel %vm3718, %v3721, %v3724
          %v3726 = vsel %vm3715, nan, %v3725
          %v3727 = vpack.c.bf16 %v1556, %v1401
          %v3728 = vpack.c.bf16 %v1866, %v1711
          %v3729 = vpack.c.bf16 %v2176, %v2021
          %v3730 = vpack.c.bf16 %v2486, %v2331
          %v3731 = vpack.c.bf16 %v2796, %v2641
          %v3732 = vpack.c.bf16 %v3106, %v2951
          %v3733 = vpack.c.bf16 %v3416, %v3261
          %v3734 = vpack.c.bf16 %v3726, %v3571
          %v3735 = vld [vmem:[#allocation7] sm:$0xf]
          %v3736 = vld [vmem:[#allocation7 + $0x4] sm:$0xf]
          %v3737 = vld [vmem:[#allocation7 + $0x8] sm:$0xf]
          %v3738 = vld [vmem:[#allocation7 + $0xc] sm:$0xf]
          %v3739 = vld [vmem:[#allocation7 + $0x10] sm:$0xf]
          %v3740 = vld [vmem:[#allocation7 + $0x14] sm:$0xf]
          %v3741 = vld [vmem:[#allocation7 + $0x18] sm:$0xf]
          %v3742 = vld [vmem:[#allocation7 + $0x1c] sm:$0xf]
          %v3743 = vld [vmem:[#allocation7 + $0x20] sm:$0xf]
          %v3744 = vld [vmem:[#allocation7 + $0x24] sm:$0xf]
          %v3745 = vld [vmem:[#allocation7 + $0x28] sm:$0xf]
          %v3746 = vld [vmem:[#allocation7 + $0x2c] sm:$0xf]
          %v3747 = vld [vmem:[#allocation7 + $0x30] sm:$0xf]
          %v3748 = vld [vmem:[#allocation7 + $0x34] sm:$0xf]
          %v3749 = vld [vmem:[#allocation7 + $0x38] sm:$0xf]
          %v3750 = vld [vmem:[#allocation7 + $0x3c] sm:$0xf]
          %v3751 = vld [vmem:[%s7] sm:$0x1]
          %v3753 = vperm.slane %v3751, 0
          %v3771 = vunpack.c.l.b16 %v3735
          %v3772 = vunpack.c.l.b16 %v3736
          %v3773 = vunpack.c.l.b16 %v3737
          %v3774 = vunpack.c.l.b16 %v3738
          %v3775 = vunpack.c.l.b16 %v3739
          %v3776 = vunpack.c.l.b16 %v3740
          %v3777 = vunpack.c.l.b16 %v3741
          %v3778 = vunpack.c.l.b16 %v3742
          %v3779 = vunpack.c.l.b16 %v3743
          %v3780 = vunpack.c.l.b16 %v3744
          %v3781 = vunpack.c.l.b16 %v3745
          %v3782 = vunpack.c.l.b16 %v3746
          %v3783 = vunpack.c.l.b16 %v3747
          %v3784 = vunpack.c.l.b16 %v3748
          %v3785 = vunpack.c.l.b16 %v3749
          %v3786 = vunpack.c.l.b16 %v3750
          %v3787 = vpack.c.b16 %v3772, %v3771
          %v3788 = vpack.c.b16 %v3774, %v3773
          %v3789 = vpack.c.b16 %v3776, %v3775
          %v3790 = vpack.c.b16 %v3778, %v3777
          %v3791 = vpack.c.b16 %v3780, %v3779
          %v3792 = vpack.c.b16 %v3782, %v3781
          %v3793 = vpack.c.b16 %v3784, %v3783
          %v3794 = vpack.c.b16 %v3786, %v3785
          %3803 = vmatpush.bf16.msra.mxu0 %v3794
          %3804 = vmatpush.bf16.msra.mxu0 %v3793
          %3805 = vmatpush.bf16.msra.mxu0 %v3792
          %3806 = vmatpush.bf16.msra.mxu0 %v3791
          %3807 = vmatpush.bf16.msra.mxu0 %v3790
          %3808 = vmatpush.bf16.msra.mxu0 %v3789
          %3809 = vmatpush.bf16.msra.mxu0 %v3788
          %3810 = vmatpush.bf16.msra.mxu0 %v3787
          %3811 = vmatmul.bf16.gmra.mxu0 %v3727
          %v3812 = vpop.f32.mrf.mxu0
          %v3813 = vadd.f32 %v3753, %v3812
          %v3814 = vpop.f32.mrf.mxu0
          %v3815 = vadd.f32 %v3753, %v3814
          %3816 = vmatmul.bf16.gmra.mxu0 %v3728
          %v3817 = vpop.f32.mrf.mxu0
          %v3818 = vadd.f32 %v3753, %v3817
          %v3819 = vpop.f32.mrf.mxu0
          %v3820 = vadd.f32 %v3753, %v3819
          %3821 = vmatmul.bf16.gmra.mxu0 %v3729
          %v3822 = vpop.f32.mrf.mxu0
          %v3823 = vadd.f32 %v3753, %v3822
          %v3824 = vpop.f32.mrf.mxu0
          %v3825 = vadd.f32 %v3753, %v3824
          %3826 = vmatmul.bf16.gmra.mxu0 %v3730
          %v3827 = vpop.f32.mrf.mxu0
          %v3828 = vadd.f32 %v3753, %v3827
          %v3829 = vpop.f32.mrf.mxu0
          %v3830 = vadd.f32 %v3753, %v3829
          %3831 = vmatmul.bf16.gmra.mxu0 %v3731
          %v3832 = vpop.f32.mrf.mxu0
          %v3833 = vadd.f32 %v3753, %v3832
          %v3834 = vpop.f32.mrf.mxu0
          %v3835 = vadd.f32 %v3753, %v3834
          %3836 = vmatmul.bf16.gmra.mxu0 %v3732
          %v3837 = vpop.f32.mrf.mxu0
          %v3838 = vadd.f32 %v3753, %v3837
          %v3839 = vpop.f32.mrf.mxu0
          %v3840 = vadd.f32 %v3753, %v3839
          %3841 = vmatmul.bf16.gmra.mxu0 %v3733
          %v3842 = vpop.f32.mrf.mxu0
          %v3843 = vadd.f32 %v3753, %v3842
          %v3844 = vpop.f32.mrf.mxu0
          %v3845 = vadd.f32 %v3753, %v3844
          %3846 = vmatmul.bf16.gmra.mxu0 %v3734
          %v3847 = vpop.f32.mrf.mxu0
          %v3848 = vadd.f32 %v3753, %v3847
          %v3849 = vpop.f32.mrf.mxu0
          %v3850 = vadd.f32 %v3753, %v3849
          %3851 = vdwg.mxu0
          %v3852 = vpack.c.bf16 %v3813, %v3813
          %v3853 = vpack.c.bf16 %v3815, %v3815
          %v3854 = vpack.c.bf16 %v3818, %v3818
          %v3855 = vpack.c.bf16 %v3820, %v3820
          %v3856 = vpack.c.bf16 %v3823, %v3823
          %v3857 = vpack.c.bf16 %v3825, %v3825
          %v3858 = vpack.c.bf16 %v3828, %v3828
          %v3859 = vpack.c.bf16 %v3830, %v3830
          %v3860 = vpack.c.bf16 %v3833, %v3833
          %v3861 = vpack.c.bf16 %v3835, %v3835
          %v3862 = vpack.c.bf16 %v3838, %v3838
          %v3863 = vpack.c.bf16 %v3840, %v3840
          %v3864 = vpack.c.bf16 %v3843, %v3843
          %v3865 = vpack.c.bf16 %v3845, %v3845
          %v3866 = vpack.c.bf16 %v3848, %v3848
          %v3867 = vpack.c.bf16 %v3850, %v3850
          %3868 = vst [vmem:[#allocation3] sm:$0xf] %v3852
          %3869 = vst [vmem:[#allocation3 + $0x4] sm:$0xf] %v3853
          %3870 = vst [vmem:[#allocation3 + $0x8] sm:$0xf] %v3854
          %3871 = vst [vmem:[#allocation3 + $0xc] sm:$0xf] %v3855
          %3872 = vst [vmem:[#allocation3 + $0x10] sm:$0xf] %v3856
          %3873 = vst [vmem:[#allocation3 + $0x14] sm:$0xf] %v3857
          %3874 = vst [vmem:[#allocation3 + $0x18] sm:$0xf] %v3858
          %3875 = vst [vmem:[#allocation3 + $0x1c] sm:$0xf] %v3859
          %3876 = vst [vmem:[#allocation3 + $0x20] sm:$0xf] %v3860
          %3877 = vst [vmem:[#allocation3 + $0x24] sm:$0xf] %v3861
          %3878 = vst [vmem:[#allocation3 + $0x28] sm:$0xf] %v3862
          %3879 = vst [vmem:[#allocation3 + $0x2c] sm:$0xf] %v3863
          %3880 = vst [vmem:[#allocation3 + $0x30] sm:$0xf] %v3864
          %3881 = vst [vmem:[#allocation3 + $0x34] sm:$0xf] %v3865
          %3882 = vst [vmem:[#allocation3 + $0x38] sm:$0xf] %v3866
          %3883 = vst [vmem:[#allocation3 + $0x3c] sm:$0xf] %v3867
        $region112: #{tpu_custom_call.1} parent=87 // pred_fallthru
          _
        %v3884 = vld [vmem:[#allocation2 + $0x8] sm:$0xff]
        %v3885 = vld [vmem:[#allocation2 + $0x10] sm:$0xff]
        %v3886 = vld [vmem:[#allocation2 + $0x18] sm:$0xff]
        %v3887 = vld [vmem:[#allocation2 + $0x20] sm:$0xff]
        %v3888 = vld [vmem:[#allocation2 + $0x28] sm:$0xff]
        %v3889 = vld [vmem:[#allocation2 + $0x30] sm:$0xff]
        %v3890 = vld [vmem:[#allocation2 + $0x38] sm:$0xff]
        %v3891 = vld [vmem:[#allocation2 + $0x40] sm:$0xff]
        %v3892 = vld [vmem:[#allocation2 + $0x58] sm:$0xff]
        %v3893 = vld [vmem:[#allocation2 + $0x60] sm:$0xff]
        %v3894 = vld [vmem:[#allocation2 + $0x68] sm:$0xff]
        %v3895 = vld [vmem:[#allocation2 + $0x70] sm:$0xff]
        %v3896 = vld [vmem:[#allocation2 + $0x78] sm:$0xff]
        %v3897 = vld [vmem:[#allocation2 + $0x80] sm:$0xff]
        %v3898 = vld [vmem:[#allocation2 + $0x88] sm:$0xff]
        %v3899 = vld [vmem:[#allocation2 + $0x90] sm:$0xff]
        %v3900 = vld [vmem:[%s741] sm:$0x7f]
        %v3901 = vperm.slane %v3900, 3
        %v3902 = vmul.f32 %v3884, %v3901
        %v3903 = vmul.f32 %v3885, %v3901
        %v3904 = vmul.f32 %v3886, %v3901
        %v3905 = vmul.f32 %v3887, %v3901
        %v3906 = vmul.f32 %v3888, %v3901
        %v3907 = vmul.f32 %v3889, %v3901
        %v3908 = vmul.f32 %v3890, %v3901
        %v3909 = vmul.f32 %v3891, %v3901
        %v3910 = vmul.f32 %v3892, %v3901
        %v3911 = vmul.f32 %v3893, %v3901
        %v3912 = vmul.f32 %v3894, %v3901
        %v3913 = vmul.f32 %v3895, %v3901
        %v3914 = vmul.f32 %v3896, %v3901
        %v3915 = vmul.f32 %v3897, %v3901
        %v3916 = vmul.f32 %v3898, %v3901
        %v3917 = vmul.f32 %v3899, %v3901
        %v3918 = vld [vmem:[#allocation2 + $0x5] sm:$0xff]
        %v3919 = vld [vmem:[#allocation2 + $0xd] sm:$0xff]
        %v3920 = vld [vmem:[#allocation2 + $0x15] sm:$0xff]
        %v3921 = vld [vmem:[#allocation2 + $0x1d] sm:$0xff]
        %v3922 = vld [vmem:[#allocation2 + $0x25] sm:$0xff]
        %v3923 = vld [vmem:[#allocation2 + $0x2d] sm:$0xff]
        %v3924 = vld [vmem:[#allocation2 + $0x35] sm:$0xff]
        %v3925 = vld [vmem:[#allocation2 + $0x3d] sm:$0xff]
        %v3926 = vld [vmem:[#allocation2 + $0x55] sm:$0xff]
        %v3927 = vld [vmem:[#allocation2 + $0x5d] sm:$0xff]
        %v3928 = vld [vmem:[#allocation2 + $0x65] sm:$0xff]
        %v3929 = vld [vmem:[#allocation2 + $0x6d] sm:$0xff]
        %v3930 = vld [vmem:[#allocation2 + $0x75] sm:$0xff]
        %v3931 = vld [vmem:[#allocation2 + $0x7d] sm:$0xff]
        %v3932 = vld [vmem:[#allocation2 + $0x85] sm:$0xff]
        %v3933 = vld [vmem:[#allocation2 + $0x8d] sm:$0xff]
        %v3934 = vperm.slane %v3900, 0
        %v3935 = vmul.f32 %v3918, %v3934
        %v3936 = vmul.f32 %v3919, %v3934
        %v3937 = vmul.f32 %v3920, %v3934
        %v3938 = vmul.f32 %v3921, %v3934
        %v3939 = vmul.f32 %v3922, %v3934
        %v3940 = vmul.f32 %v3923, %v3934
        %v3941 = vmul.f32 %v3924, %v3934
        %v3942 = vmul.f32 %v3925, %v3934
        %v3943 = vmul.f32 %v3926, %v3934
        %v3944 = vmul.f32 %v3927, %v3934
        %v3945 = vmul.f32 %v3928, %v3934
        %v3946 = vmul.f32 %v3929, %v3934
        %v3947 = vmul.f32 %v3930, %v3934
        %v3948 = vmul.f32 %v3931, %v3934
        %v3949 = vmul.f32 %v3932, %v3934
        %v3950 = vmul.f32 %v3933, %v3934
        %v3951 = vadd.f32 %v3902, %v3935
        %v3952 = vadd.f32 %v3903, %v3936
        %v3953 = vadd.f32 %v3904, %v3937
        %v3954 = vadd.f32 %v3905, %v3938
        %v3955 = vadd.f32 %v3906, %v3939
        %v3956 = vadd.f32 %v3907, %v3940
        %v3957 = vadd.f32 %v3908, %v3941
        %v3958 = vadd.f32 %v3909, %v3942
        %v3959 = vadd.f32 %v3910, %v3943
        %v3960 = vadd.f32 %v3911, %v3944
        %v3961 = vadd.f32 %v3912, %v3945
        %v3962 = vadd.f32 %v3913, %v3946
        %v3963 = vadd.f32 %v3914, %v3947
        %v3964 = vadd.f32 %v3915, %v3948
        %v3965 = vadd.f32 %v3916, %v3949
        %v3966 = vadd.f32 %v3917, %v3950
        %v3967 = vld [vmem:[#allocation2 + $0x6] sm:$0xff]
        %v3968 = vld [vmem:[#allocation2 + $0xe] sm:$0xff]
        %v3969 = vld [vmem:[#allocation2 + $0x16] sm:$0xff]
        %v3970 = vld [vmem:[#allocation2 + $0x1e] sm:$0xff]
        %v3971 = vld [vmem:[#allocation2 + $0x26] sm:$0xff]
        %v3972 = vld [vmem:[#allocation2 + $0x2e] sm:$0xff]
        %v3973 = vld [vmem:[#allocation2 + $0x36] sm:$0xff]
        %v3974 = vld [vmem:[#allocation2 + $0x3e] sm:$0xff]
        %v3975 = vld [vmem:[#allocation2 + $0x56] sm:$0xff]
        %v3976 = vld [vmem:[#allocation2 + $0x5e] sm:$0xff]
        %v3977 = vld [vmem:[#allocation2 + $0x66] sm:$0xff]
        %v3978 = vld [vmem:[#allocation2 + $0x6e] sm:$0xff]
        %v3979 = vld [vmem:[#allocation2 + $0x76] sm:$0xff]
        %v3980 = vld [vmem:[#allocation2 + $0x7e] sm:$0xff]
        %v3981 = vld [vmem:[#allocation2 + $0x86] sm:$0xff]
        %v3982 = vld [vmem:[#allocation2 + $0x8e] sm:$0xff]
        %v3983 = vperm.slane %v3900, 1
        %v3984 = vmul.f32 %v3967, %v3983
        %v3985 = vmul.f32 %v3968, %v3983
        %v3986 = vmul.f32 %v3969, %v3983
        %v3987 = vmul.f32 %v3970, %v3983
        %v3988 = vmul.f32 %v3971, %v3983
        %v3989 = vmul.f32 %v3972, %v3983
        %v3990 = vmul.f32 %v3973, %v3983
        %v3991 = vmul.f32 %v3974, %v3983
        %v3992 = vmul.f32 %v3975, %v3983
        %v3993 = vmul.f32 %v3976, %v3983
        %v3994 = vmul.f32 %v3977, %v3983
        %v3995 = vmul.f32 %v3978, %v3983
        %v3996 = vmul.f32 %v3979, %v3983
        %v3997 = vmul.f32 %v3980, %v3983
        %v3998 = vmul.f32 %v3981, %v3983
        %v3999 = vmul.f32 %v3982, %v3983
        %v4000 = vadd.f32 %v3951, %v3984
        %v4001 = vadd.f32 %v3952, %v3985
        %v4002 = vadd.f32 %v3953, %v3986
        %v4003 = vadd.f32 %v3954, %v3987
        %v4004 = vadd.f32 %v3955, %v3988
        %v4005 = vadd.f32 %v3956, %v3989
        %v4006 = vadd.f32 %v3957, %v3990
        %v4007 = vadd.f32 %v3958, %v3991
        %v4008 = vadd.f32 %v3959, %v3992
        %v4009 = vadd.f32 %v3960, %v3993
        %v4010 = vadd.f32 %v3961, %v3994
        %v4011 = vadd.f32 %v3962, %v3995
        %v4012 = vadd.f32 %v3963, %v3996
        %v4013 = vadd.f32 %v3964, %v3997
        %v4014 = vadd.f32 %v3965, %v3998
        %v4015 = vadd.f32 %v3966, %v3999
        %v4016 = vld [vmem:[#allocation2 + $0x7] sm:$0xff]
        %v4017 = vld [vmem:[#allocation2 + $0xf] sm:$0xff]
        %v4018 = vld [vmem:[#allocation2 + $0x17] sm:$0xff]
        %v4019 = vld [vmem:[#allocation2 + $0x1f] sm:$0xff]
        %v4020 = vld [vmem:[#allocation2 + $0x27] sm:$0xff]
        %v4021 = vld [vmem:[#allocation2 + $0x2f] sm:$0xff]
        %v4022 = vld [vmem:[#allocation2 + $0x37] sm:$0xff]
        %v4023 = vld [vmem:[#allocation2 + $0x3f] sm:$0xff]
        %v4024 = vld [vmem:[#allocation2 + $0x57] sm:$0xff]
        %v4025 = vld [vmem:[#allocation2 + $0x5f] sm:$0xff]
        %v4026 = vld [vmem:[#allocation2 + $0x67] sm:$0xff]
        %v4027 = vld [vmem:[#allocation2 + $0x6f] sm:$0xff]
        %v4028 = vld [vmem:[#allocation2 + $0x77] sm:$0xff]
        %v4029 = vld [vmem:[#allocation2 + $0x7f] sm:$0xff]
        %v4030 = vld [vmem:[#allocation2 + $0x87] sm:$0xff]
        %v4031 = vld [vmem:[#allocation2 + $0x8f] sm:$0xff]
        %v4032 = vperm.slane %v3900, 2
        %v4033 = vmul.f32 %v4016, %v4032
        %v4034 = vmul.f32 %v4017, %v4032
        %v4035 = vmul.f32 %v4018, %v4032
        %v4036 = vmul.f32 %v4019, %v4032
        %v4037 = vmul.f32 %v4020, %v4032
        %v4038 = vmul.f32 %v4021, %v4032
        %v4039 = vmul.f32 %v4022, %v4032
        %v4040 = vmul.f32 %v4023, %v4032
        %v4041 = vmul.f32 %v4024, %v4032
        %v4042 = vmul.f32 %v4025, %v4032
        %v4043 = vmul.f32 %v4026, %v4032
        %v4044 = vmul.f32 %v4027, %v4032
        %v4045 = vmul.f32 %v4028, %v4032
        %v4046 = vmul.f32 %v4029, %v4032
        %v4047 = vmul.f32 %v4030, %v4032
        %v4048 = vmul.f32 %v4031, %v4032
        %v4049 = vadd.f32 %v4000, %v4033
        %v4050 = vadd.f32 %v4001, %v4034
        %v4051 = vadd.f32 %v4002, %v4035
        %v4052 = vadd.f32 %v4003, %v4036
        %v4053 = vadd.f32 %v4004, %v4037
        %v4054 = vadd.f32 %v4005, %v4038
        %v4055 = vadd.f32 %v4006, %v4039
        %v4056 = vadd.f32 %v4007, %v4040
        %v4057 = vadd.f32 %v4008, %v4041
        %v4058 = vadd.f32 %v4009, %v4042
        %v4059 = vadd.f32 %v4010, %v4043
        %v4060 = vadd.f32 %v4011, %v4044
        %v4061 = vadd.f32 %v4012, %v4045
        %v4062 = vadd.f32 %v4013, %v4046
        %v4063 = vadd.f32 %v4014, %v4047
        %v4064 = vadd.f32 %v4015, %v4048
        %v4065 = vld [vmem:[#allocation2 + $0x9] sm:$0xff]
        %v4066 = vld [vmem:[#allocation2 + $0x11] sm:$0xff]
        %v4067 = vld [vmem:[#allocation2 + $0x19] sm:$0xff]
        %v4068 = vld [vmem:[#allocation2 + $0x21] sm:$0xff]
        %v4069 = vld [vmem:[#allocation2 + $0x29] sm:$0xff]
        %v4070 = vld [vmem:[#allocation2 + $0x31] sm:$0xff]
        %v4071 = vld [vmem:[#allocation2 + $0x39] sm:$0xff]
        %v4072 = vld [vmem:[#allocation2 + $0x41] sm:$0xff]
        %v4073 = vld [vmem:[#allocation2 + $0x59] sm:$0xff]
        %v4074 = vld [vmem:[#allocation2 + $0x61] sm:$0xff]
        %v4075 = vld [vmem:[#allocation2 + $0x69] sm:$0xff]
        %v4076 = vld [vmem:[#allocation2 + $0x71] sm:$0xff]
        %v4077 = vld [vmem:[#allocation2 + $0x79] sm:$0xff]
        %v4078 = vld [vmem:[#allocation2 + $0x81] sm:$0xff]
        %v4079 = vld [vmem:[#allocation2 + $0x89] sm:$0xff]
        %v4080 = vld [vmem:[#allocation2 + $0x91] sm:$0xff]
        %v4081 = vperm.slane %v3900, 4
        %v4082 = vmul.f32 %v4065, %v4081
        %v4083 = vmul.f32 %v4066, %v4081
        %v4084 = vmul.f32 %v4067, %v4081
        %v4085 = vmul.f32 %v4068, %v4081
        %v4086 = vmul.f32 %v4069, %v4081
        %v4087 = vmul.f32 %v4070, %v4081
        %v4088 = vmul.f32 %v4071, %v4081
        %v4089 = vmul.f32 %v4072, %v4081
        %v4090 = vmul.f32 %v4073, %v4081
        %v4091 = vmul.f32 %v4074, %v4081
        %v4092 = vmul.f32 %v4075, %v4081
        %v4093 = vmul.f32 %v4076, %v4081
        %v4094 = vmul.f32 %v4077, %v4081
        %v4095 = vmul.f32 %v4078, %v4081
        %v4096 = vmul.f32 %v4079, %v4081
        %v4097 = vmul.f32 %v4080, %v4081
        %v4098 = vadd.f32 %v4049, %v4082
        %v4099 = vadd.f32 %v4050, %v4083
        %v4100 = vadd.f32 %v4051, %v4084
        %v4101 = vadd.f32 %v4052, %v4085
        %v4102 = vadd.f32 %v4053, %v4086
        %v4103 = vadd.f32 %v4054, %v4087
        %v4104 = vadd.f32 %v4055, %v4088
        %v4105 = vadd.f32 %v4056, %v4089
        %v4106 = vadd.f32 %v4057, %v4090
        %v4107 = vadd.f32 %v4058, %v4091
        %v4108 = vadd.f32 %v4059, %v4092
        %v4109 = vadd.f32 %v4060, %v4093
        %v4110 = vadd.f32 %v4061, %v4094
        %v4111 = vadd.f32 %v4062, %v4095
        %v4112 = vadd.f32 %v4063, %v4096
        %v4113 = vadd.f32 %v4064, %v4097
        %v4114 = vld [vmem:[#allocation2 + $0xa] sm:$0xff]
        %v4115 = vld [vmem:[#allocation2 + $0x12] sm:$0xff]
        %v4116 = vld [vmem:[#allocation2 + $0x1a] sm:$0xff]
        %v4117 = vld [vmem:[#allocation2 + $0x22] sm:$0xff]
        %v4118 = vld [vmem:[#allocation2 + $0x2a] sm:$0xff]
        %v4119 = vld [vmem:[#allocation2 + $0x32] sm:$0xff]
        %v4120 = vld [vmem:[#allocation2 + $0x3a] sm:$0xff]
        %v4121 = vld [vmem:[#allocation2 + $0x42] sm:$0xff]
        %v4122 = vld [vmem:[#allocation2 + $0x5a] sm:$0xff]
        %v4123 = vld [vmem:[#allocation2 + $0x62] sm:$0xff]
        %v4124 = vld [vmem:[#allocation2 + $0x6a] sm:$0xff]
        %v4125 = vld [vmem:[#allocation2 + $0x72] sm:$0xff]
        %v4126 = vld [vmem:[#allocation2 + $0x7a] sm:$0xff]
        %v4127 = vld [vmem:[#allocation2 + $0x82] sm:$0xff]
        %v4128 = vld [vmem:[#allocation2 + $0x8a] sm:$0xff]
        %v4129 = vld [vmem:[#allocation2 + $0x92] sm:$0xff]
        %v4130 = vperm.slane %v3900, 5
        %v4131 = vmul.f32 %v4114, %v4130
        %v4132 = vmul.f32 %v4115, %v4130
        %v4133 = vmul.f32 %v4116, %v4130
        %v4134 = vmul.f32 %v4117, %v4130
        %v4135 = vmul.f32 %v4118, %v4130
        %v4136 = vmul.f32 %v4119, %v4130
        %v4137 = vmul.f32 %v4120, %v4130
        %v4138 = vmul.f32 %v4121, %v4130
        %v4139 = vmul.f32 %v4122, %v4130
        %v4140 = vmul.f32 %v4123, %v4130
        %v4141 = vmul.f32 %v4124, %v4130
        %v4142 = vmul.f32 %v4125, %v4130
        %v4143 = vmul.f32 %v4126, %v4130
        %v4144 = vmul.f32 %v4127, %v4130
        %v4145 = vmul.f32 %v4128, %v4130
        %v4146 = vmul.f32 %v4129, %v4130
        %v4147 = vadd.f32 %v4098, %v4131
        %v4148 = vadd.f32 %v4099, %v4132
        %v4149 = vadd.f32 %v4100, %v4133
        %v4150 = vadd.f32 %v4101, %v4134
        %v4151 = vadd.f32 %v4102, %v4135
        %v4152 = vadd.f32 %v4103, %v4136
        %v4153 = vadd.f32 %v4104, %v4137
        %v4154 = vadd.f32 %v4105, %v4138
        %v4155 = vadd.f32 %v4106, %v4139
        %v4156 = vadd.f32 %v4107, %v4140
        %v4157 = vadd.f32 %v4108, %v4141
        %v4158 = vadd.f32 %v4109, %v4142
        %v4159 = vadd.f32 %v4110, %v4143
        %v4160 = vadd.f32 %v4111, %v4144
        %v4161 = vadd.f32 %v4112, %v4145
        %v4162 = vadd.f32 %v4113, %v4146
        %v4163 = vld [vmem:[#allocation2 + $0xb] sm:$0xff]
        %v4164 = vld [vmem:[#allocation2 + $0x13] sm:$0xff]
        %v4165 = vld [vmem:[#allocation2 + $0x1b] sm:$0xff]
        %v4166 = vld [vmem:[#allocation2 + $0x23] sm:$0xff]
        %v4167 = vld [vmem:[#allocation2 + $0x2b] sm:$0xff]
        %v4168 = vld [vmem:[#allocation2 + $0x33] sm:$0xff]
        %v4169 = vld [vmem:[#allocation2 + $0x3b] sm:$0xff]
        %v4170 = vld [vmem:[#allocation2 + $0x43] sm:$0xff]
        %v4171 = vld [vmem:[#allocation2 + $0x5b] sm:$0xff]
        %v4172 = vld [vmem:[#allocation2 + $0x63] sm:$0xff]
        %v4173 = vld [vmem:[#allocation2 + $0x6b] sm:$0xff]
        %v4174 = vld [vmem:[#allocation2 + $0x73] sm:$0xff]
        %v4175 = vld [vmem:[#allocation2 + $0x7b] sm:$0xff]
        %v4176 = vld [vmem:[#allocation2 + $0x83] sm:$0xff]
        %v4177 = vld [vmem:[#allocation2 + $0x8b] sm:$0xff]
        %v4178 = vld [vmem:[#allocation2 + $0x93] sm:$0xff]
        %v4179 = vperm.slane %v3900, 6
        %v4180 = vmul.f32 %v4163, %v4179
        %v4181 = vmul.f32 %v4164, %v4179
        %v4182 = vmul.f32 %v4165, %v4179
        %v4183 = vmul.f32 %v4166, %v4179
        %v4184 = vmul.f32 %v4167, %v4179
        %v4185 = vmul.f32 %v4168, %v4179
        %v4186 = vmul.f32 %v4169, %v4179
        %v4187 = vmul.f32 %v4170, %v4179
        %v4188 = vmul.f32 %v4171, %v4179
        %v4189 = vmul.f32 %v4172, %v4179
        %v4190 = vmul.f32 %v4173, %v4179
        %v4191 = vmul.f32 %v4174, %v4179
        %v4192 = vmul.f32 %v4175, %v4179
        %v4193 = vmul.f32 %v4176, %v4179
        %v4194 = vmul.f32 %v4177, %v4179
        %v4195 = vmul.f32 %v4178, %v4179
        %v4196 = vadd.f32 %v4147, %v4180
        %v4197 = vadd.f32 %v4148, %v4181
        %v4198 = vadd.f32 %v4149, %v4182
        %v4199 = vadd.f32 %v4150, %v4183
        %v4200 = vadd.f32 %v4151, %v4184
        %v4201 = vadd.f32 %v4152, %v4185
        %v4202 = vadd.f32 %v4153, %v4186
        %v4203 = vadd.f32 %v4154, %v4187
        %v4204 = vadd.f32 %v4155, %v4188
        %v4205 = vadd.f32 %v4156, %v4189
        %v4206 = vadd.f32 %v4157, %v4190
        %v4207 = vadd.f32 %v4158, %v4191
        %v4208 = vadd.f32 %v4159, %v4192
        %v4209 = vadd.f32 %v4160, %v4193
        %v4210 = vadd.f32 %v4161, %v4194
        %v4211 = vadd.f32 %v4162, %v4195
        %v4212 = vld [vmem:[%s744] sm:$0x1]
        %v4214 = vperm.slane %v4212, 0
        %v4216 = vadd.f32 %v4196, %v4214
        %v4217 = vadd.f32 %v4197, %v4214
        %v4218 = vadd.f32 %v4198, %v4214
        %v4219 = vadd.f32 %v4199, %v4214
        %v4220 = vadd.f32 %v4200, %v4214
        %v4221 = vadd.f32 %v4201, %v4214
        %v4222 = vadd.f32 %v4202, %v4214
        %v4223 = vadd.f32 %v4203, %v4214
        %v4224 = vadd.f32 %v4204, %v4214
        %v4225 = vadd.f32 %v4205, %v4214
        %v4226 = vadd.f32 %v4206, %v4214
        %v4227 = vadd.f32 %v4207, %v4214
        %v4228 = vadd.f32 %v4208, %v4214
        %v4229 = vadd.f32 %v4209, %v4214
        %v4230 = vadd.f32 %v4210, %v4214
        %v4231 = vadd.f32 %v4211, %v4214
        %4232 = vadd.xlane.f32.xlu0 %v4216
        %v4233 = vpop.xlane.xlu0 %4232
        %4234 = vadd.xlane.f32.xlu0 %v4217
        %v4235 = vpop.xlane.xlu0 %4234
        %4236 = vadd.xlane.f32.xlu0 %v4218
        %v4237 = vpop.xlane.xlu0 %4236
        %4238 = vadd.xlane.f32.xlu0 %v4219
        %v4239 = vpop.xlane.xlu0 %4238
        %4240 = vadd.xlane.f32.xlu0 %v4220
        %v4241 = vpop.xlane.xlu0 %4240
        %4242 = vadd.xlane.f32.xlu0 %v4221
        %v4243 = vpop.xlane.xlu0 %4242
        %4244 = vadd.xlane.f32.xlu0 %v4222
        %v4245 = vpop.xlane.xlu0 %4244
        %4246 = vadd.xlane.f32.xlu0 %v4223
        %v4247 = vpop.xlane.xlu0 %4246
        %4248 = vadd.xlane.f32.xlu0 %v4224
        %v4249 = vpop.xlane.xlu0 %4248
        %4250 = vadd.xlane.f32.xlu0 %v4225
        %v4251 = vpop.xlane.xlu0 %4250
        %4252 = vadd.xlane.f32.xlu0 %v4226
        %v4253 = vpop.xlane.xlu0 %4252
        %4254 = vadd.xlane.f32.xlu0 %v4227
        %v4255 = vpop.xlane.xlu0 %4254
        %4256 = vadd.xlane.f32.xlu0 %v4228
        %v4257 = vpop.xlane.xlu0 %4256
        %4258 = vadd.xlane.f32.xlu0 %v4229
        %v4259 = vpop.xlane.xlu0 %4258
        %4260 = vadd.xlane.f32.xlu0 %v4230
        %v4261 = vpop.xlane.xlu0 %4260
        %4262 = vadd.xlane.f32.xlu0 %v4231
        %v4263 = vpop.xlane.xlu0 %4262
        %v4264 = vrcp.pop 128.0
        %v4265 = vmul.f32 128.0, %v4264
        %v4266 = vsub.f32 1.0, %v4265
        %v4267 = vmul.f32 %v4264, %v4266
        %v4268 = vadd.f32 %v4264, %v4267
        %vm4269 = vweird.f32 %v4264
        %v4270 = vsel %vm4269, %v4264, %v4268
        %v4271 = vmul.f32 %v4233, %v4270
        %v4272 = vmul.f32 %v4235, %v4270
        %v4273 = vmul.f32 %v4237, %v4270
        %v4274 = vmul.f32 %v4239, %v4270
        %v4275 = vmul.f32 %v4241, %v4270
        %v4276 = vmul.f32 %v4243, %v4270
        %v4277 = vmul.f32 %v4245, %v4270
        %v4278 = vmul.f32 %v4247, %v4270
        %v4279 = vmul.f32 %v4249, %v4270
        %v4280 = vmul.f32 %v4251, %v4270
        %v4281 = vmul.f32 %v4253, %v4270
        %v4282 = vmul.f32 %v4255, %v4270
        %v4283 = vmul.f32 %v4257, %v4270
        %v4284 = vmul.f32 %v4259, %v4270
        %v4285 = vmul.f32 %v4261, %v4270
        %v4286 = vmul.f32 %v4263, %v4270
        %v4287 = vsub.f32 %v4216, %v4271
        %v4288 = vsub.f32 %v4217, %v4272
        %v4289 = vsub.f32 %v4218, %v4273
        %v4290 = vsub.f32 %v4219, %v4274
        %v4291 = vsub.f32 %v4220, %v4275
        %v4292 = vsub.f32 %v4221, %v4276
        %v4293 = vsub.f32 %v4222, %v4277
        %v4294 = vsub.f32 %v4223, %v4278
        %v4295 = vsub.f32 %v4224, %v4279
        %v4296 = vsub.f32 %v4225, %v4280
        %v4297 = vsub.f32 %v4226, %v4281
        %v4298 = vsub.f32 %v4227, %v4282
        %v4299 = vsub.f32 %v4228, %v4283
        %v4300 = vsub.f32 %v4229, %v4284
        %v4301 = vsub.f32 %v4230, %v4285
        %v4302 = vsub.f32 %v4231, %v4286
        %v4303 = vmul.f32 %v4287, %v4287
        %v4304 = vmul.f32 %v4288, %v4288
        %v4305 = vmul.f32 %v4289, %v4289
        %v4306 = vmul.f32 %v4290, %v4290
        %v4307 = vmul.f32 %v4291, %v4291
        %v4308 = vmul.f32 %v4292, %v4292
        %v4309 = vmul.f32 %v4293, %v4293
        %v4310 = vmul.f32 %v4294, %v4294
        %v4311 = vmul.f32 %v4295, %v4295
        %v4312 = vmul.f32 %v4296, %v4296
        %v4313 = vmul.f32 %v4297, %v4297
        %v4314 = vmul.f32 %v4298, %v4298
        %v4315 = vmul.f32 %v4299, %v4299
        %v4316 = vmul.f32 %v4300, %v4300
        %v4317 = vmul.f32 %v4301, %v4301
        %v4318 = vmul.f32 %v4302, %v4302
        %4319 = vadd.xlane.f32.xlu0 %v4303
        %v4320 = vpop.xlane.xlu0 %4319
        %4321 = vadd.xlane.f32.xlu0 %v4304
        %v4322 = vpop.xlane.xlu0 %4321
        %4323 = vadd.xlane.f32.xlu0 %v4305
        %v4324 = vpop.xlane.xlu0 %4323
        %4325 = vadd.xlane.f32.xlu0 %v4306
        %v4326 = vpop.xlane.xlu0 %4325
        %4327 = vadd.xlane.f32.xlu0 %v4307
        %v4328 = vpop.xlane.xlu0 %4327
        %4329 = vadd.xlane.f32.xlu0 %v4308
        %v4330 = vpop.xlane.xlu0 %4329
        %4331 = vadd.xlane.f32.xlu0 %v4309
        %v4332 = vpop.xlane.xlu0 %4331
        %4333 = vadd.xlane.f32.xlu0 %v4310
        %v4334 = vpop.xlane.xlu0 %4333
        %4335 = vadd.xlane.f32.xlu0 %v4311
        %v4336 = vpop.xlane.xlu0 %4335
        %4337 = vadd.xlane.f32.xlu0 %v4312
        %v4338 = vpop.xlane.xlu0 %4337
        %4339 = vadd.xlane.f32.xlu0 %v4313
        %v4340 = vpop.xlane.xlu0 %4339
        %4341 = vadd.xlane.f32.xlu0 %v4314
        %v4342 = vpop.xlane.xlu0 %4341
        %4343 = vadd.xlane.f32.xlu0 %v4315
        %v4344 = vpop.xlane.xlu0 %4343
        %4345 = vadd.xlane.f32.xlu0 %v4316
        %v4346 = vpop.xlane.xlu0 %4345
        %4347 = vadd.xlane.f32.xlu0 %v4317
        %v4348 = vpop.xlane.xlu0 %4347
        %4349 = vadd.xlane.f32.xlu0 %v4318
        %v4350 = vpop.xlane.xlu0 %4349
        %v4351 = vmul.f32 %v4320, 0.007874016
        %v4352 = vmul.f32 %v4322, 0.007874016
        %v4353 = vmul.f32 %v4324, 0.007874016
        %v4354 = vmul.f32 %v4326, 0.007874016
        %v4355 = vmul.f32 %v4328, 0.007874016
        %v4356 = vmul.f32 %v4330, 0.007874016
        %v4357 = vmul.f32 %v4332, 0.007874016
        %v4358 = vmul.f32 %v4334, 0.007874016
        %v4359 = vmul.f32 %v4336, 0.007874016
        %v4360 = vmul.f32 %v4338, 0.007874016
        %v4361 = vmul.f32 %v4340, 0.007874016
        %v4362 = vmul.f32 %v4342, 0.007874016
        %v4363 = vmul.f32 %v4344, 0.007874016
        %v4364 = vmul.f32 %v4346, 0.007874016
        %v4365 = vmul.f32 %v4348, 0.007874016
        %v4366 = vmul.f32 %v4350, 0.007874016
        %v4367 = vrsqrt.pop %v4351
        %v4368 = vmul.f32 %v4367, %v4351
        %v4369 = vmul.f32 %v4368, %v4367
        %v4370 = vmul.f32 0.5, %v4369
        %v4371 = vsub.f32 1.5, %v4370
        %v4372 = vmul.f32 %v4367, %v4371
        %v4373 = vmul.f32 %v4351, %v4372
        %vm4374 = vcmp.eq.f32.partialorder %v4351, inf
        %v4375 = vsel %vm4374, %v4351, %v4373
        %vm4376 = vcmp.eq.f32.partialorder %v4351, 0.0
        %v4377 = vand.u32 %v4351, 2147483648
        %v4378 = vsel %vm4376, %v4377, %v4375
        %v4379 = vrsqrt.pop %v4352
        %v4380 = vmul.f32 %v4379, %v4352
        %v4381 = vmul.f32 %v4380, %v4379
        %v4382 = vmul.f32 0.5, %v4381
        %v4383 = vsub.f32 1.5, %v4382
        %v4384 = vmul.f32 %v4379, %v4383
        %v4385 = vmul.f32 %v4352, %v4384
        %vm4386 = vcmp.eq.f32.partialorder %v4352, inf
        %v4387 = vsel %vm4386, %v4352, %v4385
        %vm4388 = vcmp.eq.f32.partialorder %v4352, 0.0
        %v4389 = vand.u32 %v4352, 2147483648
        %v4390 = vsel %vm4388, %v4389, %v4387
        %v4391 = vrsqrt.pop %v4353
        %v4392 = vmul.f32 %v4391, %v4353
        %v4393 = vmul.f32 %v4392, %v4391
        %v4394 = vmul.f32 0.5, %v4393
        %v4395 = vsub.f32 1.5, %v4394
        %v4396 = vmul.f32 %v4391, %v4395
        %v4397 = vmul.f32 %v4353, %v4396
        %vm4398 = vcmp.eq.f32.partialorder %v4353, inf
        %v4399 = vsel %vm4398, %v4353, %v4397
        %vm4400 = vcmp.eq.f32.partialorder %v4353, 0.0
        %v4401 = vand.u32 %v4353, 2147483648
        %v4402 = vsel %vm4400, %v4401, %v4399
        %v4403 = vrsqrt.pop %v4354
        %v4404 = vmul.f32 %v4403, %v4354
        %v4405 = vmul.f32 %v4404, %v4403
        %v4406 = vmul.f32 0.5, %v4405
        %v4407 = vsub.f32 1.5, %v4406
        %v4408 = vmul.f32 %v4403, %v4407
        %v4409 = vmul.f32 %v4354, %v4408
        %vm4410 = vcmp.eq.f32.partialorder %v4354, inf
        %v4411 = vsel %vm4410, %v4354, %v4409
        %vm4412 = vcmp.eq.f32.partialorder %v4354, 0.0
        %v4413 = vand.u32 %v4354, 2147483648
        %v4414 = vsel %vm4412, %v4413, %v4411
        %v4415 = vrsqrt.pop %v4355
        %v4416 = vmul.f32 %v4415, %v4355
        %v4417 = vmul.f32 %v4416, %v4415
        %v4418 = vmul.f32 0.5, %v4417
        %v4419 = vsub.f32 1.5, %v4418
        %v4420 = vmul.f32 %v4415, %v4419
        %v4421 = vmul.f32 %v4355, %v4420
        %vm4422 = vcmp.eq.f32.partialorder %v4355, inf
        %v4423 = vsel %vm4422, %v4355, %v4421
        %vm4424 = vcmp.eq.f32.partialorder %v4355, 0.0
        %v4425 = vand.u32 %v4355, 2147483648
        %v4426 = vsel %vm4424, %v4425, %v4423
        %v4427 = vrsqrt.pop %v4356
        %v4428 = vmul.f32 %v4427, %v4356
        %v4429 = vmul.f32 %v4428, %v4427
        %v4430 = vmul.f32 0.5, %v4429
        %v4431 = vsub.f32 1.5, %v4430
        %v4432 = vmul.f32 %v4427, %v4431
        %v4433 = vmul.f32 %v4356, %v4432
        %vm4434 = vcmp.eq.f32.partialorder %v4356, inf
        %v4435 = vsel %vm4434, %v4356, %v4433
        %vm4436 = vcmp.eq.f32.partialorder %v4356, 0.0
        %v4437 = vand.u32 %v4356, 2147483648
        %v4438 = vsel %vm4436, %v4437, %v4435
        %v4439 = vrsqrt.pop %v4357
        %v4440 = vmul.f32 %v4439, %v4357
        %v4441 = vmul.f32 %v4440, %v4439
        %v4442 = vmul.f32 0.5, %v4441
        %v4443 = vsub.f32 1.5, %v4442
        %v4444 = vmul.f32 %v4439, %v4443
        %v4445 = vmul.f32 %v4357, %v4444
        %vm4446 = vcmp.eq.f32.partialorder %v4357, inf
        %v4447 = vsel %vm4446, %v4357, %v4445
        %vm4448 = vcmp.eq.f32.partialorder %v4357, 0.0
        %v4449 = vand.u32 %v4357, 2147483648
        %v4450 = vsel %vm4448, %v4449, %v4447
        %v4451 = vrsqrt.pop %v4358
        %v4452 = vmul.f32 %v4451, %v4358
        %v4453 = vmul.f32 %v4452, %v4451
        %v4454 = vmul.f32 0.5, %v4453
        %v4455 = vsub.f32 1.5, %v4454
        %v4456 = vmul.f32 %v4451, %v4455
        %v4457 = vmul.f32 %v4358, %v4456
        %vm4458 = vcmp.eq.f32.partialorder %v4358, inf
        %v4459 = vsel %vm4458, %v4358, %v4457
        %vm4460 = vcmp.eq.f32.partialorder %v4358, 0.0
        %v4461 = vand.u32 %v4358, 2147483648
        %v4462 = vsel %vm4460, %v4461, %v4459
        %v4463 = vrsqrt.pop %v4359
        %v4464 = vmul.f32 %v4463, %v4359
        %v4465 = vmul.f32 %v4464, %v4463
        %v4466 = vmul.f32 0.5, %v4465
        %v4467 = vsub.f32 1.5, %v4466
        %v4468 = vmul.f32 %v4463, %v4467
        %v4469 = vmul.f32 %v4359, %v4468
        %vm4470 = vcmp.eq.f32.partialorder %v4359, inf
        %v4471 = vsel %vm4470, %v4359, %v4469
        %vm4472 = vcmp.eq.f32.partialorder %v4359, 0.0
        %v4473 = vand.u32 %v4359, 2147483648
        %v4474 = vsel %vm4472, %v4473, %v4471
        %v4475 = vrsqrt.pop %v4360
        %v4476 = vmul.f32 %v4475, %v4360
        %v4477 = vmul.f32 %v4476, %v4475
        %v4478 = vmul.f32 0.5, %v4477
        %v4479 = vsub.f32 1.5, %v4478
        %v4480 = vmul.f32 %v4475, %v4479
        %v4481 = vmul.f32 %v4360, %v4480
        %vm4482 = vcmp.eq.f32.partialorder %v4360, inf
        %v4483 = vsel %vm4482, %v4360, %v4481
        %vm4484 = vcmp.eq.f32.partialorder %v4360, 0.0
        %v4485 = vand.u32 %v4360, 2147483648
        %v4486 = vsel %vm4484, %v4485, %v4483
        %v4487 = vrsqrt.pop %v4361
        %v4488 = vmul.f32 %v4487, %v4361
        %v4489 = vmul.f32 %v4488, %v4487
        %v4490 = vmul.f32 0.5, %v4489
        %v4491 = vsub.f32 1.5, %v4490
        %v4492 = vmul.f32 %v4487, %v4491
        %v4493 = vmul.f32 %v4361, %v4492
        %vm4494 = vcmp.eq.f32.partialorder %v4361, inf
        %v4495 = vsel %vm4494, %v4361, %v4493
        %vm4496 = vcmp.eq.f32.partialorder %v4361, 0.0
        %v4497 = vand.u32 %v4361, 2147483648
        %v4498 = vsel %vm4496, %v4497, %v4495
        %v4499 = vrsqrt.pop %v4362
        %v4500 = vmul.f32 %v4499, %v4362
        %v4501 = vmul.f32 %v4500, %v4499
        %v4502 = vmul.f32 0.5, %v4501
        %v4503 = vsub.f32 1.5, %v4502
        %v4504 = vmul.f32 %v4499, %v4503
        %v4505 = vmul.f32 %v4362, %v4504
        %vm4506 = vcmp.eq.f32.partialorder %v4362, inf
        %v4507 = vsel %vm4506, %v4362, %v4505
        %vm4508 = vcmp.eq.f32.partialorder %v4362, 0.0
        %v4509 = vand.u32 %v4362, 2147483648
        %v4510 = vsel %vm4508, %v4509, %v4507
        %v4511 = vrsqrt.pop %v4363
        %v4512 = vmul.f32 %v4511, %v4363
        %v4513 = vmul.f32 %v4512, %v4511
        %v4514 = vmul.f32 0.5, %v4513
        %v4515 = vsub.f32 1.5, %v4514
        %v4516 = vmul.f32 %v4511, %v4515
        %v4517 = vmul.f32 %v4363, %v4516
        %vm4518 = vcmp.eq.f32.partialorder %v4363, inf
        %v4519 = vsel %vm4518, %v4363, %v4517
        %vm4520 = vcmp.eq.f32.partialorder %v4363, 0.0
        %v4521 = vand.u32 %v4363, 2147483648
        %v4522 = vsel %vm4520, %v4521, %v4519
        %v4523 = vrsqrt.pop %v4364
        %v4524 = vmul.f32 %v4523, %v4364
        %v4525 = vmul.f32 %v4524, %v4523
        %v4526 = vmul.f32 0.5, %v4525
        %v4527 = vsub.f32 1.5, %v4526
        %v4528 = vmul.f32 %v4523, %v4527
        %v4529 = vmul.f32 %v4364, %v4528
        %vm4530 = vcmp.eq.f32.partialorder %v4364, inf
        %v4531 = vsel %vm4530, %v4364, %v4529
        %vm4532 = vcmp.eq.f32.partialorder %v4364, 0.0
        %v4533 = vand.u32 %v4364, 2147483648
        %v4534 = vsel %vm4532, %v4533, %v4531
        %v4535 = vrsqrt.pop %v4365
        %v4536 = vmul.f32 %v4535, %v4365
        %v4537 = vmul.f32 %v4536, %v4535
        %v4538 = vmul.f32 0.5, %v4537
        %v4539 = vsub.f32 1.5, %v4538
        %v4540 = vmul.f32 %v4535, %v4539
        %v4541 = vmul.f32 %v4365, %v4540
        %vm4542 = vcmp.eq.f32.partialorder %v4365, inf
        %v4543 = vsel %vm4542, %v4365, %v4541
        %vm4544 = vcmp.eq.f32.partialorder %v4365, 0.0
        %v4545 = vand.u32 %v4365, 2147483648
        %v4546 = vsel %vm4544, %v4545, %v4543
        %v4547 = vrsqrt.pop %v4366
        %v4548 = vmul.f32 %v4547, %v4366
        %v4549 = vmul.f32 %v4548, %v4547
        %v4550 = vmul.f32 0.5, %v4549
        %v4551 = vsub.f32 1.5, %v4550
        %v4552 = vmul.f32 %v4547, %v4551
        %v4553 = vmul.f32 %v4366, %v4552
        %vm4554 = vcmp.eq.f32.partialorder %v4366, inf
        %v4555 = vsel %vm4554, %v4366, %v4553
        %vm4556 = vcmp.eq.f32.partialorder %v4366, 0.0
        %v4557 = vand.u32 %v4366, 2147483648
        %v4558 = vsel %vm4556, %v4557, %v4555
        %v4559 = vadd.f32 %v4378, 1e-06
        %v4560 = vadd.f32 %v4390, 1e-06
        %v4561 = vadd.f32 %v4402, 1e-06
        %v4562 = vadd.f32 %v4414, 1e-06
        %v4563 = vadd.f32 %v4426, 1e-06
        %v4564 = vadd.f32 %v4438, 1e-06
        %v4565 = vadd.f32 %v4450, 1e-06
        %v4566 = vadd.f32 %v4462, 1e-06
        %v4567 = vadd.f32 %v4474, 1e-06
        %v4568 = vadd.f32 %v4486, 1e-06
        %v4569 = vadd.f32 %v4498, 1e-06
        %v4570 = vadd.f32 %v4510, 1e-06
        %v4571 = vadd.f32 %v4522, 1e-06
        %v4572 = vadd.f32 %v4534, 1e-06
        %v4573 = vadd.f32 %v4546, 1e-06
        %v4574 = vadd.f32 %v4558, 1e-06
        %v4575 = vrcp.pop %v4559
        %v4576 = vmul.f32 %v4559, %v4575
        %v4577 = vsub.f32 1.0, %v4576
        %v4578 = vmul.f32 %v4575, %v4577
        %v4579 = vadd.f32 %v4575, %v4578
        %vm4580 = vweird.f32 %v4559
        %vm4581 = vweird.f32 %v4575
        %vm4582 = vmor %vm4580, %vm4581
        %v4583 = vsel %vm4582, %v4575, %v4579
        %v4584 = vand.u32 2147483647, %v4559
        %vm4585 = vcmp.eq.f32.partialorder %v4584, 8.507059e+37
        %v4586 = vand.u32 %v4559, 2147483648
        %v4587 = vor.u32 1.1754944e-38, %v4586
        %v4588 = vsel %vm4585, %v4587, %v4583
        %v4589 = vmul.f32 %v4287, %v4588
        %v4590 = vrcp.pop %v4560
        %v4591 = vmul.f32 %v4560, %v4590
        %v4592 = vsub.f32 1.0, %v4591
        %v4593 = vmul.f32 %v4590, %v4592
        %v4594 = vadd.f32 %v4590, %v4593
        %vm4595 = vweird.f32 %v4560
        %vm4596 = vweird.f32 %v4590
        %vm4597 = vmor %vm4595, %vm4596
        %v4598 = vsel %vm4597, %v4590, %v4594
        %v4599 = vand.u32 2147483647, %v4560
        %vm4600 = vcmp.eq.f32.partialorder %v4599, 8.507059e+37
        %v4601 = vand.u32 %v4560, 2147483648
        %v4602 = vor.u32 1.1754944e-38, %v4601
        %v4603 = vsel %vm4600, %v4602, %v4598
        %v4604 = vmul.f32 %v4288, %v4603
        %v4605 = vrcp.pop %v4561
        %v4606 = vmul.f32 %v4561, %v4605
        %v4607 = vsub.f32 1.0, %v4606
        %v4608 = vmul.f32 %v4605, %v4607
        %v4609 = vadd.f32 %v4605, %v4608
        %vm4610 = vweird.f32 %v4561
        %vm4611 = vweird.f32 %v4605
        %vm4612 = vmor %vm4610, %vm4611
        %v4613 = vsel %vm4612, %v4605, %v4609
        %v4614 = vand.u32 2147483647, %v4561
        %vm4615 = vcmp.eq.f32.partialorder %v4614, 8.507059e+37
        %v4616 = vand.u32 %v4561, 2147483648
        %v4617 = vor.u32 1.1754944e-38, %v4616
        %v4618 = vsel %vm4615, %v4617, %v4613
        %v4619 = vmul.f32 %v4289, %v4618
        %v4620 = vrcp.pop %v4562
        %v4621 = vmul.f32 %v4562, %v4620
        %v4622 = vsub.f32 1.0, %v4621
        %v4623 = vmul.f32 %v4620, %v4622
        %v4624 = vadd.f32 %v4620, %v4623
        %vm4625 = vweird.f32 %v4562
        %vm4626 = vweird.f32 %v4620
        %vm4627 = vmor %vm4625, %vm4626
        %v4628 = vsel %vm4627, %v4620, %v4624
        %v4629 = vand.u32 2147483647, %v4562
        %vm4630 = vcmp.eq.f32.partialorder %v4629, 8.507059e+37
        %v4631 = vand.u32 %v4562, 2147483648
        %v4632 = vor.u32 1.1754944e-38, %v4631
        %v4633 = vsel %vm4630, %v4632, %v4628
        %v4634 = vmul.f32 %v4290, %v4633
        %v4635 = vrcp.pop %v4563
        %v4636 = vmul.f32 %v4563, %v4635
        %v4637 = vsub.f32 1.0, %v4636
        %v4638 = vmul.f32 %v4635, %v4637
        %v4639 = vadd.f32 %v4635, %v4638
        %vm4640 = vweird.f32 %v4563
        %vm4641 = vweird.f32 %v4635
        %vm4642 = vmor %vm4640, %vm4641
        %v4643 = vsel %vm4642, %v4635, %v4639
        %v4644 = vand.u32 2147483647, %v4563
        %vm4645 = vcmp.eq.f32.partialorder %v4644, 8.507059e+37
        %v4646 = vand.u32 %v4563, 2147483648
        %v4647 = vor.u32 1.1754944e-38, %v4646
        %v4648 = vsel %vm4645, %v4647, %v4643
        %v4649 = vmul.f32 %v4291, %v4648
        %v4650 = vrcp.pop %v4564
        %v4651 = vmul.f32 %v4564, %v4650
        %v4652 = vsub.f32 1.0, %v4651
        %v4653 = vmul.f32 %v4650, %v4652
        %v4654 = vadd.f32 %v4650, %v4653
        %vm4655 = vweird.f32 %v4564
        %vm4656 = vweird.f32 %v4650
        %vm4657 = vmor %vm4655, %vm4656
        %v4658 = vsel %vm4657, %v4650, %v4654
        %v4659 = vand.u32 2147483647, %v4564
        %vm4660 = vcmp.eq.f32.partialorder %v4659, 8.507059e+37
        %v4661 = vand.u32 %v4564, 2147483648
        %v4662 = vor.u32 1.1754944e-38, %v4661
        %v4663 = vsel %vm4660, %v4662, %v4658
        %v4664 = vmul.f32 %v4292, %v4663
        %v4665 = vrcp.pop %v4565
        %v4666 = vmul.f32 %v4565, %v4665
        %v4667 = vsub.f32 1.0, %v4666
        %v4668 = vmul.f32 %v4665, %v4667
        %v4669 = vadd.f32 %v4665, %v4668
        %vm4670 = vweird.f32 %v4565
        %vm4671 = vweird.f32 %v4665
        %vm4672 = vmor %vm4670, %vm4671
        %v4673 = vsel %vm4672, %v4665, %v4669
        %v4674 = vand.u32 2147483647, %v4565
        %vm4675 = vcmp.eq.f32.partialorder %v4674, 8.507059e+37
        %v4676 = vand.u32 %v4565, 2147483648
        %v4677 = vor.u32 1.1754944e-38, %v4676
        %v4678 = vsel %vm4675, %v4677, %v4673
        %v4679 = vmul.f32 %v4293, %v4678
        %v4680 = vrcp.pop %v4566
        %v4681 = vmul.f32 %v4566, %v4680
        %v4682 = vsub.f32 1.0, %v4681
        %v4683 = vmul.f32 %v4680, %v4682
        %v4684 = vadd.f32 %v4680, %v4683
        %vm4685 = vweird.f32 %v4566
        %vm4686 = vweird.f32 %v4680
        %vm4687 = vmor %vm4685, %vm4686
        %v4688 = vsel %vm4687, %v4680, %v4684
        %v4689 = vand.u32 2147483647, %v4566
        %vm4690 = vcmp.eq.f32.partialorder %v4689, 8.507059e+37
        %v4691 = vand.u32 %v4566, 2147483648
        %v4692 = vor.u32 1.1754944e-38, %v4691
        %v4693 = vsel %vm4690, %v4692, %v4688
        %v4694 = vmul.f32 %v4294, %v4693
        %v4695 = vrcp.pop %v4567
        %v4696 = vmul.f32 %v4567, %v4695
        %v4697 = vsub.f32 1.0, %v4696
        %v4698 = vmul.f32 %v4695, %v4697
        %v4699 = vadd.f32 %v4695, %v4698
        %vm4700 = vweird.f32 %v4567
        %vm4701 = vweird.f32 %v4695
        %vm4702 = vmor %vm4700, %vm4701
        %v4703 = vsel %vm4702, %v4695, %v4699
        %v4704 = vand.u32 2147483647, %v4567
        %vm4705 = vcmp.eq.f32.partialorder %v4704, 8.507059e+37
        %v4706 = vand.u32 %v4567, 2147483648
        %v4707 = vor.u32 1.1754944e-38, %v4706
        %v4708 = vsel %vm4705, %v4707, %v4703
        %v4709 = vmul.f32 %v4295, %v4708
        %v4710 = vrcp.pop %v4568
        %v4711 = vmul.f32 %v4568, %v4710
        %v4712 = vsub.f32 1.0, %v4711
        %v4713 = vmul.f32 %v4710, %v4712
        %v4714 = vadd.f32 %v4710, %v4713
        %vm4715 = vweird.f32 %v4568
        %vm4716 = vweird.f32 %v4710
        %vm4717 = vmor %vm4715, %vm4716
        %v4718 = vsel %vm4717, %v4710, %v4714
        %v4719 = vand.u32 2147483647, %v4568
        %vm4720 = vcmp.eq.f32.partialorder %v4719, 8.507059e+37
        %v4721 = vand.u32 %v4568, 2147483648
        %v4722 = vor.u32 1.1754944e-38, %v4721
        %v4723 = vsel %vm4720, %v4722, %v4718
        %v4724 = vmul.f32 %v4296, %v4723
        %v4725 = vrcp.pop %v4569
        %v4726 = vmul.f32 %v4569, %v4725
        %v4727 = vsub.f32 1.0, %v4726
        %v4728 = vmul.f32 %v4725, %v4727
        %v4729 = vadd.f32 %v4725, %v4728
        %vm4730 = vweird.f32 %v4569
        %vm4731 = vweird.f32 %v4725
        %vm4732 = vmor %vm4730, %vm4731
        %v4733 = vsel %vm4732, %v4725, %v4729
        %v4734 = vand.u32 2147483647, %v4569
        %vm4735 = vcmp.eq.f32.partialorder %v4734, 8.507059e+37
        %v4736 = vand.u32 %v4569, 2147483648
        %v4737 = vor.u32 1.1754944e-38, %v4736
        %v4738 = vsel %vm4735, %v4737, %v4733
        %v4739 = vmul.f32 %v4297, %v4738
        %v4740 = vrcp.pop %v4570
        %v4741 = vmul.f32 %v4570, %v4740
        %v4742 = vsub.f32 1.0, %v4741
        %v4743 = vmul.f32 %v4740, %v4742
        %v4744 = vadd.f32 %v4740, %v4743
        %vm4745 = vweird.f32 %v4570
        %vm4746 = vweird.f32 %v4740
        %vm4747 = vmor %vm4745, %vm4746
        %v4748 = vsel %vm4747, %v4740, %v4744
        %v4749 = vand.u32 2147483647, %v4570
        %vm4750 = vcmp.eq.f32.partialorder %v4749, 8.507059e+37
        %v4751 = vand.u32 %v4570, 2147483648
        %v4752 = vor.u32 1.1754944e-38, %v4751
        %v4753 = vsel %vm4750, %v4752, %v4748
        %v4754 = vmul.f32 %v4298, %v4753
        %v4755 = vrcp.pop %v4571
        %v4756 = vmul.f32 %v4571, %v4755
        %v4757 = vsub.f32 1.0, %v4756
        %v4758 = vmul.f32 %v4755, %v4757
        %v4759 = vadd.f32 %v4755, %v4758
        %vm4760 = vweird.f32 %v4571
        %vm4761 = vweird.f32 %v4755
        %vm4762 = vmor %vm4760, %vm4761
        %v4763 = vsel %vm4762, %v4755, %v4759
        %v4764 = vand.u32 2147483647, %v4571
        %vm4765 = vcmp.eq.f32.partialorder %v4764, 8.507059e+37
        %v4766 = vand.u32 %v4571, 2147483648
        %v4767 = vor.u32 1.1754944e-38, %v4766
        %v4768 = vsel %vm4765, %v4767, %v4763
        %v4769 = vmul.f32 %v4299, %v4768
        %v4770 = vrcp.pop %v4572
        %v4771 = vmul.f32 %v4572, %v4770
        %v4772 = vsub.f32 1.0, %v4771
        %v4773 = vmul.f32 %v4770, %v4772
        %v4774 = vadd.f32 %v4770, %v4773
        %vm4775 = vweird.f32 %v4572
        %vm4776 = vweird.f32 %v4770
        %vm4777 = vmor %vm4775, %vm4776
        %v4778 = vsel %vm4777, %v4770, %v4774
        %v4779 = vand.u32 2147483647, %v4572
        %vm4780 = vcmp.eq.f32.partialorder %v4779, 8.507059e+37
        %v4781 = vand.u32 %v4572, 2147483648
        %v4782 = vor.u32 1.1754944e-38, %v4781
        %v4783 = vsel %vm4780, %v4782, %v4778
        %v4784 = vmul.f32 %v4300, %v4783
        %v4785 = vrcp.pop %v4573
        %v4786 = vmul.f32 %v4573, %v4785
        %v4787 = vsub.f32 1.0, %v4786
        %v4788 = vmul.f32 %v4785, %v4787
        %v4789 = vadd.f32 %v4785, %v4788
        %vm4790 = vweird.f32 %v4573
        %vm4791 = vweird.f32 %v4785
        %vm4792 = vmor %vm4790, %vm4791
        %v4793 = vsel %vm4792, %v4785, %v4789
        %v4794 = vand.u32 2147483647, %v4573
        %vm4795 = vcmp.eq.f32.partialorder %v4794, 8.507059e+37
        %v4796 = vand.u32 %v4573, 2147483648
        %v4797 = vor.u32 1.1754944e-38, %v4796
        %v4798 = vsel %vm4795, %v4797, %v4793
        %v4799 = vmul.f32 %v4301, %v4798
        %v4800 = vrcp.pop %v4574
        %v4801 = vmul.f32 %v4574, %v4800
        %v4802 = vsub.f32 1.0, %v4801
        %v4803 = vmul.f32 %v4800, %v4802
        %v4804 = vadd.f32 %v4800, %v4803
        %vm4805 = vweird.f32 %v4574
        %vm4806 = vweird.f32 %v4800
        %vm4807 = vmor %vm4805, %vm4806
        %v4808 = vsel %vm4807, %v4800, %v4804
        %v4809 = vand.u32 2147483647, %v4574
        %vm4810 = vcmp.eq.f32.partialorder %v4809, 8.507059e+37
        %v4811 = vand.u32 %v4574, 2147483648
        %v4812 = vor.u32 1.1754944e-38, %v4811
        %v4813 = vsel %vm4810, %v4812, %v4808
        %v4814 = vmul.f32 %v4302, %v4813
        %v4815 = vld [vmem:[#allocation3] sm:$0xf]
        %v4816 = vld [vmem:[#allocation3 + $0x4] sm:$0xf]
        %v4817 = vld [vmem:[#allocation3 + $0x8] sm:$0xf]
        %v4818 = vld [vmem:[#allocation3 + $0xc] sm:$0xf]
        %v4819 = vld [vmem:[#allocation3 + $0x10] sm:$0xf]
        %v4820 = vld [vmem:[#allocation3 + $0x14] sm:$0xf]
        %v4821 = vld [vmem:[#allocation3 + $0x18] sm:$0xf]
        %v4822 = vld [vmem:[#allocation3 + $0x1c] sm:$0xf]
        %v4823 = vld [vmem:[#allocation3 + $0x20] sm:$0xf]
        %v4824 = vld [vmem:[#allocation3 + $0x24] sm:$0xf]
        %v4825 = vld [vmem:[#allocation3 + $0x28] sm:$0xf]
        %v4826 = vld [vmem:[#allocation3 + $0x2c] sm:$0xf]
        %v4827 = vld [vmem:[#allocation3 + $0x30] sm:$0xf]
        %v4828 = vld [vmem:[#allocation3 + $0x34] sm:$0xf]
        %v4829 = vld [vmem:[#allocation3 + $0x38] sm:$0xf]
        %v4830 = vld [vmem:[#allocation3 + $0x3c] sm:$0xf]
        %v4831 = vld [vmem:[%s640] sm:$0xff]
        %v4832 = vld [vmem:[%s640 + $0x8] sm:$0xff]
        %v4833 = vld [vmem:[%s640 + $0x10] sm:$0xff]
        %v4834 = vld [vmem:[%s640 + $0x18] sm:$0xff]
        %v4835 = vld [vmem:[%s640 + $0x20] sm:$0xff]
        %v4836 = vld [vmem:[%s640 + $0x28] sm:$0xff]
        %v4837 = vld [vmem:[%s640 + $0x30] sm:$0xff]
        %v4838 = vld [vmem:[%s640 + $0x38] sm:$0xff]
        %v4839 = vld [vmem:[%s640 + $0x40] sm:$0xff]
        %v4840 = vld [vmem:[%s640 + $0x48] sm:$0xff]
        %v4841 = vld [vmem:[%s640 + $0x50] sm:$0xff]
        %v4842 = vld [vmem:[%s640 + $0x58] sm:$0xff]
        %v4843 = vld [vmem:[%s640 + $0x60] sm:$0xff]
        %v4844 = vld [vmem:[%s640 + $0x68] sm:$0xff]
        %v4845 = vld [vmem:[%s640 + $0x70] sm:$0xff]
        %v4846 = vld [vmem:[%s640 + $0x78] sm:$0xff]
        %v4847 = vld [vmem:[%s748] sm:$0x3]
        %v4849 = vperm.slane %v4847, 0
        %v4850 = vperm.slane %v4847, 1
        %v4869 = vunpack.c.l.b16 %v4815
        %v4870 = vunpack.c.l.b16 %v4816
        %v4871 = vunpack.c.l.b16 %v4817
        %v4872 = vunpack.c.l.b16 %v4818
        %v4873 = vunpack.c.l.b16 %v4819
        %v4874 = vunpack.c.l.b16 %v4820
        %v4875 = vunpack.c.l.b16 %v4821
        %v4876 = vunpack.c.l.b16 %v4822
        %v4877 = vunpack.c.l.b16 %v4823
        %v4878 = vunpack.c.l.b16 %v4824
        %v4879 = vunpack.c.l.b16 %v4825
        %v4880 = vunpack.c.l.b16 %v4826
        %v4881 = vunpack.c.l.b16 %v4827
        %v4882 = vunpack.c.l.b16 %v4828
        %v4883 = vunpack.c.l.b16 %v4829
        %v4884 = vunpack.c.l.b16 %v4830
        %v4885 = vpack.c.b16 %v4870, %v4869
        %v4886 = vpack.c.b16 %v4872, %v4871
        %v4887 = vpack.c.b16 %v4874, %v4873
        %v4888 = vpack.c.b16 %v4876, %v4875
        %v4889 = vpack.c.b16 %v4878, %v4877
        %v4890 = vpack.c.b16 %v4880, %v4879
        %v4891 = vpack.c.b16 %v4882, %v4881
        %v4892 = vpack.c.b16 %v4884, %v4883
        %v4917 = vunpack.c.l.b16 %v4831
        %v4918 = vunpack.c.h.b16 %v4831
        %v4919 = vunpack.c.l.b16 %v4832
        %v4920 = vunpack.c.h.b16 %v4832
        %v4921 = vunpack.c.l.b16 %v4833
        %v4922 = vunpack.c.h.b16 %v4833
        %v4923 = vunpack.c.l.b16 %v4834
        %v4924 = vunpack.c.h.b16 %v4834
        %v4925 = vunpack.c.l.b16 %v4835
        %v4926 = vunpack.c.h.b16 %v4835
        %v4927 = vunpack.c.l.b16 %v4836
        %v4928 = vunpack.c.h.b16 %v4836
        %v4929 = vunpack.c.l.b16 %v4837
        %v4930 = vunpack.c.h.b16 %v4837
        %v4931 = vunpack.c.l.b16 %v4838
        %v4932 = vunpack.c.h.b16 %v4838
        %v4933 = vunpack.c.l.b16 %v4839
        %v4934 = vunpack.c.h.b16 %v4839
        %v4935 = vunpack.c.l.b16 %v4840
        %v4936 = vunpack.c.h.b16 %v4840
        %v4937 = vunpack.c.l.b16 %v4841
        %v4938 = vunpack.c.h.b16 %v4841
        %v4939 = vunpack.c.l.b16 %v4842
        %v4940 = vunpack.c.h.b16 %v4842
        %v4941 = vunpack.c.l.b16 %v4843
        %v4942 = vunpack.c.h.b16 %v4843
        %v4943 = vunpack.c.l.b16 %v4844
        %v4944 = vunpack.c.h.b16 %v4844
        %v4945 = vunpack.c.l.b16 %v4845
        %v4946 = vunpack.c.h.b16 %v4845
        %v4947 = vunpack.c.l.b16 %v4846
        %v4948 = vunpack.c.h.b16 %v4846
        %v4949 = vpack.c.b16 %v4919, %v4917
        %v4950 = vpack.c.b16 %v4920, %v4918
        %v4951 = vpack.c.b16 %v4923, %v4921
        %v4952 = vpack.c.b16 %v4924, %v4922
        %v4953 = vpack.c.b16 %v4927, %v4925
        %v4954 = vpack.c.b16 %v4928, %v4926
        %v4955 = vpack.c.b16 %v4931, %v4929
        %v4956 = vpack.c.b16 %v4932, %v4930
        %v4957 = vpack.c.b16 %v4935, %v4933
        %v4958 = vpack.c.b16 %v4936, %v4934
        %v4959 = vpack.c.b16 %v4939, %v4937
        %v4960 = vpack.c.b16 %v4940, %v4938
        %v4961 = vpack.c.b16 %v4943, %v4941
        %v4962 = vpack.c.b16 %v4944, %v4942
        %v4963 = vpack.c.b16 %v4947, %v4945
        %v4964 = vpack.c.b16 %v4948, %v4946
        %4981 = vmatpush.bf16.msra.mxu0 %v4963
        %4982 = vmatpush.bf16.msra.mxu0 %v4961
        %4983 = vmatpush.bf16.msra.mxu0 %v4959
        %4984 = vmatpush.bf16.msra.mxu0 %v4957
        %4985 = vmatpush.bf16.msra.mxu0 %v4955
        %4986 = vmatpush.bf16.msra.mxu0 %v4953
        %4987 = vmatpush.bf16.msra.mxu0 %v4951
        %4988 = vmatpush.bf16.msra.mxu0 %v4949
        %4989 = vmatmul.bf16.gmra.mxu0 %v4885
        %v4990 = vpop.f32.mrf.mxu0
        %v4991 = vadd.f32 %v4849, %v4990
        %v4992 = vpop.f32.mrf.mxu0
        %v4993 = vadd.f32 %v4849, %v4992
        %4994 = vmatmul.bf16.gmra.mxu0 %v4886
        %v4995 = vpop.f32.mrf.mxu0
        %v4996 = vadd.f32 %v4849, %v4995
        %v4997 = vpop.f32.mrf.mxu0
        %v4998 = vadd.f32 %v4849, %v4997
        %4999 = vmatmul.bf16.gmra.mxu0 %v4887
        %v5000 = vpop.f32.mrf.mxu0
        %v5001 = vadd.f32 %v4849, %v5000
        %v5002 = vpop.f32.mrf.mxu0
        %v5003 = vadd.f32 %v4849, %v5002
        %5004 = vmatmul.bf16.gmra.mxu0 %v4888
        %v5005 = vpop.f32.mrf.mxu0
        %v5006 = vadd.f32 %v4849, %v5005
        %v5007 = vpop.f32.mrf.mxu0
        %v5008 = vadd.f32 %v4849, %v5007
        %5009 = vmatmul.bf16.gmra.mxu0 %v4889
        %v5010 = vpop.f32.mrf.mxu0
        %v5011 = vadd.f32 %v4849, %v5010
        %v5012 = vpop.f32.mrf.mxu0
        %v5013 = vadd.f32 %v4849, %v5012
        %5014 = vmatmul.bf16.gmra.mxu0 %v4890
        %v5015 = vpop.f32.mrf.mxu0
        %v5016 = vadd.f32 %v4849, %v5015
        %v5017 = vpop.f32.mrf.mxu0
        %v5018 = vadd.f32 %v4849, %v5017
        %5019 = vmatmul.bf16.gmra.mxu0 %v4891
        %v5020 = vpop.f32.mrf.mxu0
        %v5021 = vadd.f32 %v4849, %v5020
        %v5022 = vpop.f32.mrf.mxu0
        %v5023 = vadd.f32 %v4849, %v5022
        %5024 = vmatmul.bf16.gmra.mxu0 %v4892
        %v5025 = vpop.f32.mrf.mxu0
        %v5026 = vadd.f32 %v4849, %v5025
        %v5027 = vpop.f32.mrf.mxu0
        %v5028 = vadd.f32 %v4849, %v5027
        %5029 = vdwg.mxu0
        %5030 = vmatpush.bf16.msra.mxu0 %v4964
        %5031 = vmatpush.bf16.msra.mxu0 %v4962
        %5032 = vmatpush.bf16.msra.mxu0 %v4960
        %5033 = vmatpush.bf16.msra.mxu0 %v4958
        %5034 = vmatpush.bf16.msra.mxu0 %v4956
        %5035 = vmatpush.bf16.msra.mxu0 %v4954
        %5036 = vmatpush.bf16.msra.mxu0 %v4952
        %5037 = vmatpush.bf16.msra.mxu0 %v4950
        %5038 = vmatmul.bf16.gmra.mxu0 %v4885
        %v5039 = vpop.f32.mrf.mxu0
        %v5040 = vadd.f32 %v4850, %v5039
        %v5041 = vpop.f32.mrf.mxu0
        %v5042 = vadd.f32 %v4850, %v5041
        %5043 = vmatmul.bf16.gmra.mxu0 %v4886
        %v5044 = vpop.f32.mrf.mxu0
        %v5045 = vadd.f32 %v4850, %v5044
        %v5046 = vpop.f32.mrf.mxu0
        %v5047 = vadd.f32 %v4850, %v5046
        %5048 = vmatmul.bf16.gmra.mxu0 %v4887
        %v5049 = vpop.f32.mrf.mxu0
        %v5050 = vadd.f32 %v4850, %v5049
        %v5051 = vpop.f32.mrf.mxu0
        %v5052 = vadd.f32 %v4850, %v5051
        %5053 = vmatmul.bf16.gmra.mxu0 %v4888
        %v5054 = vpop.f32.mrf.mxu0
        %v5055 = vadd.f32 %v4850, %v5054
        %v5056 = vpop.f32.mrf.mxu0
        %v5057 = vadd.f32 %v4850, %v5056
        %5058 = vmatmul.bf16.gmra.mxu0 %v4889
        %v5059 = vpop.f32.mrf.mxu0
        %v5060 = vadd.f32 %v4850, %v5059
        %v5061 = vpop.f32.mrf.mxu0
        %v5062 = vadd.f32 %v4850, %v5061
        %5063 = vmatmul.bf16.gmra.mxu0 %v4890
        %v5064 = vpop.f32.mrf.mxu0
        %v5065 = vadd.f32 %v4850, %v5064
        %v5066 = vpop.f32.mrf.mxu0
        %v5067 = vadd.f32 %v4850, %v5066
        %5068 = vmatmul.bf16.gmra.mxu0 %v4891
        %v5069 = vpop.f32.mrf.mxu0
        %v5070 = vadd.f32 %v4850, %v5069
        %v5071 = vpop.f32.mrf.mxu0
        %v5072 = vadd.f32 %v4850, %v5071
        %5073 = vmatmul.bf16.gmra.mxu0 %v4892
        %v5074 = vpop.f32.mrf.mxu0
        %v5075 = vadd.f32 %v4850, %v5074
        %v5076 = vpop.f32.mrf.mxu0
        %v5077 = vadd.f32 %v4850, %v5076
        %5078 = vdwg.mxu0
        %v5079 = vmul.f32 %v4589, %v5040
        %v5080 = vmul.f32 %v4604, %v5042
        %v5081 = vmul.f32 %v4619, %v5045
        %v5082 = vmul.f32 %v4634, %v5047
        %v5083 = vmul.f32 %v4649, %v5050
        %v5084 = vmul.f32 %v4664, %v5052
        %v5085 = vmul.f32 %v4679, %v5055
        %v5086 = vmul.f32 %v4694, %v5057
        %v5087 = vmul.f32 %v4709, %v5060
        %v5088 = vmul.f32 %v4724, %v5062
        %v5089 = vmul.f32 %v4739, %v5065
        %v5090 = vmul.f32 %v4754, %v5067
        %v5091 = vmul.f32 %v4769, %v5070
        %v5092 = vmul.f32 %v4784, %v5072
        %v5093 = vmul.f32 %v4799, %v5075
        %v5094 = vmul.f32 %v4814, %v5077
        %v5095 = vadd.f32 %v5079, %v4991
        %v5096 = vadd.f32 %v5080, %v4993
        %v5097 = vadd.f32 %v5081, %v4996
        %v5098 = vadd.f32 %v5082, %v4998
        %v5099 = vadd.f32 %v5083, %v5001
        %v5100 = vadd.f32 %v5084, %v5003
        %v5101 = vadd.f32 %v5085, %v5006
        %v5102 = vadd.f32 %v5086, %v5008
        %v5103 = vadd.f32 %v5087, %v5011
        %v5104 = vadd.f32 %v5088, %v5013
        %v5105 = vadd.f32 %v5089, %v5016
        %v5106 = vadd.f32 %v5090, %v5018
        %v5107 = vadd.f32 %v5091, %v5021
        %v5108 = vadd.f32 %v5092, %v5023
        %v5109 = vadd.f32 %v5093, %v5026
        %v5110 = vadd.f32 %v5094, %v5028
        %v5111 = vpack.c.bf16 %v5096, %v5095
        %v5112 = vpack.c.bf16 %v5098, %v5097
        %v5113 = vpack.c.bf16 %v5100, %v5099
        %v5114 = vpack.c.bf16 %v5102, %v5101
        %v5115 = vpack.c.bf16 %v5104, %v5103
        %v5116 = vpack.c.bf16 %v5106, %v5105
        %v5117 = vpack.c.bf16 %v5108, %v5107
        %v5118 = vpack.c.bf16 %v5110, %v5109
        %v5119 = vld [vmem:[%s650] sm:$0xff]
        %v5120 = vld [vmem:[%s650 + $0x8] sm:$0xff]
        %v5121 = vld [vmem:[%s650 + $0x10] sm:$0xff]
        %v5122 = vld [vmem:[%s650 + $0x18] sm:$0xff]
        %v5123 = vld [vmem:[%s650 + $0x20] sm:$0xff]
        %v5124 = vld [vmem:[%s650 + $0x28] sm:$0xff]
        %v5125 = vld [vmem:[%s650 + $0x30] sm:$0xff]
        %v5126 = vld [vmem:[%s650 + $0x38] sm:$0xff]
        %v5127 = vld [vmem:[%s650 + $0x40] sm:$0xff]
        %v5128 = vld [vmem:[%s650 + $0x48] sm:$0xff]
        %v5129 = vld [vmem:[%s650 + $0x50] sm:$0xff]
        %v5130 = vld [vmem:[%s650 + $0x58] sm:$0xff]
        %v5131 = vld [vmem:[%s650 + $0x60] sm:$0xff]
        %v5132 = vld [vmem:[%s650 + $0x68] sm:$0xff]
        %v5133 = vld [vmem:[%s650 + $0x70] sm:$0xff]
        %v5134 = vld [vmem:[%s650 + $0x78] sm:$0xff]
        %v5135 = vld [vmem:[%s752] sm:$0x3]
        %v5137 = vperm.slane %v5135, 0
        %v5138 = vperm.slane %v5135, 1
        %v5157 = vunpack.c.l.b16 %v5119
        %v5158 = vunpack.c.h.b16 %v5119
        %v5159 = vunpack.c.l.b16 %v5120
        %v5160 = vunpack.c.h.b16 %v5120
        %v5161 = vunpack.c.l.b16 %v5121
        %v5162 = vunpack.c.h.b16 %v5121
        %v5163 = vunpack.c.l.b16 %v5122
        %v5164 = vunpack.c.h.b16 %v5122
        %v5165 = vunpack.c.l.b16 %v5123
        %v5166 = vunpack.c.h.b16 %v5123
        %v5167 = vunpack.c.l.b16 %v5124
        %v5168 = vunpack.c.h.b16 %v5124
        %v5169 = vunpack.c.l.b16 %v5125
        %v5170 = vunpack.c.h.b16 %v5125
        %v5171 = vunpack.c.l.b16 %v5126
        %v5172 = vunpack.c.h.b16 %v5126
        %v5173 = vunpack.c.l.b16 %v5127
        %v5174 = vunpack.c.h.b16 %v5127
        %v5175 = vunpack.c.l.b16 %v5128
        %v5176 = vunpack.c.h.b16 %v5128
        %v5177 = vunpack.c.l.b16 %v5129
        %v5178 = vunpack.c.h.b16 %v5129
        %v5179 = vunpack.c.l.b16 %v5130
        %v5180 = vunpack.c.h.b16 %v5130
        %v5181 = vunpack.c.l.b16 %v5131
        %v5182 = vunpack.c.h.b16 %v5131
        %v5183 = vunpack.c.l.b16 %v5132
        %v5184 = vunpack.c.h.b16 %v5132
        %v5185 = vunpack.c.l.b16 %v5133
        %v5186 = vunpack.c.h.b16 %v5133
        %v5187 = vunpack.c.l.b16 %v5134
        %v5188 = vunpack.c.h.b16 %v5134
        %v5189 = vpack.c.b16 %v5159, %v5157
        %v5190 = vpack.c.b16 %v5160, %v5158
        %v5191 = vpack.c.b16 %v5163, %v5161
        %v5192 = vpack.c.b16 %v5164, %v5162
        %v5193 = vpack.c.b16 %v5167, %v5165
        %v5194 = vpack.c.b16 %v5168, %v5166
        %v5195 = vpack.c.b16 %v5171, %v5169
        %v5196 = vpack.c.b16 %v5172, %v5170
        %v5197 = vpack.c.b16 %v5175, %v5173
        %v5198 = vpack.c.b16 %v5176, %v5174
        %v5199 = vpack.c.b16 %v5179, %v5177
        %v5200 = vpack.c.b16 %v5180, %v5178
        %v5201 = vpack.c.b16 %v5183, %v5181
        %v5202 = vpack.c.b16 %v5184, %v5182
        %v5203 = vpack.c.b16 %v5187, %v5185
        %v5204 = vpack.c.b16 %v5188, %v5186
        %5221 = vmatpush.bf16.msra.mxu0 %v5203
        %5222 = vmatpush.bf16.msra.mxu0 %v5201
        %5223 = vmatpush.bf16.msra.mxu0 %v5199
        %5224 = vmatpush.bf16.msra.mxu0 %v5197
        %5225 = vmatpush.bf16.msra.mxu0 %v5195
        %5226 = vmatpush.bf16.msra.mxu0 %v5193
        %5227 = vmatpush.bf16.msra.mxu0 %v5191
        %5228 = vmatpush.bf16.msra.mxu0 %v5189
        %5229 = vmatmul.bf16.gmra.mxu0 %v5111
        %v5230 = vpop.f32.mrf.mxu0
        %v5231 = vadd.f32 %v5137, %v5230
        %v5232 = vpop.f32.mrf.mxu0
        %v5233 = vadd.f32 %v5137, %v5232
        %5234 = vmatmul.bf16.gmra.mxu0 %v5112
        %v5235 = vpop.f32.mrf.mxu0
        %v5236 = vadd.f32 %v5137, %v5235
        %v5237 = vpop.f32.mrf.mxu0
        %v5238 = vadd.f32 %v5137, %v5237
        %5239 = vmatmul.bf16.gmra.mxu0 %v5113
        %v5240 = vpop.f32.mrf.mxu0
        %v5241 = vadd.f32 %v5137, %v5240
        %v5242 = vpop.f32.mrf.mxu0
        %v5243 = vadd.f32 %v5137, %v5242
        %5244 = vmatmul.bf16.gmra.mxu0 %v5114
        %v5245 = vpop.f32.mrf.mxu0
        %v5246 = vadd.f32 %v5137, %v5245
        %v5247 = vpop.f32.mrf.mxu0
        %v5248 = vadd.f32 %v5137, %v5247
        %5249 = vmatmul.bf16.gmra.mxu0 %v5115
        %v5250 = vpop.f32.mrf.mxu0
        %v5251 = vadd.f32 %v5137, %v5250
        %v5252 = vpop.f32.mrf.mxu0
        %v5253 = vadd.f32 %v5137, %v5252
        %5254 = vmatmul.bf16.gmra.mxu0 %v5116
        %v5255 = vpop.f32.mrf.mxu0
        %v5256 = vadd.f32 %v5137, %v5255
        %v5257 = vpop.f32.mrf.mxu0
        %v5258 = vadd.f32 %v5137, %v5257
        %5259 = vmatmul.bf16.gmra.mxu0 %v5117
        %v5260 = vpop.f32.mrf.mxu0
        %v5261 = vadd.f32 %v5137, %v5260
        %v5262 = vpop.f32.mrf.mxu0
        %v5263 = vadd.f32 %v5137, %v5262
        %5264 = vmatmul.bf16.gmra.mxu0 %v5118
        %v5265 = vpop.f32.mrf.mxu0
        %v5266 = vadd.f32 %v5137, %v5265
        %v5267 = vpop.f32.mrf.mxu0
        %v5268 = vadd.f32 %v5137, %v5267
        %5269 = vdwg.mxu0
        %5270 = vmatpush.bf16.msra.mxu0 %v5204
        %5271 = vmatpush.bf16.msra.mxu0 %v5202
        %5272 = vmatpush.bf16.msra.mxu0 %v5200
        %5273 = vmatpush.bf16.msra.mxu0 %v5198
        %5274 = vmatpush.bf16.msra.mxu0 %v5196
        %5275 = vmatpush.bf16.msra.mxu0 %v5194
        %5276 = vmatpush.bf16.msra.mxu0 %v5192
        %5277 = vmatpush.bf16.msra.mxu0 %v5190
        %5278 = vmatmul.bf16.gmra.mxu0 %v5111
        %v5279 = vpop.f32.mrf.mxu0
        %v5280 = vadd.f32 %v5138, %v5279
        %v5281 = vpop.f32.mrf.mxu0
        %v5282 = vadd.f32 %v5138, %v5281
        %5283 = vmatmul.bf16.gmra.mxu0 %v5112
        %v5284 = vpop.f32.mrf.mxu0
        %v5285 = vadd.f32 %v5138, %v5284
        %v5286 = vpop.f32.mrf.mxu0
        %v5287 = vadd.f32 %v5138, %v5286
        %5288 = vmatmul.bf16.gmra.mxu0 %v5113
        %v5289 = vpop.f32.mrf.mxu0
        %v5290 = vadd.f32 %v5138, %v5289
        %v5291 = vpop.f32.mrf.mxu0
        %v5292 = vadd.f32 %v5138, %v5291
        %5293 = vmatmul.bf16.gmra.mxu0 %v5114
        %v5294 = vpop.f32.mrf.mxu0
        %v5295 = vadd.f32 %v5138, %v5294
        %v5296 = vpop.f32.mrf.mxu0
        %v5297 = vadd.f32 %v5138, %v5296
        %5298 = vmatmul.bf16.gmra.mxu0 %v5115
        %v5299 = vpop.f32.mrf.mxu0
        %v5300 = vadd.f32 %v5138, %v5299
        %v5301 = vpop.f32.mrf.mxu0
        %v5302 = vadd.f32 %v5138, %v5301
        %5303 = vmatmul.bf16.gmra.mxu0 %v5116
        %v5304 = vpop.f32.mrf.mxu0
        %v5305 = vadd.f32 %v5138, %v5304
        %v5306 = vpop.f32.mrf.mxu0
        %v5307 = vadd.f32 %v5138, %v5306
        %5308 = vmatmul.bf16.gmra.mxu0 %v5117
        %v5309 = vpop.f32.mrf.mxu0
        %v5310 = vadd.f32 %v5138, %v5309
        %v5311 = vpop.f32.mrf.mxu0
        %v5312 = vadd.f32 %v5138, %v5311
        %5313 = vmatmul.bf16.gmra.mxu0 %v5118
        %v5314 = vpop.f32.mrf.mxu0
        %v5315 = vadd.f32 %v5138, %v5314
        %v5316 = vpop.f32.mrf.mxu0
        %v5317 = vadd.f32 %v5138, %v5316
        %5318 = vdwg.mxu0
        %v5319 = vmul.f32 %v5231, %v5231
        %v5320 = vmul.f32 %v5280, %v5280
        %v5321 = vmul.f32 %v5233, %v5233
        %v5322 = vmul.f32 %v5282, %v5282
        %v5323 = vmul.f32 %v5236, %v5236
        %v5324 = vmul.f32 %v5285, %v5285
        %v5325 = vmul.f32 %v5238, %v5238
        %v5326 = vmul.f32 %v5287, %v5287
        %v5327 = vmul.f32 %v5241, %v5241
        %v5328 = vmul.f32 %v5290, %v5290
        %v5329 = vmul.f32 %v5243, %v5243
        %v5330 = vmul.f32 %v5292, %v5292
        %v5331 = vmul.f32 %v5246, %v5246
        %v5332 = vmul.f32 %v5295, %v5295
        %v5333 = vmul.f32 %v5248, %v5248
        %v5334 = vmul.f32 %v5297, %v5297
        %v5335 = vmul.f32 %v5251, %v5251
        %v5336 = vmul.f32 %v5300, %v5300
        %v5337 = vmul.f32 %v5253, %v5253
        %v5338 = vmul.f32 %v5302, %v5302
        %v5339 = vmul.f32 %v5256, %v5256
        %v5340 = vmul.f32 %v5305, %v5305
        %v5341 = vmul.f32 %v5258, %v5258
        %v5342 = vmul.f32 %v5307, %v5307
        %v5343 = vmul.f32 %v5261, %v5261
        %v5344 = vmul.f32 %v5310, %v5310
        %v5345 = vmul.f32 %v5263, %v5263
        %v5346 = vmul.f32 %v5312, %v5312
        %v5347 = vmul.f32 %v5266, %v5266
        %v5348 = vmul.f32 %v5315, %v5315
        %v5349 = vmul.f32 %v5268, %v5268
        %v5350 = vmul.f32 %v5317, %v5317
        %v5351 = vmul.f32 %v5231, %v5319
        %v5352 = vmul.f32 %v5280, %v5320
        %v5353 = vmul.f32 %v5233, %v5321
        %v5354 = vmul.f32 %v5282, %v5322
        %v5355 = vmul.f32 %v5236, %v5323
        %v5356 = vmul.f32 %v5285, %v5324
        %v5357 = vmul.f32 %v5238, %v5325
        %v5358 = vmul.f32 %v5287, %v5326
        %v5359 = vmul.f32 %v5241, %v5327
        %v5360 = vmul.f32 %v5290, %v5328
        %v5361 = vmul.f32 %v5243, %v5329
        %v5362 = vmul.f32 %v5292, %v5330
        %v5363 = vmul.f32 %v5246, %v5331
        %v5364 = vmul.f32 %v5295, %v5332
        %v5365 = vmul.f32 %v5248, %v5333
        %v5366 = vmul.f32 %v5297, %v5334
        %v5367 = vmul.f32 %v5251, %v5335
        %v5368 = vmul.f32 %v5300, %v5336
        %v5369 = vmul.f32 %v5253, %v5337
        %v5370 = vmul.f32 %v5302, %v5338
        %v5371 = vmul.f32 %v5256, %v5339
        %v5372 = vmul.f32 %v5305, %v5340
        %v5373 = vmul.f32 %v5258, %v5341
        %v5374 = vmul.f32 %v5307, %v5342
        %v5375 = vmul.f32 %v5261, %v5343
        %v5376 = vmul.f32 %v5310, %v5344
        %v5377 = vmul.f32 %v5263, %v5345
        %v5378 = vmul.f32 %v5312, %v5346
        %v5379 = vmul.f32 %v5266, %v5347
        %v5380 = vmul.f32 %v5315, %v5348
        %v5381 = vmul.f32 %v5268, %v5349
        %v5382 = vmul.f32 %v5317, %v5350
        %v5383 = vmul.f32 %v5351, 0.044715
        %v5384 = vmul.f32 %v5352, 0.044715
        %v5385 = vmul.f32 %v5353, 0.044715
        %v5386 = vmul.f32 %v5354, 0.044715
        %v5387 = vmul.f32 %v5355, 0.044715
        %v5388 = vmul.f32 %v5356, 0.044715
        %v5389 = vmul.f32 %v5357, 0.044715
        %v5390 = vmul.f32 %v5358, 0.044715
        %v5391 = vmul.f32 %v5359, 0.044715
        %v5392 = vmul.f32 %v5360, 0.044715
        %v5393 = vmul.f32 %v5361, 0.044715
        %v5394 = vmul.f32 %v5362, 0.044715
        %v5395 = vmul.f32 %v5363, 0.044715
        %v5396 = vmul.f32 %v5364, 0.044715
        %v5397 = vmul.f32 %v5365, 0.044715
        %v5398 = vmul.f32 %v5366, 0.044715
        %v5399 = vmul.f32 %v5367, 0.044715
        %v5400 = vmul.f32 %v5368, 0.044715
        %v5401 = vmul.f32 %v5369, 0.044715
        %v5402 = vmul.f32 %v5370, 0.044715
        %v5403 = vmul.f32 %v5371, 0.044715
        %v5404 = vmul.f32 %v5372, 0.044715
        %v5405 = vmul.f32 %v5373, 0.044715
        %v5406 = vmul.f32 %v5374, 0.044715
        %v5407 = vmul.f32 %v5375, 0.044715
        %v5408 = vmul.f32 %v5376, 0.044715
        %v5409 = vmul.f32 %v5377, 0.044715
        %v5410 = vmul.f32 %v5378, 0.044715
        %v5411 = vmul.f32 %v5379, 0.044715
        %v5412 = vmul.f32 %v5380, 0.044715
        %v5413 = vmul.f32 %v5381, 0.044715
        %v5414 = vmul.f32 %v5382, 0.044715
        %v5415 = vadd.f32 %v5231, %v5383
        %v5416 = vadd.f32 %v5280, %v5384
        %v5417 = vadd.f32 %v5233, %v5385
        %v5418 = vadd.f32 %v5282, %v5386
        %v5419 = vadd.f32 %v5236, %v5387
        %v5420 = vadd.f32 %v5285, %v5388
        %v5421 = vadd.f32 %v5238, %v5389
        %v5422 = vadd.f32 %v5287, %v5390
        %v5423 = vadd.f32 %v5241, %v5391
        %v5424 = vadd.f32 %v5290, %v5392
        %v5425 = vadd.f32 %v5243, %v5393
        %v5426 = vadd.f32 %v5292, %v5394
        %v5427 = vadd.f32 %v5246, %v5395
        %v5428 = vadd.f32 %v5295, %v5396
        %v5429 = vadd.f32 %v5248, %v5397
        %v5430 = vadd.f32 %v5297, %v5398
        %v5431 = vadd.f32 %v5251, %v5399
        %v5432 = vadd.f32 %v5300, %v5400
        %v5433 = vadd.f32 %v5253, %v5401
        %v5434 = vadd.f32 %v5302, %v5402
        %v5435 = vadd.f32 %v5256, %v5403
        %v5436 = vadd.f32 %v5305, %v5404
        %v5437 = vadd.f32 %v5258, %v5405
        %v5438 = vadd.f32 %v5307, %v5406
        %v5439 = vadd.f32 %v5261, %v5407
        %v5440 = vadd.f32 %v5310, %v5408
        %v5441 = vadd.f32 %v5263, %v5409
        %v5442 = vadd.f32 %v5312, %v5410
        %v5443 = vadd.f32 %v5266, %v5411
        %v5444 = vadd.f32 %v5315, %v5412
        %v5445 = vadd.f32 %v5268, %v5413
        %v5446 = vadd.f32 %v5317, %v5414
        %v5447 = vmul.f32 %v5415, 0.7978846
        %v5448 = vmul.f32 %v5416, 0.7978846
        %v5449 = vmul.f32 %v5417, 0.7978846
        %v5450 = vmul.f32 %v5418, 0.7978846
        %v5451 = vmul.f32 %v5419, 0.7978846
        %v5452 = vmul.f32 %v5420, 0.7978846
        %v5453 = vmul.f32 %v5421, 0.7978846
        %v5454 = vmul.f32 %v5422, 0.7978846
        %v5455 = vmul.f32 %v5423, 0.7978846
        %v5456 = vmul.f32 %v5424, 0.7978846
        %v5457 = vmul.f32 %v5425, 0.7978846
        %v5458 = vmul.f32 %v5426, 0.7978846
        %v5459 = vmul.f32 %v5427, 0.7978846
        %v5460 = vmul.f32 %v5428, 0.7978846
        %v5461 = vmul.f32 %v5429, 0.7978846
        %v5462 = vmul.f32 %v5430, 0.7978846
        %v5463 = vmul.f32 %v5431, 0.7978846
        %v5464 = vmul.f32 %v5432, 0.7978846
        %v5465 = vmul.f32 %v5433, 0.7978846
        %v5466 = vmul.f32 %v5434, 0.7978846
        %v5467 = vmul.f32 %v5435, 0.7978846
        %v5468 = vmul.f32 %v5436, 0.7978846
        %v5469 = vmul.f32 %v5437, 0.7978846
        %v5470 = vmul.f32 %v5438, 0.7978846
        %v5471 = vmul.f32 %v5439, 0.7978846
        %v5472 = vmul.f32 %v5440, 0.7978846
        %v5473 = vmul.f32 %v5441, 0.7978846
        %v5474 = vmul.f32 %v5442, 0.7978846
        %v5475 = vmul.f32 %v5443, 0.7978846
        %v5476 = vmul.f32 %v5444, 0.7978846
        %v5477 = vmul.f32 %v5445, 0.7978846
        %v5478 = vmul.f32 %v5446, 0.7978846
        %v5479 = vtanh.pop %v5447
        %v5480 = vtanh.pop %v5448
        %v5481 = vtanh.pop %v5449
        %v5482 = vtanh.pop %v5450
        %v5483 = vtanh.pop %v5451
        %v5484 = vtanh.pop %v5452
        %v5485 = vtanh.pop %v5453
        %v5486 = vtanh.pop %v5454
        %v5487 = vtanh.pop %v5455
        %v5488 = vtanh.pop %v5456
        %v5489 = vtanh.pop %v5457
        %v5490 = vtanh.pop %v5458
        %v5491 = vtanh.pop %v5459
        %v5492 = vtanh.pop %v5460
        %v5493 = vtanh.pop %v5461
        %v5494 = vtanh.pop %v5462
        %v5495 = vtanh.pop %v5463
        %v5496 = vtanh.pop %v5464
        %v5497 = vtanh.pop %v5465
        %v5498 = vtanh.pop %v5466
        %v5499 = vtanh.pop %v5467
        %v5500 = vtanh.pop %v5468
        %v5501 = vtanh.pop %v5469
        %v5502 = vtanh.pop %v5470
        %v5503 = vtanh.pop %v5471
        %v5504 = vtanh.pop %v5472
        %v5505 = vtanh.pop %v5473
        %v5506 = vtanh.pop %v5474
        %v5507 = vtanh.pop %v5475
        %v5508 = vtanh.pop %v5476
        %v5509 = vtanh.pop %v5477
        %v5510 = vtanh.pop %v5478
        %v5511 = vadd.f32 %v5479, 1.0
        %v5512 = vadd.f32 %v5480, 1.0
        %v5513 = vadd.f32 %v5481, 1.0
        %v5514 = vadd.f32 %v5482, 1.0
        %v5515 = vadd.f32 %v5483, 1.0
        %v5516 = vadd.f32 %v5484, 1.0
        %v5517 = vadd.f32 %v5485, 1.0
        %v5518 = vadd.f32 %v5486, 1.0
        %v5519 = vadd.f32 %v5487, 1.0
        %v5520 = vadd.f32 %v5488, 1.0
        %v5521 = vadd.f32 %v5489, 1.0
        %v5522 = vadd.f32 %v5490, 1.0
        %v5523 = vadd.f32 %v5491, 1.0
        %v5524 = vadd.f32 %v5492, 1.0
        %v5525 = vadd.f32 %v5493, 1.0
        %v5526 = vadd.f32 %v5494, 1.0
        %v5527 = vadd.f32 %v5495, 1.0
        %v5528 = vadd.f32 %v5496, 1.0
        %v5529 = vadd.f32 %v5497, 1.0
        %v5530 = vadd.f32 %v5498, 1.0
        %v5531 = vadd.f32 %v5499, 1.0
        %v5532 = vadd.f32 %v5500, 1.0
        %v5533 = vadd.f32 %v5501, 1.0
        %v5534 = vadd.f32 %v5502, 1.0
        %v5535 = vadd.f32 %v5503, 1.0
        %v5536 = vadd.f32 %v5504, 1.0
        %v5537 = vadd.f32 %v5505, 1.0
        %v5538 = vadd.f32 %v5506, 1.0
        %v5539 = vadd.f32 %v5507, 1.0
        %v5540 = vadd.f32 %v5508, 1.0
        %v5541 = vadd.f32 %v5509, 1.0
        %v5542 = vadd.f32 %v5510, 1.0
        %v5543 = vmul.f32 %v5511, 0.5
        %v5544 = vmul.f32 %v5512, 0.5
        %v5545 = vmul.f32 %v5513, 0.5
        %v5546 = vmul.f32 %v5514, 0.5
        %v5547 = vmul.f32 %v5515, 0.5
        %v5548 = vmul.f32 %v5516, 0.5
        %v5549 = vmul.f32 %v5517, 0.5
        %v5550 = vmul.f32 %v5518, 0.5
        %v5551 = vmul.f32 %v5519, 0.5
        %v5552 = vmul.f32 %v5520, 0.5
        %v5553 = vmul.f32 %v5521, 0.5
        %v5554 = vmul.f32 %v5522, 0.5
        %v5555 = vmul.f32 %v5523, 0.5
        %v5556 = vmul.f32 %v5524, 0.5
        %v5557 = vmul.f32 %v5525, 0.5
        %v5558 = vmul.f32 %v5526, 0.5
        %v5559 = vmul.f32 %v5527, 0.5
        %v5560 = vmul.f32 %v5528, 0.5
        %v5561 = vmul.f32 %v5529, 0.5
        %v5562 = vmul.f32 %v5530, 0.5
        %v5563 = vmul.f32 %v5531, 0.5
        %v5564 = vmul.f32 %v5532, 0.5
        %v5565 = vmul.f32 %v5533, 0.5
        %v5566 = vmul.f32 %v5534, 0.5
        %v5567 = vmul.f32 %v5535, 0.5
        %v5568 = vmul.f32 %v5536, 0.5
        %v5569 = vmul.f32 %v5537, 0.5
        %v5570 = vmul.f32 %v5538, 0.5
        %v5571 = vmul.f32 %v5539, 0.5
        %v5572 = vmul.f32 %v5540, 0.5
        %v5573 = vmul.f32 %v5541, 0.5
        %v5574 = vmul.f32 %v5542, 0.5
        %v5575 = vmul.f32 %v5231, %v5543
        %v5576 = vmul.f32 %v5280, %v5544
        %v5577 = vmul.f32 %v5233, %v5545
        %v5578 = vmul.f32 %v5282, %v5546
        %v5579 = vmul.f32 %v5236, %v5547
        %v5580 = vmul.f32 %v5285, %v5548
        %v5581 = vmul.f32 %v5238, %v5549
        %v5582 = vmul.f32 %v5287, %v5550
        %v5583 = vmul.f32 %v5241, %v5551
        %v5584 = vmul.f32 %v5290, %v5552
        %v5585 = vmul.f32 %v5243, %v5553
        %v5586 = vmul.f32 %v5292, %v5554
        %v5587 = vmul.f32 %v5246, %v5555
        %v5588 = vmul.f32 %v5295, %v5556
        %v5589 = vmul.f32 %v5248, %v5557
        %v5590 = vmul.f32 %v5297, %v5558
        %v5591 = vmul.f32 %v5251, %v5559
        %v5592 = vmul.f32 %v5300, %v5560
        %v5593 = vmul.f32 %v5253, %v5561
        %v5594 = vmul.f32 %v5302, %v5562
        %v5595 = vmul.f32 %v5256, %v5563
        %v5596 = vmul.f32 %v5305, %v5564
        %v5597 = vmul.f32 %v5258, %v5565
        %v5598 = vmul.f32 %v5307, %v5566
        %v5599 = vmul.f32 %v5261, %v5567
        %v5600 = vmul.f32 %v5310, %v5568
        %v5601 = vmul.f32 %v5263, %v5569
        %v5602 = vmul.f32 %v5312, %v5570
        %v5603 = vmul.f32 %v5266, %v5571
        %v5604 = vmul.f32 %v5315, %v5572
        %v5605 = vmul.f32 %v5268, %v5573
        %v5606 = vmul.f32 %v5317, %v5574
        %v5607 = vpack.c.bf16 %v5577, %v5575
        %v5608 = vpack.c.bf16 %v5578, %v5576
        %v5609 = vpack.c.bf16 %v5581, %v5579
        %v5610 = vpack.c.bf16 %v5582, %v5580
        %v5611 = vpack.c.bf16 %v5585, %v5583
        %v5612 = vpack.c.bf16 %v5586, %v5584
        %v5613 = vpack.c.bf16 %v5589, %v5587
        %v5614 = vpack.c.bf16 %v5590, %v5588
        %v5615 = vpack.c.bf16 %v5593, %v5591
        %v5616 = vpack.c.bf16 %v5594, %v5592
        %v5617 = vpack.c.bf16 %v5597, %v5595
        %v5618 = vpack.c.bf16 %v5598, %v5596
        %v5619 = vpack.c.bf16 %v5601, %v5599
        %v5620 = vpack.c.bf16 %v5602, %v5600
        %v5621 = vpack.c.bf16 %v5605, %v5603
        %v5622 = vpack.c.bf16 %v5606, %v5604
        %v5623 = vld [vmem:[%s660] sm:$0xf]
        %v5624 = vld [vmem:[%s660 + $0x4] sm:$0xf]
        %v5625 = vld [vmem:[%s660 + $0x8] sm:$0xf]
        %v5626 = vld [vmem:[%s660 + $0xc] sm:$0xf]
        %v5627 = vld [vmem:[%s660 + $0x10] sm:$0xf]
        %v5628 = vld [vmem:[%s660 + $0x14] sm:$0xf]
        %v5629 = vld [vmem:[%s660 + $0x18] sm:$0xf]
        %v5630 = vld [vmem:[%s660 + $0x1c] sm:$0xf]
        %v5631 = vld [vmem:[%s660 + $0x20] sm:$0xf]
        %v5632 = vld [vmem:[%s660 + $0x24] sm:$0xf]
        %v5633 = vld [vmem:[%s660 + $0x28] sm:$0xf]
        %v5634 = vld [vmem:[%s660 + $0x2c] sm:$0xf]
        %v5635 = vld [vmem:[%s660 + $0x30] sm:$0xf]
        %v5636 = vld [vmem:[%s660 + $0x34] sm:$0xf]
        %v5637 = vld [vmem:[%s660 + $0x38] sm:$0xf]
        %v5638 = vld [vmem:[%s660 + $0x3c] sm:$0xf]
        %v5639 = vld [vmem:[%s660 + $0x40] sm:$0xf]
        %v5640 = vld [vmem:[%s660 + $0x44] sm:$0xf]
        %v5641 = vld [vmem:[%s660 + $0x48] sm:$0xf]
        %v5642 = vld [vmem:[%s660 + $0x4c] sm:$0xf]
        %v5643 = vld [vmem:[%s660 + $0x50] sm:$0xf]
        %v5644 = vld [vmem:[%s660 + $0x54] sm:$0xf]
        %v5645 = vld [vmem:[%s660 + $0x58] sm:$0xf]
        %v5646 = vld [vmem:[%s660 + $0x5c] sm:$0xf]
        %v5647 = vld [vmem:[%s660 + $0x60] sm:$0xf]
        %v5648 = vld [vmem:[%s660 + $0x64] sm:$0xf]
        %v5649 = vld [vmem:[%s660 + $0x68] sm:$0xf]
        %v5650 = vld [vmem:[%s660 + $0x6c] sm:$0xf]
        %v5651 = vld [vmem:[%s660 + $0x70] sm:$0xf]
        %v5652 = vld [vmem:[%s660 + $0x74] sm:$0xf]
        %v5653 = vld [vmem:[%s660 + $0x78] sm:$0xf]
        %v5654 = vld [vmem:[%s660 + $0x7c] sm:$0xf]
        %v5655 = vld [vmem:[%s755] sm:$0x1]
        %v5657 = vperm.slane %v5655, 0
        %v5691 = vunpack.c.l.b16 %v5623
        %v5692 = vunpack.c.l.b16 %v5624
        %v5693 = vunpack.c.l.b16 %v5625
        %v5694 = vunpack.c.l.b16 %v5626
        %v5695 = vunpack.c.l.b16 %v5627
        %v5696 = vunpack.c.l.b16 %v5628
        %v5697 = vunpack.c.l.b16 %v5629
        %v5698 = vunpack.c.l.b16 %v5630
        %v5699 = vunpack.c.l.b16 %v5631
        %v5700 = vunpack.c.l.b16 %v5632
        %v5701 = vunpack.c.l.b16 %v5633
        %v5702 = vunpack.c.l.b16 %v5634
        %v5703 = vunpack.c.l.b16 %v5635
        %v5704 = vunpack.c.l.b16 %v5636
        %v5705 = vunpack.c.l.b16 %v5637
        %v5706 = vunpack.c.l.b16 %v5638
        %v5707 = vunpack.c.l.b16 %v5639
        %v5708 = vunpack.c.l.b16 %v5640
        %v5709 = vunpack.c.l.b16 %v5641
        %v5710 = vunpack.c.l.b16 %v5642
        %v5711 = vunpack.c.l.b16 %v5643
        %v5712 = vunpack.c.l.b16 %v5644
        %v5713 = vunpack.c.l.b16 %v5645
        %v5714 = vunpack.c.l.b16 %v5646
        %v5715 = vunpack.c.l.b16 %v5647
        %v5716 = vunpack.c.l.b16 %v5648
        %v5717 = vunpack.c.l.b16 %v5649
        %v5718 = vunpack.c.l.b16 %v5650
        %v5719 = vunpack.c.l.b16 %v5651
        %v5720 = vunpack.c.l.b16 %v5652
        %v5721 = vunpack.c.l.b16 %v5653
        %v5722 = vunpack.c.l.b16 %v5654
        %v5723 = vpack.c.b16 %v5692, %v5691
        %v5724 = vpack.c.b16 %v5694, %v5693
        %v5725 = vpack.c.b16 %v5696, %v5695
        %v5726 = vpack.c.b16 %v5698, %v5697
        %v5727 = vpack.c.b16 %v5700, %v5699
        %v5728 = vpack.c.b16 %v5702, %v5701
        %v5729 = vpack.c.b16 %v5704, %v5703
        %v5730 = vpack.c.b16 %v5706, %v5705
        %v5731 = vpack.c.b16 %v5708, %v5707
        %v5732 = vpack.c.b16 %v5710, %v5709
        %v5733 = vpack.c.b16 %v5712, %v5711
        %v5734 = vpack.c.b16 %v5714, %v5713
        %v5735 = vpack.c.b16 %v5716, %v5715
        %v5736 = vpack.c.b16 %v5718, %v5717
        %v5737 = vpack.c.b16 %v5720, %v5719
        %v5738 = vpack.c.b16 %v5722, %v5721
        %5755 = vmatpush.bf16.msra.mxu0 %v5730
        %5756 = vmatpush.bf16.msra.mxu0 %v5729
        %5757 = vmatpush.bf16.msra.mxu0 %v5728
        %5758 = vmatpush.bf16.msra.mxu0 %v5727
        %5759 = vmatpush.bf16.msra.mxu0 %v5726
        %5760 = vmatpush.bf16.msra.mxu0 %v5725
        %5761 = vmatpush.bf16.msra.mxu0 %v5724
        %5762 = vmatpush.bf16.msra.mxu0 %v5723
        %5763 = vmatmul.bf16.gmra.mxu0 %v5607
        %v5764 = vpop.f32.mrf.mxu0
        %v5765 = vadd.f32 %v5657, %v5764
        %v5766 = vpop.f32.mrf.mxu0
        %v5767 = vadd.f32 %v5657, %v5766
        %5768 = vmatmul.bf16.gmra.mxu0 %v5609
        %v5769 = vpop.f32.mrf.mxu0
        %v5770 = vadd.f32 %v5657, %v5769
        %v5771 = vpop.f32.mrf.mxu0
        %v5772 = vadd.f32 %v5657, %v5771
        %5773 = vmatmul.bf16.gmra.mxu0 %v5611
        %v5774 = vpop.f32.mrf.mxu0
        %v5775 = vadd.f32 %v5657, %v5774
        %v5776 = vpop.f32.mrf.mxu0
        %v5777 = vadd.f32 %v5657, %v5776
        %5778 = vmatmul.bf16.gmra.mxu0 %v5613
        %v5779 = vpop.f32.mrf.mxu0
        %v5780 = vadd.f32 %v5657, %v5779
        %v5781 = vpop.f32.mrf.mxu0
        %v5782 = vadd.f32 %v5657, %v5781
        %5783 = vmatmul.bf16.gmra.mxu0 %v5615
        %v5784 = vpop.f32.mrf.mxu0
        %v5785 = vadd.f32 %v5657, %v5784
        %v5786 = vpop.f32.mrf.mxu0
        %v5787 = vadd.f32 %v5657, %v5786
        %5788 = vmatmul.bf16.gmra.mxu0 %v5617
        %v5789 = vpop.f32.mrf.mxu0
        %v5790 = vadd.f32 %v5657, %v5789
        %v5791 = vpop.f32.mrf.mxu0
        %v5792 = vadd.f32 %v5657, %v5791
        %5793 = vmatmul.bf16.gmra.mxu0 %v5619
        %v5794 = vpop.f32.mrf.mxu0
        %v5795 = vadd.f32 %v5657, %v5794
        %v5796 = vpop.f32.mrf.mxu0
        %v5797 = vadd.f32 %v5657, %v5796
        %5798 = vmatmul.bf16.gmra.mxu0 %v5621
        %v5799 = vpop.f32.mrf.mxu0
        %v5800 = vadd.f32 %v5657, %v5799
        %v5801 = vpop.f32.mrf.mxu0
        %v5802 = vadd.f32 %v5657, %v5801
        %5803 = vdwg.mxu0
        %5804 = vmatpush.bf16.msra.mxu0 %v5738
        %5805 = vmatpush.bf16.msra.mxu0 %v5737
        %5806 = vmatpush.bf16.msra.mxu0 %v5736
        %5807 = vmatpush.bf16.msra.mxu0 %v5735
        %5808 = vmatpush.bf16.msra.mxu0 %v5734
        %5809 = vmatpush.bf16.msra.mxu0 %v5733
        %5810 = vmatpush.bf16.msra.mxu0 %v5732
        %5811 = vmatpush.bf16.msra.mxu0 %v5731
        %5812 = vmatmul.bf16.gmra.mxu0 %v5608
        %v5813 = vpop.f32.mrf.mxu0
        %v5814 = vadd.f32 %v5765, %v5813
        %v5815 = vpop.f32.mrf.mxu0
        %v5816 = vadd.f32 %v5767, %v5815
        %5817 = vmatmul.bf16.gmra.mxu0 %v5610
        %v5818 = vpop.f32.mrf.mxu0
        %v5819 = vadd.f32 %v5770, %v5818
        %v5820 = vpop.f32.mrf.mxu0
        %v5821 = vadd.f32 %v5772, %v5820
        %5822 = vmatmul.bf16.gmra.mxu0 %v5612
        %v5823 = vpop.f32.mrf.mxu0
        %v5824 = vadd.f32 %v5775, %v5823
        %v5825 = vpop.f32.mrf.mxu0
        %v5826 = vadd.f32 %v5777, %v5825
        %5827 = vmatmul.bf16.gmra.mxu0 %v5614
        %v5828 = vpop.f32.mrf.mxu0
        %v5829 = vadd.f32 %v5780, %v5828
        %v5830 = vpop.f32.mrf.mxu0
        %v5831 = vadd.f32 %v5782, %v5830
        %5832 = vmatmul.bf16.gmra.mxu0 %v5616
        %v5833 = vpop.f32.mrf.mxu0
        %v5834 = vadd.f32 %v5785, %v5833
        %v5835 = vpop.f32.mrf.mxu0
        %v5836 = vadd.f32 %v5787, %v5835
        %5837 = vmatmul.bf16.gmra.mxu0 %v5618
        %v5838 = vpop.f32.mrf.mxu0
        %v5839 = vadd.f32 %v5790, %v5838
        %v5840 = vpop.f32.mrf.mxu0
        %v5841 = vadd.f32 %v5792, %v5840
        %5842 = vmatmul.bf16.gmra.mxu0 %v5620
        %v5843 = vpop.f32.mrf.mxu0
        %v5844 = vadd.f32 %v5795, %v5843
        %v5845 = vpop.f32.mrf.mxu0
        %v5846 = vadd.f32 %v5797, %v5845
        %5847 = vmatmul.bf16.gmra.mxu0 %v5622
        %v5848 = vpop.f32.mrf.mxu0
        %v5849 = vadd.f32 %v5800, %v5848
        %v5850 = vpop.f32.mrf.mxu0
        %v5851 = vadd.f32 %v5802, %v5850
        %5852 = vdwg.mxu0
        %v5853 = vld [vmem:[%s758] sm:$0x1]
        %v5855 = vperm.slane %v5853, 0
        %v5857 = vmul.f32 %v5814, %v5855
        %v5858 = vmul.f32 %v5816, %v5855
        %v5859 = vmul.f32 %v5819, %v5855
        %v5860 = vmul.f32 %v5821, %v5855
        %v5861 = vmul.f32 %v5824, %v5855
        %v5862 = vmul.f32 %v5826, %v5855
        %v5863 = vmul.f32 %v5829, %v5855
        %v5864 = vmul.f32 %v5831, %v5855
        %v5865 = vmul.f32 %v5834, %v5855
        %v5866 = vmul.f32 %v5836, %v5855
        %v5867 = vmul.f32 %v5839, %v5855
        %v5868 = vmul.f32 %v5841, %v5855
        %v5869 = vmul.f32 %v5844, %v5855
        %v5870 = vmul.f32 %v5846, %v5855
        %v5871 = vmul.f32 %v5849, %v5855
        %v5872 = vmul.f32 %v5851, %v5855
        %v5873 = vadd.f32 %v5857, %v3884
        %v5874 = vadd.f32 %v5858, %v3885
        %v5875 = vadd.f32 %v5859, %v3886
        %v5876 = vadd.f32 %v5860, %v3887
        %v5877 = vadd.f32 %v5861, %v3888
        %v5878 = vadd.f32 %v5862, %v3889
        %v5879 = vadd.f32 %v5863, %v3890
        %v5880 = vadd.f32 %v5864, %v3891
        %v5881 = vadd.f32 %v5865, %v3892
        %v5882 = vadd.f32 %v5866, %v3893
        %v5883 = vadd.f32 %v5867, %v3894
        %v5884 = vadd.f32 %v5868, %v3895
        %v5885 = vadd.f32 %v5869, %v3896
        %v5886 = vadd.f32 %v5870, %v3897
        %v5887 = vadd.f32 %v5871, %v3898
        %v5888 = vadd.f32 %v5872, %v3899
        %5889 = vst [vmem:[#allocation2 + $0x8] sm:$0xff] %v5873
        %5890 = vst [vmem:[#allocation2 + $0x10] sm:$0xff] %v5874
        %5891 = vst [vmem:[#allocation2 + $0x18] sm:$0xff] %v5875
        %5892 = vst [vmem:[#allocation2 + $0x20] sm:$0xff] %v5876
        %5893 = vst [vmem:[#allocation2 + $0x28] sm:$0xff] %v5877
        %5894 = vst [vmem:[#allocation2 + $0x30] sm:$0xff] %v5878
        %5895 = vst [vmem:[#allocation2 + $0x38] sm:$0xff] %v5879
        %5896 = vst [vmem:[#allocation2 + $0x40] sm:$0xff] %v5880
        %5897 = vst [vmem:[#allocation2 + $0x58] sm:$0xff] %v5881
        %5898 = vst [vmem:[#allocation2 + $0x60] sm:$0xff] %v5882
        %5899 = vst [vmem:[#allocation2 + $0x68] sm:$0xff] %v5883
        %5900 = vst [vmem:[#allocation2 + $0x70] sm:$0xff] %v5884
        %5901 = vst [vmem:[#allocation2 + $0x78] sm:$0xff] %v5885
        %5902 = vst [vmem:[#allocation2 + $0x80] sm:$0xff] %v5886
        %5903 = vst [vmem:[#allocation2 + $0x88] sm:$0xff] %v5887
        %5904 = vst [vmem:[#allocation2 + $0x90] sm:$0xff] %v5888
        %p5905 = scmp.eq.s32.totalorder %s31, 1
        // Predicated region
        $region113: #{tpu_custom_call.1} parent=87 // pred_check
          %p5906 = pneg %p5905
        $region114: #{tpu_custom_call.1} parent=87 // pred_check_branch
          %5908 = sbr.rel (%p5906) target = $region116
        $region115: #{tpu_custom_call.1} parent=87 // pred_region
          %5909 = vst [vmem:[#allocation12] sm:$0xff] %v5873
          %5910 = vst [vmem:[#allocation12 + $0x8] sm:$0xff] %v5874
          %5911 = vst [vmem:[#allocation12 + $0x10] sm:$0xff] %v5875
          %5912 = vst [vmem:[#allocation12 + $0x18] sm:$0xff] %v5876
          %5913 = vst [vmem:[#allocation12 + $0x20] sm:$0xff] %v5877
          %5914 = vst [vmem:[#allocation12 + $0x28] sm:$0xff] %v5878
          %5915 = vst [vmem:[#allocation12 + $0x30] sm:$0xff] %v5879
          %5916 = vst [vmem:[#allocation12 + $0x38] sm:$0xff] %v5880
          %5917 = vst [vmem:[#allocation12 + $0x40] sm:$0xff] %v5881
          %5918 = vst [vmem:[#allocation12 + $0x48] sm:$0xff] %v5882
          %5919 = vst [vmem:[#allocation12 + $0x50] sm:$0xff] %v5883
          %5920 = vst [vmem:[#allocation12 + $0x58] sm:$0xff] %v5884
          %5921 = vst [vmem:[#allocation12 + $0x60] sm:$0xff] %v5885
          %5922 = vst [vmem:[#allocation12 + $0x68] sm:$0xff] %v5886
          %5923 = vst [vmem:[#allocation12 + $0x70] sm:$0xff] %v5887
          %5924 = vst [vmem:[#allocation12 + $0x78] sm:$0xff] %v5888
        $region116: #{tpu_custom_call.1} parent=87 // pred_fallthru
          _
        // Predicated region
        $region117: #{tpu_custom_call.1} parent=87 // pred_check
          %p5925 = pneg %p446
        $region118: #{tpu_custom_call.1} parent=87 // pred_check_branch
          %5927 = sbr.rel (%p5925) target = $region120
        $region119: #{tpu_custom_call.1} parent=87 // pred_region
          %5929 = vsyncadd [#allocation6], 0
          %s5930 = sshll.u32 [#allocation12], 4
          %s5931 = int_to_ptr.vmem [resolvable:$true] %s5930
          %s5932 = sshll.u32 %s17, 4
          %s5933 = int_to_ptr.hbm [resolvable:$true] %s5932
          %5938 = dma.vmem_to_hbm [thread:$0]  %s5931, 2048, %s5933, [#allocation6], 128, 128, 8
        $region120: #{tpu_custom_call.1} parent=87 // pred_fallthru
          _
        // Predicated region
        $region121: #{tpu_custom_call.1} parent=87 // pred_check
          %p5939 = pneg %p446
        $region122: #{tpu_custom_call.1} parent=87 // pred_check_branch
          %5941 = sbr.rel (%p5939) target = $region124
        $region123: #{tpu_custom_call.1} parent=87 // pred_region
          %5943 = dma.done [#allocation6], 2048
        $region124: #{tpu_custom_call.1} parent=87 // pred_fallthru
          _
      $region88: #{tpu_custom_call.1} parent=5 // pred_fallthru
        _
      %p5944 = scmp.le.s32.totalorder 2, %s26
      // Predicated region
      $region125: #{tpu_custom_call.1} parent=5 // pred_check
        %p5945 = pneg %p5944
      $region126: #{tpu_custom_call.1} parent=5 // pred_check_branch
        %5947 = sbr.rel (%p5945) target = $region128
      $region127: #{tpu_custom_call.1} parent=5 // pred_region
        %s5948 = ssub.s32 %s26, 2
      $region128: #{tpu_custom_call.1} parent=5 // pred_fallthru
        _
    $region6: #{tpu_custom_call.1} parent=1 // loop_footer
      %s30 = sadd.s32 1, %s26
    $region7: #{tpu_custom_call.1} parent=1 // loop_footer_branch
      %25 = sbr.rel target = $region3
    $region8: #{tpu_custom_call.1} parent=1 // loop_exit
      _
    %5949 = vsyncpa [#allocation5], 1
    %s5950 = scalar_lea.sflag [#allocation5], 1
    %5951 = vsyncpa %s5950, 1
    %5952 = vsyncpa [#allocation8], 1
    %5953 = vsyncpa [#allocation6], 1
    %s5954 = scalar_lea.sflag [#allocation6], 1
    %5955 = vsyncpa %s5954, 1

</llo_original>
